<compile_context>
chip_gen: v5e
topology: v5e:2x2
jax: 0.10.0
libtpu: 0.0.40
codegen_flags: <defaults>
</compile_context>

<pallas_src>
import functools

import jax
import jax.numpy as jnp
from jax.experimental import pallas as pl
from jax.experimental.pallas import tpu as pltpu


# ----------------------------------------------------------------------------
# shared in-kernel helper: depthwise conv for one batch element
# ----------------------------------------------------------------------------
def _depthwise_into(x_ref, wd_ref, bd_ref, xpad_ref, dw_ref, *,
                    cin, kpl, k, hin, win, pad):
    """Depthwise conv (groups=cin, out=cin*kpl) for one batch element.

    x_ref   : [1, cin, hin, win]  raw NCHW input block            (VMEM)
    wd_ref  : [cin*kpl*k*k]       depthwise taps, flat            (SMEM, scalar reads)
    bd_ref  : [cin*kpl]           depthwise bias                  (SMEM)
    xpad_ref: [cin, hp*wp]        zero-padded, row-flattened scratch (VMEM)
    dw_ref  : [cm, lv]            depthwise output, row pitch wp  (VMEM)

    Output element (m, i, j) lives at dw_ref[m, i*wp + j]; the wp-w "phantom"
    columns of each row are zeroed so plain lane reductions are exact.
    """
    cm = cin * kpl
    hp, pitch = hin + 2 * pad, win + 2 * pad
    hh = hin + 2 * pad - k + 1
    ww = win + 2 * pad - k + 1
    lv = (hh - 1) * pitch + ww

    # --- in-kernel zero padding: zero the flat buffer, copy interior rows ----
    xpad_ref[...] = jnp.zeros_like(xpad_ref)
    for g in range(cin):
        for i in range(hin):
            dst = (i + pad) * pitch + pad
            xpad_ref[g:g + 1, dst:dst + win] = x_ref[0, g, i:i + 1, :]

    # --- k*k shifted tap slabs: computed once, reused by every output channel
    xp = xpad_ref[...]                                       # [cin, hp*pitch]
    slabs = [xp[:, di * pitch + dj: di * pitch + dj + lv]    # [cin, lv]
             for di in range(k) for dj in range(k)]

    # --- per output channel: scalar-weight MAC chain (first tap inits acc) ---
    for m in range(cm):
        g = m // kpl                       # grouped conv: out channel m reads in channel m//kpl
        acc = slabs[0][g:g + 1, :] * wd_ref[m * k * k]
        for t in range(1, k * k):
            acc = acc + slabs[t][g:g + 1, :] * wd_ref[m * k * k + t]
        dw_ref[m:m + 1, :] = acc + bd_ref[m]

    # --- zero the phantom (row-wrap) columns so reductions over lanes are exact
    for i in range(hh - 1):
        dw_ref[:, i * pitch + ww:(i + 1) * pitch] = jnp.zeros((cm, pitch - ww),
                                                              jnp.float32)
    return hh, ww, pitch, lv


# ----------------------------------------------------------------------------
# pass 1: depthwise conv + BN partial statistics (sum, sum of squares)
# ----------------------------------------------------------------------------
def _stats_kernel(x_ref, wd_ref, bd_ref, stat_ref, xpad_ref, dw_ref, *,
                  cin, kpl, k, hin, win, pad):
    _depthwise_into(x_ref, wd_ref, bd_ref, xpad_ref, dw_ref,
                    cin=cin, kpl=kpl, k=k, hin=hin, win=win, pad=pad)
    a = dw_ref[...]                                          # [cm, lv]
    # phantom columns are zero -> plain lane sums == sums over valid positions
    stat_ref[0, :, 0:1] = jnp.sum(a, axis=1, keepdims=True)
    stat_ref[0, :, 1:2] = jnp.sum(a * a, axis=1, keepdims=True)


# ----------------------------------------------------------------------------
# pass 2: depthwise conv -> BN(scale,shift) -> PReLU -> pointwise 1x1 conv
# ----------------------------------------------------------------------------
def _fused_kernel(x_ref, wd_ref, bd_ref, scale_ref, shift_ref, alpha_ref,
                  wp_ref, bp_ref, o_ref, xpad_ref, dw_ref, obuf_ref, *,
                  cin, kpl, k, hin, win, pad, cout):
    hh, ww, pitch, lv = _depthwise_into(
        x_ref, wd_ref, bd_ref, xpad_ref, dw_ref,
        cin=cin, kpl=kpl, k=k, hin=hin, win=win, pad=pad)

    a = dw_ref[...]                                          # [cm, lv]

    # BatchNorm affine with precomputed per-channel scale/shift (sublane bcast)
    act = a * scale_ref[...] + shift_ref[...]

    # PReLU, single shared alpha
    alpha = alpha_ref[0]
    act = jnp.where(act > 0, act, alpha * act)

    # pointwise 1x1 conv as exact-f32 VPU FMAs (cm=12, cout=8: too small for MXU)
    wpv = wp_ref[...]                                        # [cout, cm, 1]
    for co in range(cout):
        oc = jnp.sum(act * wpv[co], axis=0, keepdims=True) + bp_ref[co]
        obuf_ref[co:co + 1, :] = oc                          # [1, lv]

    # gather valid columns into the lane-dense [cout, hh*ww] output block
    for i in range(hh):
        o_ref[0, :, i * ww:(i + 1) * ww] = obuf_ref[:, i * pitch:i * pitch + ww]


# ----------------------------------------------------------------------------
# wrapper: NCHW in, NCHW out
# ----------------------------------------------------------------------------
def deepthwise_separable_conv(x_nchw, params, *, kernel_per_layer, padding=1):
    wd_full = params["wd"]      # [Cmid, 1, k, k]   grouped-conv weight
    bd = params["bd"]           # [Cmid]
    gamma = params["gamma"]     # [Cmid]
    beta = params["beta"]       # [Cmid]
    alpha = params["alpha"]     # [1]
    wp_full = params["wp"]      # [Cout, Cmid, 1, 1]
    bp = params["bp"]           # [Cout]

    n, cin, hin, win = x_nchw.shape
    k = kernel_per_layer        # module quirk: depthwise kernel size == kernel_per_layer
    pad = padding
    cm = wd_full.shape[0]
    cout = wp_full.shape[0]
    kpl = cm // cin
    hh = hin + 2 * pad - k + 1
    ww = win + 2 * pad - k + 1
    hp, pitch = hin + 2 * pad, win + 2 * pad
    lv = (hh - 1) * pitch + ww

    x32 = x_nchw.astype(jnp.float32)
    wd_s = wd_full[:, 0].reshape(cm * k * k).astype(jnp.float32)   # taps, flat [m*k*k + di*k + dj]
    bd_s = bd.astype(jnp.float32)

    smem = pl.BlockSpec(memory_space=pltpu.MemorySpace.SMEM)
    vmem = pl.BlockSpec(memory_space=pltpu.MemorySpace.VMEM)
    x_spec = pl.BlockSpec((1, cin, hin, win), lambda i: (i, 0, 0, 0))
    cparams = pltpu.CompilerParams(
        dimension_semantics=("parallel",),          # megacore-shardable on v7x
        vmem_limit_bytes=32 * 1024 * 1024)

    # --- pass 1: depthwise + per-channel sum / sumsq partials ----------------
    stats = pl.pallas_call(
        functools.partial(_stats_kernel, cin=cin, kpl=kpl, k=k,
                          hin=hin, win=win, pad=pad),
        grid=(n,),
        in_specs=[x_spec, smem, smem],
        out_specs=pl.BlockSpec((1, cm, 2), lambda i: (i, 0, 0)),
        out_shape=jax.ShapeDtypeStruct((n, cm, 2), jnp.float32),
        scratch_shapes=[pltpu.VMEM((cin, hp * pitch), jnp.float32),
                        pltpu.VMEM((cm, lv), jnp.float32)],
        compiler_params=cparams,
    )(x32, wd_s, bd_s)

    # finalize training-mode (biased) batch stats: O(Cmid) scalar glue.
    # note: E[x^2]-E[x]^2 in f32 is well within tolerance at these magnitudes.
    count = n * hh * ww
    tot = jnp.sum(stats, axis=0)                     # [cm, 2]
    mean = tot[:, 0] / count
    var = jnp.maximum(tot[:, 1] / count - mean * mean, 0.0)
    scale = gamma.astype(jnp.float32) / jnp.sqrt(var + 1e-5)
    shift = beta.astype(jnp.float32) - mean * scale

    wp3 = wp_full[:, :, 0, 0].reshape(cout, cm, 1).astype(jnp.float32)

    # --- pass 2: depthwise (recomputed) + BN + PReLU + pointwise -------------
    out = pl.pallas_call(
        functools.partial(_fused_kernel, cin=cin, kpl=kpl, k=k,
                          hin=hin, win=win, pad=pad, cout=cout),
        grid=(n,),
        in_specs=[x_spec, smem, smem, vmem, vmem, smem, vmem, smem],
        out_specs=pl.BlockSpec((1, cout, hh * ww), lambda i: (i, 0, 0)),
        out_shape=jax.ShapeDtypeStruct((n, cout, hh * ww), jnp.float32),
        scratch_shapes=[pltpu.VMEM((cin, hp * pitch), jnp.float32),
                        pltpu.VMEM((cm, lv), jnp.float32),
                        pltpu.VMEM((cout, lv), jnp.float32)],
        compiler_params=cparams,
    )(x32, wd_s, bd_s,
      scale.reshape(cm, 1), shift.reshape(cm, 1),
      alpha.reshape(1).astype(jnp.float32),
      wp3, bp.astype(jnp.float32))

    # output block is already channel-major -> free (contiguous) reshape to NCHW
    return out.reshape(n, cout, hh, ww)


# ----------------------------------------------------------------------------
# pure-JAX reference matching the PyTorch forward (training-mode BN)
# ----------------------------------------------------------------------------
def ref_forward(x, params, *, padding=1):
    wd, bd = params["wd"], params["bd"]
    gamma, beta, alpha = params["gamma"], params["beta"], params["alpha"]
    wp, bp = params["wp"], params["bp"]
    cin = x.shape[1]
    y = jax.lax.conv_general_dilated(
        x, wd, window_strides=(1, 1),
        padding=[(padding, padding), (padding, padding)],
        feature_group_count=cin,
        dimension_numbers=("NCHW", "OIHW", "NCHW"),
        precision=jax.lax.Precision.HIGHEST) + bd[None, :, None, None]
    mean = y.mean(axis=(0, 2, 3), keepdims=True)
    var = ((y - mean) ** 2).mean(axis=(0, 2, 3), keepdims=True)
    y = (y - mean) / jnp.sqrt(var + 1e-5) * gamma[None, :, None, None] + beta[None, :, None, None]
    y = jnp.where(y > 0, y, alpha[0] * y)
    y = jax.lax.conv_general_dilated(
        y, wp, window_strides=(1, 1), padding="VALID",
        dimension_numbers=("NCHW", "OIHW", "NCHW"),
        precision=jax.lax.Precision.HIGHEST) + bp[None, :, None, None]
    return y


if __name__ == "__main__":
    # DeepthwiseSeparableConv(in_channels=4, out_channels=8, kernel_per_layer=3,
    #                         kernel_size=3, padding=1)
    # NOTE: the depthwise conv's actual kernel size is kernel_per_layer (=3), as in
    # the original PyTorch code; the `kernel_size` ctor arg is unused there.
    in_channels, out_channels, kernel_per_layer, padding = 4, 8, 3, 1
    cmid = in_channels * kernel_per_layer
    k = kernel_per_layer

    key = jax.random.PRNGKey(0)
    k1, k2, k3, k4, kx = jax.random.split(key, 5)

    params = {
        "wd": 0.3 * jax.random.normal(k1, (cmid, 1, k, k), jnp.float32),
        "bd": 0.1 * jax.random.normal(k2, (cmid,), jnp.float32),
        "gamma": jnp.ones((cmid,), jnp.float32),
        "beta": jnp.zeros((cmid,), jnp.float32),
        "alpha": jnp.full((1,), 0.25, jnp.float32),            # PReLU default init
        "wp": 0.3 * jax.random.normal(k3, (out_channels, cmid, 1, 1), jnp.float32),
        "bp": 0.1 * jax.random.normal(k4, (out_channels,), jnp.float32),
    }

    x = jax.random.normal(kx, (2, in_channels, 16, 16), jnp.float32)   # NCHW

    out = deepthwise_separable_conv(x, params,
                                    kernel_per_layer=kernel_per_layer,
                                    padding=padding)
    out = jax.block_until_ready(out)

    ref = jax.block_until_ready(ref_forward(x, params, padding=padding))
    assert out.shape == (2, out_channels, 16, 16), out.shape
    err = float(jnp.max(jnp.abs(out - ref)))
    assert jnp.allclose(out, ref, atol=1e-3, rtol=1e-3), err

    print("KERNEL_OK")
</pallas_src>

<mosaic_0001>
module attributes {stable_mosaic.version = 11 : i64} {
  func.func @_stats_kernel(%arg0: i32, %arg1: memref<1x4x16x16xf32, #tpu.memory_space<vmem>>, %arg2: memref<108xf32, #tpu.memory_space<smem>>, %arg3: memref<12xf32, #tpu.memory_space<smem>>, %arg4: memref<1x12x2xf32, #tpu.memory_space<vmem>>, %arg5: memref<4x324xf32, #tpu.memory_space<vmem>>, %arg6: memref<12x286xf32, #tpu.memory_space<vmem>>) attributes {dimension_semantics = [#tpu.dimension_semantics<parallel>], iteration_bounds = array<i64: 2>, scalar_prefetch = 0 : i64, scratch_operands = 2 : i64, tpu.core_type = #tpu.core_type<tc>, window_params = [{transform_indices = @transform_0, window_bounds = array<i64: 1, 4, 16, 16>}, {transform_indices = @transform_1, window_bounds = array<i64: 108>}, {transform_indices = @transform_2, window_bounds = array<i64: 12>}, {transform_indices = @transform_3, window_bounds = array<i64: 1, 12, 2>}]} {
    %cst = arith.constant 0.000000e+00 : f32
    %0 = vector.broadcast %cst : f32 to vector<4x324xf32>
    %c0 = arith.constant 0 : index
    %c0_0 = arith.constant 0 : index
    %1 = vector.load %arg5[%c0, %c0_0] : memref<4x324xf32, #tpu.memory_space<vmem>>, vector<4x324xf32>
    tpu.vector_store %arg5[%c0, %c0_0], %0 {strides = array<i32>} : memref<4x324xf32, #tpu.memory_space<vmem>>, vector<4x324xf32>,
    %c0_1 = arith.constant 0 : index
    %c0_2 = arith.constant 0 : index
    %c0_3 = arith.constant 0 : index
    %c0_4 = arith.constant 0 : index
    %2 = vector.load %arg1[%c0_1, %c0_2, %c0_3, %c0_4] : memref<1x4x16x16xf32, #tpu.memory_space<vmem>>, vector<1x1x1x16xf32>
    %3 = vector.shape_cast %2 : vector<1x1x1x16xf32> to vector<1x16xf32>
    %c0_5 = arith.constant 0 : index
    %c19 = arith.constant 19 : index
    %4 = vector.load %arg5[%c0_5, %c19] : memref<4x324xf32, #tpu.memory_space<vmem>>, vector<1x16xf32>
    tpu.vector_store %arg5[%c0_5, %c19], %3 {strides = array<i32>} : memref<4x324xf32, #tpu.memory_space<vmem>>, vector<1x16xf32>,
    %c0_6 = arith.constant 0 : index
    %c0_7 = arith.constant 0 : index
    %c1 = arith.constant 1 : index
    %c0_8 = arith.constant 0 : index
    %5 = vector.load %arg1[%c0_6, %c0_7, %c1, %c0_8] : memref<1x4x16x16xf32, #tpu.memory_space<vmem>>, vector<1x1x1x16xf32>
    %6 = vector.shape_cast %5 : vector<1x1x1x16xf32> to vector<1x16xf32>
    %c0_9 = arith.constant 0 : index
    %c37 = arith.constant 37 : index
    %7 = vector.load %arg5[%c0_9, %c37] : memref<4x324xf32, #tpu.memory_space<vmem>>, vector<1x16xf32>
    tpu.vector_store %arg5[%c0_9, %c37], %6 {strides = array<i32>} : memref<4x324xf32, #tpu.memory_space<vmem>>, vector<1x16xf32>,
    %c0_10 = arith.constant 0 : index
    %c0_11 = arith.constant 0 : index
    %c2 = arith.constant 2 : index
    %c0_12 = arith.constant 0 : index
    %8 = vector.load %arg1[%c0_10, %c0_11, %c2, %c0_12] : memref<1x4x16x16xf32, #tpu.memory_space<vmem>>, vector<1x1x1x16xf32>
    %9 = vector.shape_cast %8 : vector<1x1x1x16xf32> to vector<1x16xf32>
    %c0_13 = arith.constant 0 : index
    %c55 = arith.constant 55 : index
    %10 = vector.load %arg5[%c0_13, %c55] : memref<4x324xf32, #tpu.memory_space<vmem>>, vector<1x16xf32>
    tpu.vector_store %arg5[%c0_13, %c55], %9 {strides = array<i32>} : memref<4x324xf32, #tpu.memory_space<vmem>>, vector<1x16xf32>,
    %c0_14 = arith.constant 0 : index
    %c0_15 = arith.constant 0 : index
    %c3 = arith.constant 3 : index
    %c0_16 = arith.constant 0 : index
    %11 = vector.load %arg1[%c0_14, %c0_15, %c3, %c0_16] : memref<1x4x16x16xf32, #tpu.memory_space<vmem>>, vector<1x1x1x16xf32>
    %12 = vector.shape_cast %11 : vector<1x1x1x16xf32> to vector<1x16xf32>
    %c0_17 = arith.constant 0 : index
    %c73 = arith.constant 73 : index
    %13 = vector.load %arg5[%c0_17, %c73] : memref<4x324xf32, #tpu.memory_space<vmem>>, vector<1x16xf32>
    tpu.vector_store %arg5[%c0_17, %c73], %12 {strides = array<i32>} : memref<4x324xf32, #tpu.memory_space<vmem>>, vector<1x16xf32>,
    %c0_18 = arith.constant 0 : index
    %c0_19 = arith.constant 0 : index
    %c4 = arith.constant 4 : index
    %c0_20 = arith.constant 0 : index
    %14 = vector.load %arg1[%c0_18, %c0_19, %c4, %c0_20] : memref<1x4x16x16xf32, #tpu.memory_space<vmem>>, vector<1x1x1x16xf32>
    %15 = vector.shape_cast %14 : vector<1x1x1x16xf32> to vector<1x16xf32>
    %c0_21 = arith.constant 0 : index
    %c91 = arith.constant 91 : index
    %16 = vector.load %arg5[%c0_21, %c91] : memref<4x324xf32, #tpu.memory_space<vmem>>, vector<1x16xf32>
    tpu.vector_store %arg5[%c0_21, %c91], %15 {strides = array<i32>} : memref<4x324xf32, #tpu.memory_space<vmem>>, vector<1x16xf32>,
    %c0_22 = arith.constant 0 : index
    %c0_23 = arith.constant 0 : index
    %c5 = arith.constant 5 : index
    %c0_24 = arith.constant 0 : index
    %17 = vector.load %arg1[%c0_22, %c0_23, %c5, %c0_24] : memref<1x4x16x16xf32, #tpu.memory_space<vmem>>, vector<1x1x1x16xf32>
    %18 = vector.shape_cast %17 : vector<1x1x1x16xf32> to vector<1x16xf32>
    %c0_25 = arith.constant 0 : index
    %c109 = arith.constant 109 : index
    %19 = vector.load %arg5[%c0_25, %c109] : memref<4x324xf32, #tpu.memory_space<vmem>>, vector<1x16xf32>
    tpu.vector_store %arg5[%c0_25, %c109], %18 {strides = array<i32>} : memref<4x324xf32, #tpu.memory_space<vmem>>, vector<1x16xf32>,
    %c0_26 = arith.constant 0 : index
    %c0_27 = arith.constant 0 : index
    %c6 = arith.constant 6 : index
    %c0_28 = arith.constant 0 : index
    %20 = vector.load %arg1[%c0_26, %c0_27, %c6, %c0_28] : memref<1x4x16x16xf32, #tpu.memory_space<vmem>>, vector<1x1x1x16xf32>
    %21 = vector.shape_cast %20 : vector<1x1x1x16xf32> to vector<1x16xf32>
    %c0_29 = arith.constant 0 : index
    %c127 = arith.constant 127 : index
    %22 = vector.load %arg5[%c0_29, %c127] : memref<4x324xf32, #tpu.memory_space<vmem>>, vector<1x16xf32>
    tpu.vector_store %arg5[%c0_29, %c127], %21 {strides = array<i32>} : memref<4x324xf32, #tpu.memory_space<vmem>>, vector<1x16xf32>,
    %c0_30 = arith.constant 0 : index
    %c0_31 = arith.constant 0 : index
    %c7 = arith.constant 7 : index
    %c0_32 = arith.constant 0 : index
    %23 = vector.load %arg1[%c0_30, %c0_31, %c7, %c0_32] : memref<1x4x16x16xf32, #tpu.memory_space<vmem>>, vector<1x1x1x16xf32>
    %24 = vector.shape_cast %23 : vector<1x1x1x16xf32> to vector<1x16xf32>
    %c0_33 = arith.constant 0 : index
    %c145 = arith.constant 145 : index
    %25 = vector.load %arg5[%c0_33, %c145] : memref<4x324xf32, #tpu.memory_space<vmem>>, vector<1x16xf32>
    tpu.vector_store %arg5[%c0_33, %c145], %24 {strides = array<i32>} : memref<4x324xf32, #tpu.memory_space<vmem>>, vector<1x16xf32>,
    %c0_34 = arith.constant 0 : index
    %c0_35 = arith.constant 0 : index
    %c8 = arith.constant 8 : index
    %c0_36 = arith.constant 0 : index
    %26 = vector.load %arg1[%c0_34, %c0_35, %c8, %c0_36] : memref<1x4x16x16xf32, #tpu.memory_space<vmem>>, vector<1x1x1x16xf32>
    %27 = vector.shape_cast %26 : vector<1x1x1x16xf32> to vector<1x16xf32>
    %c0_37 = arith.constant 0 : index
    %c163 = arith.constant 163 : index
    %28 = vector.load %arg5[%c0_37, %c163] : memref<4x324xf32, #tpu.memory_space<vmem>>, vector<1x16xf32>
    tpu.vector_store %arg5[%c0_37, %c163], %27 {strides = array<i32>} : memref<4x324xf32, #tpu.memory_space<vmem>>, vector<1x16xf32>,
    %c0_38 = arith.constant 0 : index
    %c0_39 = arith.constant 0 : index
    %c9 = arith.constant 9 : index
    %c0_40 = arith.constant 0 : index
    %29 = vector.load %arg1[%c0_38, %c0_39, %c9, %c0_40] : memref<1x4x16x16xf32, #tpu.memory_space<vmem>>, vector<1x1x1x16xf32>
    %30 = vector.shape_cast %29 : vector<1x1x1x16xf32> to vector<1x16xf32>
    %c0_41 = arith.constant 0 : index
    %c181 = arith.constant 181 : index
    %31 = vector.load %arg5[%c0_41, %c181] : memref<4x324xf32, #tpu.memory_space<vmem>>, vector<1x16xf32>
    tpu.vector_store %arg5[%c0_41, %c181], %30 {strides = array<i32>} : memref<4x324xf32, #tpu.memory_space<vmem>>, vector<1x16xf32>,
    %c0_42 = arith.constant 0 : index
    %c0_43 = arith.constant 0 : index
    %c10 = arith.constant 10 : index
    %c0_44 = arith.constant 0 : index
    %32 = vector.load %arg1[%c0_42, %c0_43, %c10, %c0_44] : memref<1x4x16x16xf32, #tpu.memory_space<vmem>>, vector<1x1x1x16xf32>
    %33 = vector.shape_cast %32 : vector<1x1x1x16xf32> to vector<1x16xf32>
    %c0_45 = arith.constant 0 : index
    %c199 = arith.constant 199 : index
    %34 = vector.load %arg5[%c0_45, %c199] : memref<4x324xf32, #tpu.memory_space<vmem>>, vector<1x16xf32>
    tpu.vector_store %arg5[%c0_45, %c199], %33 {strides = array<i32>} : memref<4x324xf32, #tpu.memory_space<vmem>>, vector<1x16xf32>,
    %c0_46 = arith.constant 0 : index
    %c0_47 = arith.constant 0 : index
    %c11 = arith.constant 11 : index
    %c0_48 = arith.constant 0 : index
    %35 = vector.load %arg1[%c0_46, %c0_47, %c11, %c0_48] : memref<1x4x16x16xf32, #tpu.memory_space<vmem>>, vector<1x1x1x16xf32>
    %36 = vector.shape_cast %35 : vector<1x1x1x16xf32> to vector<1x16xf32>
    %c0_49 = arith.constant 0 : index
    %c217 = arith.constant 217 : index
    %37 = vector.load %arg5[%c0_49, %c217] : memref<4x324xf32, #tpu.memory_space<vmem>>, vector<1x16xf32>
    tpu.vector_store %arg5[%c0_49, %c217], %36 {strides = array<i32>} : memref<4x324xf32, #tpu.memory_space<vmem>>, vector<1x16xf32>,
    %c0_50 = arith.constant 0 : index
    %c0_51 = arith.constant 0 : index
    %c12 = arith.constant 12 : index
    %c0_52 = arith.constant 0 : index
    %38 = vector.load %arg1[%c0_50, %c0_51, %c12, %c0_52] : memref<1x4x16x16xf32, #tpu.memory_space<vmem>>, vector<1x1x1x16xf32>
    %39 = vector.shape_cast %38 : vector<1x1x1x16xf32> to vector<1x16xf32>
    %c0_53 = arith.constant 0 : index
    %c235 = arith.constant 235 : index
    %40 = vector.load %arg5[%c0_53, %c235] : memref<4x324xf32, #tpu.memory_space<vmem>>, vector<1x16xf32>
    tpu.vector_store %arg5[%c0_53, %c235], %39 {strides = array<i32>} : memref<4x324xf32, #tpu.memory_space<vmem>>, vector<1x16xf32>,
    %c0_54 = arith.constant 0 : index
    %c0_55 = arith.constant 0 : index
    %c13 = arith.constant 13 : index
    %c0_56 = arith.constant 0 : index
    %41 = vector.load %arg1[%c0_54, %c0_55, %c13, %c0_56] : memref<1x4x16x16xf32, #tpu.memory_space<vmem>>, vector<1x1x1x16xf32>
    %42 = vector.shape_cast %41 : vector<1x1x1x16xf32> to vector<1x16xf32>
    %c0_57 = arith.constant 0 : index
    %c253 = arith.constant 253 : index
    %43 = vector.load %arg5[%c0_57, %c253] : memref<4x324xf32, #tpu.memory_space<vmem>>, vector<1x16xf32>
    tpu.vector_store %arg5[%c0_57, %c253], %42 {strides = array<i32>} : memref<4x324xf32, #tpu.memory_space<vmem>>, vector<1x16xf32>,
    %c0_58 = arith.constant 0 : index
    %c0_59 = arith.constant 0 : index
    %c14 = arith.constant 14 : index
    %c0_60 = arith.constant 0 : index
    %44 = vector.load %arg1[%c0_58, %c0_59, %c14, %c0_60] : memref<1x4x16x16xf32, #tpu.memory_space<vmem>>, vector<1x1x1x16xf32>
    %45 = vector.shape_cast %44 : vector<1x1x1x16xf32> to vector<1x16xf32>
    %c0_61 = arith.constant 0 : index
    %c271 = arith.constant 271 : index
    %46 = vector.load %arg5[%c0_61, %c271] : memref<4x324xf32, #tpu.memory_space<vmem>>, vector<1x16xf32>
    tpu.vector_store %arg5[%c0_61, %c271], %45 {strides = array<i32>} : memref<4x324xf32, #tpu.memory_space<vmem>>, vector<1x16xf32>,
    %c0_62 = arith.constant 0 : index
    %c0_63 = arith.constant 0 : index
    %c15 = arith.constant 15 : index
    %c0_64 = arith.constant 0 : index
    %47 = vector.load %arg1[%c0_62, %c0_63, %c15, %c0_64] : memref<1x4x16x16xf32, #tpu.memory_space<vmem>>, vector<1x1x1x16xf32>
    %48 = vector.shape_cast %47 : vector<1x1x1x16xf32> to vector<1x16xf32>
    %c0_65 = arith.constant 0 : index
    %c289 = arith.constant 289 : index
    %49 = vector.load %arg5[%c0_65, %c289] : memref<4x324xf32, #tpu.memory_space<vmem>>, vector<1x16xf32>
    tpu.vector_store %arg5[%c0_65, %c289], %48 {strides = array<i32>} : memref<4x324xf32, #tpu.memory_space<vmem>>, vector<1x16xf32>,
    %c0_66 = arith.constant 0 : index
    %c1_67 = arith.constant 1 : index
    %c0_68 = arith.constant 0 : index
    %c0_69 = arith.constant 0 : index
    %50 = vector.load %arg1[%c0_66, %c1_67, %c0_68, %c0_69] : memref<1x4x16x16xf32, #tpu.memory_space<vmem>>, vector<1x1x1x16xf32>
    %51 = vector.shape_cast %50 : vector<1x1x1x16xf32> to vector<1x16xf32>
    %c1_70 = arith.constant 1 : index
    %c19_71 = arith.constant 19 : index
    %52 = vector.load %arg5[%c1_70, %c19_71] : memref<4x324xf32, #tpu.memory_space<vmem>>, vector<1x16xf32>
    tpu.vector_store %arg5[%c1_70, %c19_71], %51 {strides = array<i32>} : memref<4x324xf32, #tpu.memory_space<vmem>>, vector<1x16xf32>,
    %c0_72 = arith.constant 0 : index
    %c1_73 = arith.constant 1 : index
    %c1_74 = arith.constant 1 : index
    %c0_75 = arith.constant 0 : index
    %53 = vector.load %arg1[%c0_72, %c1_73, %c1_74, %c0_75] : memref<1x4x16x16xf32, #tpu.memory_space<vmem>>, vector<1x1x1x16xf32>
    %54 = vector.shape_cast %53 : vector<1x1x1x16xf32> to vector<1x16xf32>
    %c1_76 = arith.constant 1 : index
    %c37_77 = arith.constant 37 : index
    %55 = vector.load %arg5[%c1_76, %c37_77] : memref<4x324xf32, #tpu.memory_space<vmem>>, vector<1x16xf32>
    tpu.vector_store %arg5[%c1_76, %c37_77], %54 {strides = array<i32>} : memref<4x324xf32, #tpu.memory_space<vmem>>, vector<1x16xf32>,
    %c0_78 = arith.constant 0 : index
    %c1_79 = arith.constant 1 : index
    %c2_80 = arith.constant 2 : index
    %c0_81 = arith.constant 0 : index
    %56 = vector.load %arg1[%c0_78, %c1_79, %c2_80, %c0_81] : memref<1x4x16x16xf32, #tpu.memory_space<vmem>>, vector<1x1x1x16xf32>
    %57 = vector.shape_cast %56 : vector<1x1x1x16xf32> to vector<1x16xf32>
    %c1_82 = arith.constant 1 : index
    %c55_83 = arith.constant 55 : index
    %58 = vector.load %arg5[%c1_82, %c55_83] : memref<4x324xf32, #tpu.memory_space<vmem>>, vector<1x16xf32>
    tpu.vector_store %arg5[%c1_82, %c55_83], %57 {strides = array<i32>} : memref<4x324xf32, #tpu.memory_space<vmem>>, vector<1x16xf32>,
    %c0_84 = arith.constant 0 : index
    %c1_85 = arith.constant 1 : index
    %c3_86 = arith.constant 3 : index
    %c0_87 = arith.constant 0 : index
    %59 = vector.load %arg1[%c0_84, %c1_85, %c3_86, %c0_87] : memref<1x4x16x16xf32, #tpu.memory_space<vmem>>, vector<1x1x1x16xf32>
    %60 = vector.shape_cast %59 : vector<1x1x1x16xf32> to vector<1x16xf32>
    %c1_88 = arith.constant 1 : index
    %c73_89 = arith.constant 73 : index
    %61 = vector.load %arg5[%c1_88, %c73_89] : memref<4x324xf32, #tpu.memory_space<vmem>>, vector<1x16xf32>
    tpu.vector_store %arg5[%c1_88, %c73_89], %60 {strides = array<i32>} : memref<4x324xf32, #tpu.memory_space<vmem>>, vector<1x16xf32>,
    %c0_90 = arith.constant 0 : index
    %c1_91 = arith.constant 1 : index
    %c4_92 = arith.constant 4 : index
    %c0_93 = arith.constant 0 : index
    %62 = vector.load %arg1[%c0_90, %c1_91, %c4_92, %c0_93] : memref<1x4x16x16xf32, #tpu.memory_space<vmem>>, vector<1x1x1x16xf32>
    %63 = vector.shape_cast %62 : vector<1x1x1x16xf32> to vector<1x16xf32>
    %c1_94 = arith.constant 1 : index
    %c91_95 = arith.constant 91 : index
    %64 = vector.load %arg5[%c1_94, %c91_95] : memref<4x324xf32, #tpu.memory_space<vmem>>, vector<1x16xf32>
    tpu.vector_store %arg5[%c1_94, %c91_95], %63 {strides = array<i32>} : memref<4x324xf32, #tpu.memory_space<vmem>>, vector<1x16xf32>,
    %c0_96 = arith.constant 0 : index
    %c1_97 = arith.constant 1 : index
    %c5_98 = arith.constant 5 : index
    %c0_99 = arith.constant 0 : index
    %65 = vector.load %arg1[%c0_96, %c1_97, %c5_98, %c0_99] : memref<1x4x16x16xf32, #tpu.memory_space<vmem>>, vector<1x1x1x16xf32>
    %66 = vector.shape_cast %65 : vector<1x1x1x16xf32> to vector<1x16xf32>
    %c1_100 = arith.constant 1 : index
    %c109_101 = arith.constant 109 : index
    %67 = vector.load %arg5[%c1_100, %c109_101] : memref<4x324xf32, #tpu.memory_space<vmem>>, vector<1x16xf32>
    tpu.vector_store %arg5[%c1_100, %c109_101], %66 {strides = array<i32>} : memref<4x324xf32, #tpu.memory_space<vmem>>, vector<1x16xf32>,
    %c0_102 = arith.constant 0 : index
    %c1_103 = arith.constant 1 : index
    %c6_104 = arith.constant 6 : index
    %c0_105 = arith.constant 0 : index
    %68 = vector.load %arg1[%c0_102, %c1_103, %c6_104, %c0_105] : memref<1x4x16x16xf32, #tpu.memory_space<vmem>>, vector<1x1x1x16xf32>
    %69 = vector.shape_cast %68 : vector<1x1x1x16xf32> to vector<1x16xf32>
    %c1_106 = arith.constant 1 : index
    %c127_107 = arith.constant 127 : index
    %70 = vector.load %arg5[%c1_106, %c127_107] : memref<4x324xf32, #tpu.memory_space<vmem>>, vector<1x16xf32>
    tpu.vector_store %arg5[%c1_106, %c127_107], %69 {strides = array<i32>} : memref<4x324xf32, #tpu.memory_space<vmem>>, vector<1x16xf32>,
    %c0_108 = arith.constant 0 : index
    %c1_109 = arith.constant 1 : index
    %c7_110 = arith.constant 7 : index
    %c0_111 = arith.constant 0 : index
    %71 = vector.load %arg1[%c0_108, %c1_109, %c7_110, %c0_111] : memref<1x4x16x16xf32, #tpu.memory_space<vmem>>, vector<1x1x1x16xf32>
    %72 = vector.shape_cast %71 : vector<1x1x1x16xf32> to vector<1x16xf32>
    %c1_112 = arith.constant 1 : index
    %c145_113 = arith.constant 145 : index
    %73 = vector.load %arg5[%c1_112, %c145_113] : memref<4x324xf32, #tpu.memory_space<vmem>>, vector<1x16xf32>
    tpu.vector_store %arg5[%c1_112, %c145_113], %72 {strides = array<i32>} : memref<4x324xf32, #tpu.memory_space<vmem>>, vector<1x16xf32>,
    %c0_114 = arith.constant 0 : index
    %c1_115 = arith.constant 1 : index
    %c8_116 = arith.constant 8 : index
    %c0_117 = arith.constant 0 : index
    %74 = vector.load %arg1[%c0_114, %c1_115, %c8_116, %c0_117] : memref<1x4x16x16xf32, #tpu.memory_space<vmem>>, vector<1x1x1x16xf32>
    %75 = vector.shape_cast %74 : vector<1x1x1x16xf32> to vector<1x16xf32>
    %c1_118 = arith.constant 1 : index
    %c163_119 = arith.constant 163 : index
    %76 = vector.load %arg5[%c1_118, %c163_119] : memref<4x324xf32, #tpu.memory_space<vmem>>, vector<1x16xf32>
    tpu.vector_store %arg5[%c1_118, %c163_119], %75 {strides = array<i32>} : memref<4x324xf32, #tpu.memory_space<vmem>>, vector<1x16xf32>,
    %c0_120 = arith.constant 0 : index
    %c1_121 = arith.constant 1 : index
    %c9_122 = arith.constant 9 : index
    %c0_123 = arith.constant 0 : index
    %77 = vector.load %arg1[%c0_120, %c1_121, %c9_122, %c0_123] : memref<1x4x16x16xf32, #tpu.memory_space<vmem>>, vector<1x1x1x16xf32>
    %78 = vector.shape_cast %77 : vector<1x1x1x16xf32> to vector<1x16xf32>
    %c1_124 = arith.constant 1 : index
    %c181_125 = arith.constant 181 : index
    %79 = vector.load %arg5[%c1_124, %c181_125] : memref<4x324xf32, #tpu.memory_space<vmem>>, vector<1x16xf32>
    tpu.vector_store %arg5[%c1_124, %c181_125], %78 {strides = array<i32>} : memref<4x324xf32, #tpu.memory_space<vmem>>, vector<1x16xf32>,
    %c0_126 = arith.constant 0 : index
    %c1_127 = arith.constant 1 : index
    %c10_128 = arith.constant 10 : index
    %c0_129 = arith.constant 0 : index
    %80 = vector.load %arg1[%c0_126, %c1_127, %c10_128, %c0_129] : memref<1x4x16x16xf32, #tpu.memory_space<vmem>>, vector<1x1x1x16xf32>
    %81 = vector.shape_cast %80 : vector<1x1x1x16xf32> to vector<1x16xf32>
    %c1_130 = arith.constant 1 : index
    %c199_131 = arith.constant 199 : index
    %82 = vector.load %arg5[%c1_130, %c199_131] : memref<4x324xf32, #tpu.memory_space<vmem>>, vector<1x16xf32>
    tpu.vector_store %arg5[%c1_130, %c199_131], %81 {strides = array<i32>} : memref<4x324xf32, #tpu.memory_space<vmem>>, vector<1x16xf32>,
    %c0_132 = arith.constant 0 : index
    %c1_133 = arith.constant 1 : index
    %c11_134 = arith.constant 11 : index
    %c0_135 = arith.constant 0 : index
    %83 = vector.load %arg1[%c0_132, %c1_133, %c11_134, %c0_135] : memref<1x4x16x16xf32, #tpu.memory_space<vmem>>, vector<1x1x1x16xf32>
    %84 = vector.shape_cast %83 : vector<1x1x1x16xf32> to vector<1x16xf32>
    %c1_136 = arith.constant 1 : index
    %c217_137 = arith.constant 217 : index
    %85 = vector.load %arg5[%c1_136, %c217_137] : memref<4x324xf32, #tpu.memory_space<vmem>>, vector<1x16xf32>
    tpu.vector_store %arg5[%c1_136, %c217_137], %84 {strides = array<i32>} : memref<4x324xf32, #tpu.memory_space<vmem>>, vector<1x16xf32>,
    %c0_138 = arith.constant 0 : index
    %c1_139 = arith.constant 1 : index
    %c12_140 = arith.constant 12 : index
    %c0_141 = arith.constant 0 : index
    %86 = vector.load %arg1[%c0_138, %c1_139, %c12_140, %c0_141] : memref<1x4x16x16xf32, #tpu.memory_space<vmem>>, vector<1x1x1x16xf32>
    %87 = vector.shape_cast %86 : vector<1x1x1x16xf32> to vector<1x16xf32>
    %c1_142 = arith.constant 1 : index
    %c235_143 = arith.constant 235 : index
    %88 = vector.load %arg5[%c1_142, %c235_143] : memref<4x324xf32, #tpu.memory_space<vmem>>, vector<1x16xf32>
    tpu.vector_store %arg5[%c1_142, %c235_143], %87 {strides = array<i32>} : memref<4x324xf32, #tpu.memory_space<vmem>>, vector<1x16xf32>,
    %c0_144 = arith.constant 0 : index
    %c1_145 = arith.constant 1 : index
    %c13_146 = arith.constant 13 : index
    %c0_147 = arith.constant 0 : index
    %89 = vector.load %arg1[%c0_144, %c1_145, %c13_146, %c0_147] : memref<1x4x16x16xf32, #tpu.memory_space<vmem>>, vector<1x1x1x16xf32>
    %90 = vector.shape_cast %89 : vector<1x1x1x16xf32> to vector<1x16xf32>
    %c1_148 = arith.constant 1 : index
    %c253_149 = arith.constant 253 : index
    %91 = vector.load %arg5[%c1_148, %c253_149] : memref<4x324xf32, #tpu.memory_space<vmem>>, vector<1x16xf32>
    tpu.vector_store %arg5[%c1_148, %c253_149], %90 {strides = array<i32>} : memref<4x324xf32, #tpu.memory_space<vmem>>, vector<1x16xf32>,
    %c0_150 = arith.constant 0 : index
    %c1_151 = arith.constant 1 : index
    %c14_152 = arith.constant 14 : index
    %c0_153 = arith.constant 0 : index
    %92 = vector.load %arg1[%c0_150, %c1_151, %c14_152, %c0_153] : memref<1x4x16x16xf32, #tpu.memory_space<vmem>>, vector<1x1x1x16xf32>
    %93 = vector.shape_cast %92 : vector<1x1x1x16xf32> to vector<1x16xf32>
    %c1_154 = arith.constant 1 : index
    %c271_155 = arith.constant 271 : index
    %94 = vector.load %arg5[%c1_154, %c271_155] : memref<4x324xf32, #tpu.memory_space<vmem>>, vector<1x16xf32>
    tpu.vector_store %arg5[%c1_154, %c271_155], %93 {strides = array<i32>} : memref<4x324xf32, #tpu.memory_space<vmem>>, vector<1x16xf32>,
    %c0_156 = arith.constant 0 : index
    %c1_157 = arith.constant 1 : index
    %c15_158 = arith.constant 15 : index
    %c0_159 = arith.constant 0 : index
    %95 = vector.load %arg1[%c0_156, %c1_157, %c15_158, %c0_159] : memref<1x4x16x16xf32, #tpu.memory_space<vmem>>, vector<1x1x1x16xf32>
    %96 = vector.shape_cast %95 : vector<1x1x1x16xf32> to vector<1x16xf32>
    %c1_160 = arith.constant 1 : index
    %c289_161 = arith.constant 289 : index
    %97 = vector.load %arg5[%c1_160, %c289_161] : memref<4x324xf32, #tpu.memory_space<vmem>>, vector<1x16xf32>
    tpu.vector_store %arg5[%c1_160, %c289_161], %96 {strides = array<i32>} : memref<4x324xf32, #tpu.memory_space<vmem>>, vector<1x16xf32>,
    %c0_162 = arith.constant 0 : index
    %c2_163 = arith.constant 2 : index
    %c0_164 = arith.constant 0 : index
    %c0_165 = arith.constant 0 : index
    %98 = vector.load %arg1[%c0_162, %c2_163, %c0_164, %c0_165] : memref<1x4x16x16xf32, #tpu.memory_space<vmem>>, vector<1x1x1x16xf32>
    %99 = vector.shape_cast %98 : vector<1x1x1x16xf32> to vector<1x16xf32>
    %c2_166 = arith.constant 2 : index
    %c19_167 = arith.constant 19 : index
    %100 = vector.load %arg5[%c2_166, %c19_167] : memref<4x324xf32, #tpu.memory_space<vmem>>, vector<1x16xf32>
    tpu.vector_store %arg5[%c2_166, %c19_167], %99 {strides = array<i32>} : memref<4x324xf32, #tpu.memory_space<vmem>>, vector<1x16xf32>,
    %c0_168 = arith.constant 0 : index
    %c2_169 = arith.constant 2 : index
    %c1_170 = arith.constant 1 : index
    %c0_171 = arith.constant 0 : index
    %101 = vector.load %arg1[%c0_168, %c2_169, %c1_170, %c0_171] : memref<1x4x16x16xf32, #tpu.memory_space<vmem>>, vector<1x1x1x16xf32>
    %102 = vector.shape_cast %101 : vector<1x1x1x16xf32> to vector<1x16xf32>
    %c2_172 = arith.constant 2 : index
    %c37_173 = arith.constant 37 : index
    %103 = vector.load %arg5[%c2_172, %c37_173] : memref<4x324xf32, #tpu.memory_space<vmem>>, vector<1x16xf32>
    tpu.vector_store %arg5[%c2_172, %c37_173], %102 {strides = array<i32>} : memref<4x324xf32, #tpu.memory_space<vmem>>, vector<1x16xf32>,
    %c0_174 = arith.constant 0 : index
    %c2_175 = arith.constant 2 : index
    %c2_176 = arith.constant 2 : index
    %c0_177 = arith.constant 0 : index
    %104 = vector.load %arg1[%c0_174, %c2_175, %c2_176, %c0_177] : memref<1x4x16x16xf32, #tpu.memory_space<vmem>>, vector<1x1x1x16xf32>
    %105 = vector.shape_cast %104 : vector<1x1x1x16xf32> to vector<1x16xf32>
    %c2_178 = arith.constant 2 : index
    %c55_179 = arith.constant 55 : index
    %106 = vector.load %arg5[%c2_178, %c55_179] : memref<4x324xf32, #tpu.memory_space<vmem>>, vector<1x16xf32>
    tpu.vector_store %arg5[%c2_178, %c55_179], %105 {strides = array<i32>} : memref<4x324xf32, #tpu.memory_space<vmem>>, vector<1x16xf32>,
    %c0_180 = arith.constant 0 : index
    %c2_181 = arith.constant 2 : index
    %c3_182 = arith.constant 3 : index
    %c0_183 = arith.constant 0 : index
    %107 = vector.load %arg1[%c0_180, %c2_181, %c3_182, %c0_183] : memref<1x4x16x16xf32, #tpu.memory_space<vmem>>, vector<1x1x1x16xf32>
    %108 = vector.shape_cast %107 : vector<1x1x1x16xf32> to vector<1x16xf32>
    %c2_184 = arith.constant 2 : index
    %c73_185 = arith.constant 73 : index
    %109 = vector.load %arg5[%c2_184, %c73_185] : memref<4x324xf32, #tpu.memory_space<vmem>>, vector<1x16xf32>
    tpu.vector_store %arg5[%c2_184, %c73_185], %108 {strides = array<i32>} : memref<4x324xf32, #tpu.memory_space<vmem>>, vector<1x16xf32>,
    %c0_186 = arith.constant 0 : index
    %c2_187 = arith.constant 2 : index
    %c4_188 = arith.constant 4 : index
    %c0_189 = arith.constant 0 : index
    %110 = vector.load %arg1[%c0_186, %c2_187, %c4_188, %c0_189] : memref<1x4x16x16xf32, #tpu.memory_space<vmem>>, vector<1x1x1x16xf32>
    %111 = vector.shape_cast %110 : vector<1x1x1x16xf32> to vector<1x16xf32>
    %c2_190 = arith.constant 2 : index
    %c91_191 = arith.constant 91 : index
    %112 = vector.load %arg5[%c2_190, %c91_191] : memref<4x324xf32, #tpu.memory_space<vmem>>, vector<1x16xf32>
    tpu.vector_store %arg5[%c2_190, %c91_191], %111 {strides = array<i32>} : memref<4x324xf32, #tpu.memory_space<vmem>>, vector<1x16xf32>,
    %c0_192 = arith.constant 0 : index
    %c2_193 = arith.constant 2 : index
    %c5_194 = arith.constant 5 : index
    %c0_195 = arith.constant 0 : index
    %113 = vector.load %arg1[%c0_192, %c2_193, %c5_194, %c0_195] : memref<1x4x16x16xf32, #tpu.memory_space<vmem>>, vector<1x1x1x16xf32>
    %114 = vector.shape_cast %113 : vector<1x1x1x16xf32> to vector<1x16xf32>
    %c2_196 = arith.constant 2 : index
    %c109_197 = arith.constant 109 : index
    %115 = vector.load %arg5[%c2_196, %c109_197] : memref<4x324xf32, #tpu.memory_space<vmem>>, vector<1x16xf32>
    tpu.vector_store %arg5[%c2_196, %c109_197], %114 {strides = array<i32>} : memref<4x324xf32, #tpu.memory_space<vmem>>, vector<1x16xf32>,
    %c0_198 = arith.constant 0 : index
    %c2_199 = arith.constant 2 : index
    %c6_200 = arith.constant 6 : index
    %c0_201 = arith.constant 0 : index
    %116 = vector.load %arg1[%c0_198, %c2_199, %c6_200, %c0_201] : memref<1x4x16x16xf32, #tpu.memory_space<vmem>>, vector<1x1x1x16xf32>
    %117 = vector.shape_cast %116 : vector<1x1x1x16xf32> to vector<1x16xf32>
    %c2_202 = arith.constant 2 : index
    %c127_203 = arith.constant 127 : index
    %118 = vector.load %arg5[%c2_202, %c127_203] : memref<4x324xf32, #tpu.memory_space<vmem>>, vector<1x16xf32>
    tpu.vector_store %arg5[%c2_202, %c127_203], %117 {strides = array<i32>} : memref<4x324xf32, #tpu.memory_space<vmem>>, vector<1x16xf32>,
    %c0_204 = arith.constant 0 : index
    %c2_205 = arith.constant 2 : index
    %c7_206 = arith.constant 7 : index
    %c0_207 = arith.constant 0 : index
    %119 = vector.load %arg1[%c0_204, %c2_205, %c7_206, %c0_207] : memref<1x4x16x16xf32, #tpu.memory_space<vmem>>, vector<1x1x1x16xf32>
    %120 = vector.shape_cast %119 : vector<1x1x1x16xf32> to vector<1x16xf32>
    %c2_208 = arith.constant 2 : index
    %c145_209 = arith.constant 145 : index
    %121 = vector.load %arg5[%c2_208, %c145_209] : memref<4x324xf32, #tpu.memory_space<vmem>>, vector<1x16xf32>
    tpu.vector_store %arg5[%c2_208, %c145_209], %120 {strides = array<i32>} : memref<4x324xf32, #tpu.memory_space<vmem>>, vector<1x16xf32>,
    %c0_210 = arith.constant 0 : index
    %c2_211 = arith.constant 2 : index
    %c8_212 = arith.constant 8 : index
    %c0_213 = arith.constant 0 : index
    %122 = vector.load %arg1[%c0_210, %c2_211, %c8_212, %c0_213] : memref<1x4x16x16xf32, #tpu.memory_space<vmem>>, vector<1x1x1x16xf32>
    %123 = vector.shape_cast %122 : vector<1x1x1x16xf32> to vector<1x16xf32>
    %c2_214 = arith.constant 2 : index
    %c163_215 = arith.constant 163 : index
    %124 = vector.load %arg5[%c2_214, %c163_215] : memref<4x324xf32, #tpu.memory_space<vmem>>, vector<1x16xf32>
    tpu.vector_store %arg5[%c2_214, %c163_215], %123 {strides = array<i32>} : memref<4x324xf32, #tpu.memory_space<vmem>>, vector<1x16xf32>,
    %c0_216 = arith.constant 0 : index
    %c2_217 = arith.constant 2 : index
    %c9_218 = arith.constant 9 : index
    %c0_219 = arith.constant 0 : index
    %125 = vector.load %arg1[%c0_216, %c2_217, %c9_218, %c0_219] : memref<1x4x16x16xf32, #tpu.memory_space<vmem>>, vector<1x1x1x16xf32>
    %126 = vector.shape_cast %125 : vector<1x1x1x16xf32> to vector<1x16xf32>
    %c2_220 = arith.constant 2 : index
    %c181_221 = arith.constant 181 : index
    %127 = vector.load %arg5[%c2_220, %c181_221] : memref<4x324xf32, #tpu.memory_space<vmem>>, vector<1x16xf32>
    tpu.vector_store %arg5[%c2_220, %c181_221], %126 {strides = array<i32>} : memref<4x324xf32, #tpu.memory_space<vmem>>, vector<1x16xf32>,
    %c0_222 = arith.constant 0 : index
    %c2_223 = arith.constant 2 : index
    %c10_224 = arith.constant 10 : index
    %c0_225 = arith.constant 0 : index
    %128 = vector.load %arg1[%c0_222, %c2_223, %c10_224, %c0_225] : memref<1x4x16x16xf32, #tpu.memory_space<vmem>>, vector<1x1x1x16xf32>
    %129 = vector.shape_cast %128 : vector<1x1x1x16xf32> to vector<1x16xf32>
    %c2_226 = arith.constant 2 : index
    %c199_227 = arith.constant 199 : index
    %130 = vector.load %arg5[%c2_226, %c199_227] : memref<4x324xf32, #tpu.memory_space<vmem>>, vector<1x16xf32>
    tpu.vector_store %arg5[%c2_226, %c199_227], %129 {strides = array<i32>} : memref<4x324xf32, #tpu.memory_space<vmem>>, vector<1x16xf32>,
    %c0_228 = arith.constant 0 : index
    %c2_229 = arith.constant 2 : index
    %c11_230 = arith.constant 11 : index
    %c0_231 = arith.constant 0 : index
    %131 = vector.load %arg1[%c0_228, %c2_229, %c11_230, %c0_231] : memref<1x4x16x16xf32, #tpu.memory_space<vmem>>, vector<1x1x1x16xf32>
    %132 = vector.shape_cast %131 : vector<1x1x1x16xf32> to vector<1x16xf32>
    %c2_232 = arith.constant 2 : index
    %c217_233 = arith.constant 217 : index
    %133 = vector.load %arg5[%c2_232, %c217_233] : memref<4x324xf32, #tpu.memory_space<vmem>>, vector<1x16xf32>
    tpu.vector_store %arg5[%c2_232, %c217_233], %132 {strides = array<i32>} : memref<4x324xf32, #tpu.memory_space<vmem>>, vector<1x16xf32>,
    %c0_234 = arith.constant 0 : index
    %c2_235 = arith.constant 2 : index
    %c12_236 = arith.constant 12 : index
    %c0_237 = arith.constant 0 : index
    %134 = vector.load %arg1[%c0_234, %c2_235, %c12_236, %c0_237] : memref<1x4x16x16xf32, #tpu.memory_space<vmem>>, vector<1x1x1x16xf32>
    %135 = vector.shape_cast %134 : vector<1x1x1x16xf32> to vector<1x16xf32>
    %c2_238 = arith.constant 2 : index
    %c235_239 = arith.constant 235 : index
    %136 = vector.load %arg5[%c2_238, %c235_239] : memref<4x324xf32, #tpu.memory_space<vmem>>, vector<1x16xf32>
    tpu.vector_store %arg5[%c2_238, %c235_239], %135 {strides = array<i32>} : memref<4x324xf32, #tpu.memory_space<vmem>>, vector<1x16xf32>,
    %c0_240 = arith.constant 0 : index
    %c2_241 = arith.constant 2 : index
    %c13_242 = arith.constant 13 : index
    %c0_243 = arith.constant 0 : index
    %137 = vector.load %arg1[%c0_240, %c2_241, %c13_242, %c0_243] : memref<1x4x16x16xf32, #tpu.memory_space<vmem>>, vector<1x1x1x16xf32>
    %138 = vector.shape_cast %137 : vector<1x1x1x16xf32> to vector<1x16xf32>
    %c2_244 = arith.constant 2 : index
    %c253_245 = arith.constant 253 : index
    %139 = vector.load %arg5[%c2_244, %c253_245] : memref<4x324xf32, #tpu.memory_space<vmem>>, vector<1x16xf32>
    tpu.vector_store %arg5[%c2_244, %c253_245], %138 {strides = array<i32>} : memref<4x324xf32, #tpu.memory_space<vmem>>, vector<1x16xf32>,
    %c0_246 = arith.constant 0 : index
    %c2_247 = arith.constant 2 : index
    %c14_248 = arith.constant 14 : index
    %c0_249 = arith.constant 0 : index
    %140 = vector.load %arg1[%c0_246, %c2_247, %c14_248, %c0_249] : memref<1x4x16x16xf32, #tpu.memory_space<vmem>>, vector<1x1x1x16xf32>
    %141 = vector.shape_cast %140 : vector<1x1x1x16xf32> to vector<1x16xf32>
    %c2_250 = arith.constant 2 : index
    %c271_251 = arith.constant 271 : index
    %142 = vector.load %arg5[%c2_250, %c271_251] : memref<4x324xf32, #tpu.memory_space<vmem>>, vector<1x16xf32>
    tpu.vector_store %arg5[%c2_250, %c271_251], %141 {strides = array<i32>} : memref<4x324xf32, #tpu.memory_space<vmem>>, vector<1x16xf32>,
    %c0_252 = arith.constant 0 : index
    %c2_253 = arith.constant 2 : index
    %c15_254 = arith.constant 15 : index
    %c0_255 = arith.constant 0 : index
    %143 = vector.load %arg1[%c0_252, %c2_253, %c15_254, %c0_255] : memref<1x4x16x16xf32, #tpu.memory_space<vmem>>, vector<1x1x1x16xf32>
    %144 = vector.shape_cast %143 : vector<1x1x1x16xf32> to vector<1x16xf32>
    %c2_256 = arith.constant 2 : index
    %c289_257 = arith.constant 289 : index
    %145 = vector.load %arg5[%c2_256, %c289_257] : memref<4x324xf32, #tpu.memory_space<vmem>>, vector<1x16xf32>
    tpu.vector_store %arg5[%c2_256, %c289_257], %144 {strides = array<i32>} : memref<4x324xf32, #tpu.memory_space<vmem>>, vector<1x16xf32>,
    %c0_258 = arith.constant 0 : index
    %c3_259 = arith.constant 3 : index
    %c0_260 = arith.constant 0 : index
    %c0_261 = arith.constant 0 : index
    %146 = vector.load %arg1[%c0_258, %c3_259, %c0_260, %c0_261] : memref<1x4x16x16xf32, #tpu.memory_space<vmem>>, vector<1x1x1x16xf32>
    %147 = vector.shape_cast %146 : vector<1x1x1x16xf32> to vector<1x16xf32>
    %c3_262 = arith.constant 3 : index
    %c19_263 = arith.constant 19 : index
    %148 = vector.load %arg5[%c3_262, %c19_263] : memref<4x324xf32, #tpu.memory_space<vmem>>, vector<1x16xf32>
    tpu.vector_store %arg5[%c3_262, %c19_263], %147 {strides = array<i32>} : memref<4x324xf32, #tpu.memory_space<vmem>>, vector<1x16xf32>,
    %c0_264 = arith.constant 0 : index
    %c3_265 = arith.constant 3 : index
    %c1_266 = arith.constant 1 : index
    %c0_267 = arith.constant 0 : index
    %149 = vector.load %arg1[%c0_264, %c3_265, %c1_266, %c0_267] : memref<1x4x16x16xf32, #tpu.memory_space<vmem>>, vector<1x1x1x16xf32>
    %150 = vector.shape_cast %149 : vector<1x1x1x16xf32> to vector<1x16xf32>
    %c3_268 = arith.constant 3 : index
    %c37_269 = arith.constant 37 : index
    %151 = vector.load %arg5[%c3_268, %c37_269] : memref<4x324xf32, #tpu.memory_space<vmem>>, vector<1x16xf32>
    tpu.vector_store %arg5[%c3_268, %c37_269], %150 {strides = array<i32>} : memref<4x324xf32, #tpu.memory_space<vmem>>, vector<1x16xf32>,
    %c0_270 = arith.constant 0 : index
    %c3_271 = arith.constant 3 : index
    %c2_272 = arith.constant 2 : index
    %c0_273 = arith.constant 0 : index
    %152 = vector.load %arg1[%c0_270, %c3_271, %c2_272, %c0_273] : memref<1x4x16x16xf32, #tpu.memory_space<vmem>>, vector<1x1x1x16xf32>
    %153 = vector.shape_cast %152 : vector<1x1x1x16xf32> to vector<1x16xf32>
    %c3_274 = arith.constant 3 : index
    %c55_275 = arith.constant 55 : index
    %154 = vector.load %arg5[%c3_274, %c55_275] : memref<4x324xf32, #tpu.memory_space<vmem>>, vector<1x16xf32>
    tpu.vector_store %arg5[%c3_274, %c55_275], %153 {strides = array<i32>} : memref<4x324xf32, #tpu.memory_space<vmem>>, vector<1x16xf32>,
    %c0_276 = arith.constant 0 : index
    %c3_277 = arith.constant 3 : index
    %c3_278 = arith.constant 3 : index
    %c0_279 = arith.constant 0 : index
    %155 = vector.load %arg1[%c0_276, %c3_277, %c3_278, %c0_279] : memref<1x4x16x16xf32, #tpu.memory_space<vmem>>, vector<1x1x1x16xf32>
    %156 = vector.shape_cast %155 : vector<1x1x1x16xf32> to vector<1x16xf32>
    %c3_280 = arith.constant 3 : index
    %c73_281 = arith.constant 73 : index
    %157 = vector.load %arg5[%c3_280, %c73_281] : memref<4x324xf32, #tpu.memory_space<vmem>>, vector<1x16xf32>
    tpu.vector_store %arg5[%c3_280, %c73_281], %156 {strides = array<i32>} : memref<4x324xf32, #tpu.memory_space<vmem>>, vector<1x16xf32>,
    %c0_282 = arith.constant 0 : index
    %c3_283 = arith.constant 3 : index
    %c4_284 = arith.constant 4 : index
    %c0_285 = arith.constant 0 : index
    %158 = vector.load %arg1[%c0_282, %c3_283, %c4_284, %c0_285] : memref<1x4x16x16xf32, #tpu.memory_space<vmem>>, vector<1x1x1x16xf32>
    %159 = vector.shape_cast %158 : vector<1x1x1x16xf32> to vector<1x16xf32>
    %c3_286 = arith.constant 3 : index
    %c91_287 = arith.constant 91 : index
    %160 = vector.load %arg5[%c3_286, %c91_287] : memref<4x324xf32, #tpu.memory_space<vmem>>, vector<1x16xf32>
    tpu.vector_store %arg5[%c3_286, %c91_287], %159 {strides = array<i32>} : memref<4x324xf32, #tpu.memory_space<vmem>>, vector<1x16xf32>,
    %c0_288 = arith.constant 0 : index
    %c3_289 = arith.constant 3 : index
    %c5_290 = arith.constant 5 : index
    %c0_291 = arith.constant 0 : index
    %161 = vector.load %arg1[%c0_288, %c3_289, %c5_290, %c0_291] : memref<1x4x16x16xf32, #tpu.memory_space<vmem>>, vector<1x1x1x16xf32>
    %162 = vector.shape_cast %161 : vector<1x1x1x16xf32> to vector<1x16xf32>
    %c3_292 = arith.constant 3 : index
    %c109_293 = arith.constant 109 : index
    %163 = vector.load %arg5[%c3_292, %c109_293] : memref<4x324xf32, #tpu.memory_space<vmem>>, vector<1x16xf32>
    tpu.vector_store %arg5[%c3_292, %c109_293], %162 {strides = array<i32>} : memref<4x324xf32, #tpu.memory_space<vmem>>, vector<1x16xf32>,
    %c0_294 = arith.constant 0 : index
    %c3_295 = arith.constant 3 : index
    %c6_296 = arith.constant 6 : index
    %c0_297 = arith.constant 0 : index
    %164 = vector.load %arg1[%c0_294, %c3_295, %c6_296, %c0_297] : memref<1x4x16x16xf32, #tpu.memory_space<vmem>>, vector<1x1x1x16xf32>
    %165 = vector.shape_cast %164 : vector<1x1x1x16xf32> to vector<1x16xf32>
    %c3_298 = arith.constant 3 : index
    %c127_299 = arith.constant 127 : index
    %166 = vector.load %arg5[%c3_298, %c127_299] : memref<4x324xf32, #tpu.memory_space<vmem>>, vector<1x16xf32>
    tpu.vector_store %arg5[%c3_298, %c127_299], %165 {strides = array<i32>} : memref<4x324xf32, #tpu.memory_space<vmem>>, vector<1x16xf32>,
    %c0_300 = arith.constant 0 : index
    %c3_301 = arith.constant 3 : index
    %c7_302 = arith.constant 7 : index
    %c0_303 = arith.constant 0 : index
    %167 = vector.load %arg1[%c0_300, %c3_301, %c7_302, %c0_303] : memref<1x4x16x16xf32, #tpu.memory_space<vmem>>, vector<1x1x1x16xf32>
    %168 = vector.shape_cast %167 : vector<1x1x1x16xf32> to vector<1x16xf32>
    %c3_304 = arith.constant 3 : index
    %c145_305 = arith.constant 145 : index
    %169 = vector.load %arg5[%c3_304, %c145_305] : memref<4x324xf32, #tpu.memory_space<vmem>>, vector<1x16xf32>
    tpu.vector_store %arg5[%c3_304, %c145_305], %168 {strides = array<i32>} : memref<4x324xf32, #tpu.memory_space<vmem>>, vector<1x16xf32>,
    %c0_306 = arith.constant 0 : index
    %c3_307 = arith.constant 3 : index
    %c8_308 = arith.constant 8 : index
    %c0_309 = arith.constant 0 : index
    %170 = vector.load %arg1[%c0_306, %c3_307, %c8_308, %c0_309] : memref<1x4x16x16xf32, #tpu.memory_space<vmem>>, vector<1x1x1x16xf32>
    %171 = vector.shape_cast %170 : vector<1x1x1x16xf32> to vector<1x16xf32>
    %c3_310 = arith.constant 3 : index
    %c163_311 = arith.constant 163 : index
    %172 = vector.load %arg5[%c3_310, %c163_311] : memref<4x324xf32, #tpu.memory_space<vmem>>, vector<1x16xf32>
    tpu.vector_store %arg5[%c3_310, %c163_311], %171 {strides = array<i32>} : memref<4x324xf32, #tpu.memory_space<vmem>>, vector<1x16xf32>,
    %c0_312 = arith.constant 0 : index
    %c3_313 = arith.constant 3 : index
    %c9_314 = arith.constant 9 : index
    %c0_315 = arith.constant 0 : index
    %173 = vector.load %arg1[%c0_312, %c3_313, %c9_314, %c0_315] : memref<1x4x16x16xf32, #tpu.memory_space<vmem>>, vector<1x1x1x16xf32>
    %174 = vector.shape_cast %173 : vector<1x1x1x16xf32> to vector<1x16xf32>
    %c3_316 = arith.constant 3 : index
    %c181_317 = arith.constant 181 : index
    %175 = vector.load %arg5[%c3_316, %c181_317] : memref<4x324xf32, #tpu.memory_space<vmem>>, vector<1x16xf32>
    tpu.vector_store %arg5[%c3_316, %c181_317], %174 {strides = array<i32>} : memref<4x324xf32, #tpu.memory_space<vmem>>, vector<1x16xf32>,
    %c0_318 = arith.constant 0 : index
    %c3_319 = arith.constant 3 : index
    %c10_320 = arith.constant 10 : index
    %c0_321 = arith.constant 0 : index
    %176 = vector.load %arg1[%c0_318, %c3_319, %c10_320, %c0_321] : memref<1x4x16x16xf32, #tpu.memory_space<vmem>>, vector<1x1x1x16xf32>
    %177 = vector.shape_cast %176 : vector<1x1x1x16xf32> to vector<1x16xf32>
    %c3_322 = arith.constant 3 : index
    %c199_323 = arith.constant 199 : index
    %178 = vector.load %arg5[%c3_322, %c199_323] : memref<4x324xf32, #tpu.memory_space<vmem>>, vector<1x16xf32>
    tpu.vector_store %arg5[%c3_322, %c199_323], %177 {strides = array<i32>} : memref<4x324xf32, #tpu.memory_space<vmem>>, vector<1x16xf32>,
    %c0_324 = arith.constant 0 : index
    %c3_325 = arith.constant 3 : index
    %c11_326 = arith.constant 11 : index
    %c0_327 = arith.constant 0 : index
    %179 = vector.load %arg1[%c0_324, %c3_325, %c11_326, %c0_327] : memref<1x4x16x16xf32, #tpu.memory_space<vmem>>, vector<1x1x1x16xf32>
    %180 = vector.shape_cast %179 : vector<1x1x1x16xf32> to vector<1x16xf32>
    %c3_328 = arith.constant 3 : index
    %c217_329 = arith.constant 217 : index
    %181 = vector.load %arg5[%c3_328, %c217_329] : memref<4x324xf32, #tpu.memory_space<vmem>>, vector<1x16xf32>
    tpu.vector_store %arg5[%c3_328, %c217_329], %180 {strides = array<i32>} : memref<4x324xf32, #tpu.memory_space<vmem>>, vector<1x16xf32>,
    %c0_330 = arith.constant 0 : index
    %c3_331 = arith.constant 3 : index
    %c12_332 = arith.constant 12 : index
    %c0_333 = arith.constant 0 : index
    %182 = vector.load %arg1[%c0_330, %c3_331, %c12_332, %c0_333] : memref<1x4x16x16xf32, #tpu.memory_space<vmem>>, vector<1x1x1x16xf32>
    %183 = vector.shape_cast %182 : vector<1x1x1x16xf32> to vector<1x16xf32>
    %c3_334 = arith.constant 3 : index
    %c235_335 = arith.constant 235 : index
    %184 = vector.load %arg5[%c3_334, %c235_335] : memref<4x324xf32, #tpu.memory_space<vmem>>, vector<1x16xf32>
    tpu.vector_store %arg5[%c3_334, %c235_335], %183 {strides = array<i32>} : memref<4x324xf32, #tpu.memory_space<vmem>>, vector<1x16xf32>,
    %c0_336 = arith.constant 0 : index
    %c3_337 = arith.constant 3 : index
    %c13_338 = arith.constant 13 : index
    %c0_339 = arith.constant 0 : index
    %185 = vector.load %arg1[%c0_336, %c3_337, %c13_338, %c0_339] : memref<1x4x16x16xf32, #tpu.memory_space<vmem>>, vector<1x1x1x16xf32>
    %186 = vector.shape_cast %185 : vector<1x1x1x16xf32> to vector<1x16xf32>
    %c3_340 = arith.constant 3 : index
    %c253_341 = arith.constant 253 : index
    %187 = vector.load %arg5[%c3_340, %c253_341] : memref<4x324xf32, #tpu.memory_space<vmem>>, vector<1x16xf32>
    tpu.vector_store %arg5[%c3_340, %c253_341], %186 {strides = array<i32>} : memref<4x324xf32, #tpu.memory_space<vmem>>, vector<1x16xf32>,
    %c0_342 = arith.constant 0 : index
    %c3_343 = arith.constant 3 : index
    %c14_344 = arith.constant 14 : index
    %c0_345 = arith.constant 0 : index
    %188 = vector.load %arg1[%c0_342, %c3_343, %c14_344, %c0_345] : memref<1x4x16x16xf32, #tpu.memory_space<vmem>>, vector<1x1x1x16xf32>
    %189 = vector.shape_cast %188 : vector<1x1x1x16xf32> to vector<1x16xf32>
    %c3_346 = arith.constant 3 : index
    %c271_347 = arith.constant 271 : index
    %190 = vector.load %arg5[%c3_346, %c271_347] : memref<4x324xf32, #tpu.memory_space<vmem>>, vector<1x16xf32>
    tpu.vector_store %arg5[%c3_346, %c271_347], %189 {strides = array<i32>} : memref<4x324xf32, #tpu.memory_space<vmem>>, vector<1x16xf32>,
    %c0_348 = arith.constant 0 : index
    %c3_349 = arith.constant 3 : index
    %c15_350 = arith.constant 15 : index
    %c0_351 = arith.constant 0 : index
    %191 = vector.load %arg1[%c0_348, %c3_349, %c15_350, %c0_351] : memref<1x4x16x16xf32, #tpu.memory_space<vmem>>, vector<1x1x1x16xf32>
    %192 = vector.shape_cast %191 : vector<1x1x1x16xf32> to vector<1x16xf32>
    %c3_352 = arith.constant 3 : index
    %c289_353 = arith.constant 289 : index
    %193 = vector.load %arg5[%c3_352, %c289_353] : memref<4x324xf32, #tpu.memory_space<vmem>>, vector<1x16xf32>
    tpu.vector_store %arg5[%c3_352, %c289_353], %192 {strides = array<i32>} : memref<4x324xf32, #tpu.memory_space<vmem>>, vector<1x16xf32>,
    %c0_354 = arith.constant 0 : index
    %c0_355 = arith.constant 0 : index
    %194 = vector.load %arg5[%c0_354, %c0_355] : memref<4x324xf32, #tpu.memory_space<vmem>>, vector<4x324xf32>
    %195 = vector.extract_strided_slice %194 {offsets = [0, 0], sizes = [4, 286], strides = [1, 1]} : vector<4x324xf32> to vector<4x286xf32>
    %196 = vector.extract_strided_slice %194 {offsets = [0, 1], sizes = [4, 286], strides = [1, 1]} : vector<4x324xf32> to vector<4x286xf32>
    %197 = vector.extract_strided_slice %194 {offsets = [0, 2], sizes = [4, 286], strides = [1, 1]} : vector<4x324xf32> to vector<4x286xf32>
    %198 = vector.extract_strided_slice %194 {offsets = [0, 18], sizes = [4, 286], strides = [1, 1]} : vector<4x324xf32> to vector<4x286xf32>
    %199 = vector.extract_strided_slice %194 {offsets = [0, 19], sizes = [4, 286], strides = [1, 1]} : vector<4x324xf32> to vector<4x286xf32>
    %200 = vector.extract_strided_slice %194 {offsets = [0, 20], sizes = [4, 286], strides = [1, 1]} : vector<4x324xf32> to vector<4x286xf32>
    %201 = vector.extract_strided_slice %194 {offsets = [0, 36], sizes = [4, 286], strides = [1, 1]} : vector<4x324xf32> to vector<4x286xf32>
    %202 = vector.extract_strided_slice %194 {offsets = [0, 37], sizes = [4, 286], strides = [1, 1]} : vector<4x324xf32> to vector<4x286xf32>
    %203 = vector.extract_strided_slice %194 {offsets = [0, 38], sizes = [4, 286], strides = [1, 1]} : vector<4x324xf32> to vector<4x286xf32>
    %204 = vector.extract_strided_slice %195 {offsets = [0, 0], sizes = [1, 286], strides = [1, 1]} : vector<4x286xf32> to vector<1x286xf32>
    %c0_356 = arith.constant 0 : index
    %205 = memref.load %arg2[%c0_356] : memref<108xf32, #tpu.memory_space<smem>>
    %206 = vector.broadcast %205 : f32 to vector<1x286xf32>
    %207 = arith.mulf %204, %206 : vector<1x286xf32>
    %208 = vector.extract_strided_slice %196 {offsets = [0, 0], sizes = [1, 286], strides = [1, 1]} : vector<4x286xf32> to vector<1x286xf32>
    %c1_357 = arith.constant 1 : index
    %209 = memref.load %arg2[%c1_357] : memref<108xf32, #tpu.memory_space<smem>>
    %210 = vector.broadcast %209 : f32 to vector<1x286xf32>
    %211 = arith.mulf %208, %210 : vector<1x286xf32>
    %212 = arith.addf %207, %211 : vector<1x286xf32>
    %213 = vector.extract_strided_slice %197 {offsets = [0, 0], sizes = [1, 286], strides = [1, 1]} : vector<4x286xf32> to vector<1x286xf32>
    %c2_358 = arith.constant 2 : index
    %214 = memref.load %arg2[%c2_358] : memref<108xf32, #tpu.memory_space<smem>>
    %215 = vector.broadcast %214 : f32 to vector<1x286xf32>
    %216 = arith.mulf %213, %215 : vector<1x286xf32>
    %217 = arith.addf %212, %216 : vector<1x286xf32>
    %218 = vector.extract_strided_slice %198 {offsets = [0, 0], sizes = [1, 286], strides = [1, 1]} : vector<4x286xf32> to vector<1x286xf32>
    %c3_359 = arith.constant 3 : index
    %219 = memref.load %arg2[%c3_359] : memref<108xf32, #tpu.memory_space<smem>>
    %220 = vector.broadcast %219 : f32 to vector<1x286xf32>
    %221 = arith.mulf %218, %220 : vector<1x286xf32>
    %222 = arith.addf %217, %221 : vector<1x286xf32>
    %223 = vector.extract_strided_slice %199 {offsets = [0, 0], sizes = [1, 286], strides = [1, 1]} : vector<4x286xf32> to vector<1x286xf32>
    %c4_360 = arith.constant 4 : index
    %224 = memref.load %arg2[%c4_360] : memref<108xf32, #tpu.memory_space<smem>>
    %225 = vector.broadcast %224 : f32 to vector<1x286xf32>
    %226 = arith.mulf %223, %225 : vector<1x286xf32>
    %227 = arith.addf %222, %226 : vector<1x286xf32>
    %228 = vector.extract_strided_slice %200 {offsets = [0, 0], sizes = [1, 286], strides = [1, 1]} : vector<4x286xf32> to vector<1x286xf32>
    %c5_361 = arith.constant 5 : index
    %229 = memref.load %arg2[%c5_361] : memref<108xf32, #tpu.memory_space<smem>>
    %230 = vector.broadcast %229 : f32 to vector<1x286xf32>
    %231 = arith.mulf %228, %230 : vector<1x286xf32>
    %232 = arith.addf %227, %231 : vector<1x286xf32>
    %233 = vector.extract_strided_slice %201 {offsets = [0, 0], sizes = [1, 286], strides = [1, 1]} : vector<4x286xf32> to vector<1x286xf32>
    %c6_362 = arith.constant 6 : index
    %234 = memref.load %arg2[%c6_362] : memref<108xf32, #tpu.memory_space<smem>>
    %235 = vector.broadcast %234 : f32 to vector<1x286xf32>
    %236 = arith.mulf %233, %235 : vector<1x286xf32>
    %237 = arith.addf %232, %236 : vector<1x286xf32>
    %238 = vector.extract_strided_slice %202 {offsets = [0, 0], sizes = [1, 286], strides = [1, 1]} : vector<4x286xf32> to vector<1x286xf32>
    %c7_363 = arith.constant 7 : index
    %239 = memref.load %arg2[%c7_363] : memref<108xf32, #tpu.memory_space<smem>>
    %240 = vector.broadcast %239 : f32 to vector<1x286xf32>
    %241 = arith.mulf %238, %240 : vector<1x286xf32>
    %242 = arith.addf %237, %241 : vector<1x286xf32>
    %243 = vector.extract_strided_slice %203 {offsets = [0, 0], sizes = [1, 286], strides = [1, 1]} : vector<4x286xf32> to vector<1x286xf32>
    %c8_364 = arith.constant 8 : index
    %244 = memref.load %arg2[%c8_364] : memref<108xf32, #tpu.memory_space<smem>>
    %245 = vector.broadcast %244 : f32 to vector<1x286xf32>
    %246 = arith.mulf %243, %245 : vector<1x286xf32>
    %247 = arith.addf %242, %246 : vector<1x286xf32>
    %c0_365 = arith.constant 0 : index
    %248 = memref.load %arg3[%c0_365] : memref<12xf32, #tpu.memory_space<smem>>
    %249 = vector.broadcast %248 : f32 to vector<1x286xf32>
    %250 = arith.addf %247, %249 : vector<1x286xf32>
    %c0_366 = arith.constant 0 : index
    %c0_367 = arith.constant 0 : index
    %251 = vector.load %arg6[%c0_366, %c0_367] : memref<12x286xf32, #tpu.memory_space<vmem>>, vector<1x286xf32>
    tpu.vector_store %arg6[%c0_366, %c0_367], %250 {strides = array<i32>} : memref<12x286xf32, #tpu.memory_space<vmem>>, vector<1x286xf32>,
    %252 = vector.extract_strided_slice %195 {offsets = [0, 0], sizes = [1, 286], strides = [1, 1]} : vector<4x286xf32> to vector<1x286xf32>
    %c9_368 = arith.constant 9 : index
    %253 = memref.load %arg2[%c9_368] : memref<108xf32, #tpu.memory_space<smem>>
    %254 = vector.broadcast %253 : f32 to vector<1x286xf32>
    %255 = arith.mulf %252, %254 : vector<1x286xf32>
    %256 = vector.extract_strided_slice %196 {offsets = [0, 0], sizes = [1, 286], strides = [1, 1]} : vector<4x286xf32> to vector<1x286xf32>
    %c10_369 = arith.constant 10 : index
    %257 = memref.load %arg2[%c10_369] : memref<108xf32, #tpu.memory_space<smem>>
    %258 = vector.broadcast %257 : f32 to vector<1x286xf32>
    %259 = arith.mulf %256, %258 : vector<1x286xf32>
    %260 = arith.addf %255, %259 : vector<1x286xf32>
    %261 = vector.extract_strided_slice %197 {offsets = [0, 0], sizes = [1, 286], strides = [1, 1]} : vector<4x286xf32> to vector<1x286xf32>
    %c11_370 = arith.constant 11 : index
    %262 = memref.load %arg2[%c11_370] : memref<108xf32, #tpu.memory_space<smem>>
    %263 = vector.broadcast %262 : f32 to vector<1x286xf32>
    %264 = arith.mulf %261, %263 : vector<1x286xf32>
    %265 = arith.addf %260, %264 : vector<1x286xf32>
    %266 = vector.extract_strided_slice %198 {offsets = [0, 0], sizes = [1, 286], strides = [1, 1]} : vector<4x286xf32> to vector<1x286xf32>
    %c12_371 = arith.constant 12 : index
    %267 = memref.load %arg2[%c12_371] : memref<108xf32, #tpu.memory_space<smem>>
    %268 = vector.broadcast %267 : f32 to vector<1x286xf32>
    %269 = arith.mulf %266, %268 : vector<1x286xf32>
    %270 = arith.addf %265, %269 : vector<1x286xf32>
    %271 = vector.extract_strided_slice %199 {offsets = [0, 0], sizes = [1, 286], strides = [1, 1]} : vector<4x286xf32> to vector<1x286xf32>
    %c13_372 = arith.constant 13 : index
    %272 = memref.load %arg2[%c13_372] : memref<108xf32, #tpu.memory_space<smem>>
    %273 = vector.broadcast %272 : f32 to vector<1x286xf32>
    %274 = arith.mulf %271, %273 : vector<1x286xf32>
    %275 = arith.addf %270, %274 : vector<1x286xf32>
    %276 = vector.extract_strided_slice %200 {offsets = [0, 0], sizes = [1, 286], strides = [1, 1]} : vector<4x286xf32> to vector<1x286xf32>
    %c14_373 = arith.constant 14 : index
    %277 = memref.load %arg2[%c14_373] : memref<108xf32, #tpu.memory_space<smem>>
    %278 = vector.broadcast %277 : f32 to vector<1x286xf32>
    %279 = arith.mulf %276, %278 : vector<1x286xf32>
    %280 = arith.addf %275, %279 : vector<1x286xf32>
    %281 = vector.extract_strided_slice %201 {offsets = [0, 0], sizes = [1, 286], strides = [1, 1]} : vector<4x286xf32> to vector<1x286xf32>
    %c15_374 = arith.constant 15 : index
    %282 = memref.load %arg2[%c15_374] : memref<108xf32, #tpu.memory_space<smem>>
    %283 = vector.broadcast %282 : f32 to vector<1x286xf32>
    %284 = arith.mulf %281, %283 : vector<1x286xf32>
    %285 = arith.addf %280, %284 : vector<1x286xf32>
    %286 = vector.extract_strided_slice %202 {offsets = [0, 0], sizes = [1, 286], strides = [1, 1]} : vector<4x286xf32> to vector<1x286xf32>
    %c16 = arith.constant 16 : index
    %287 = memref.load %arg2[%c16] : memref<108xf32, #tpu.memory_space<smem>>
    %288 = vector.broadcast %287 : f32 to vector<1x286xf32>
    %289 = arith.mulf %286, %288 : vector<1x286xf32>
    %290 = arith.addf %285, %289 : vector<1x286xf32>
    %291 = vector.extract_strided_slice %203 {offsets = [0, 0], sizes = [1, 286], strides = [1, 1]} : vector<4x286xf32> to vector<1x286xf32>
    %c17 = arith.constant 17 : index
    %292 = memref.load %arg2[%c17] : memref<108xf32, #tpu.memory_space<smem>>
    %293 = vector.broadcast %292 : f32 to vector<1x286xf32>
    %294 = arith.mulf %291, %293 : vector<1x286xf32>
    %295 = arith.addf %290, %294 : vector<1x286xf32>
    %c1_375 = arith.constant 1 : index
    %296 = memref.load %arg3[%c1_375] : memref<12xf32, #tpu.memory_space<smem>>
    %297 = vector.broadcast %296 : f32 to vector<1x286xf32>
    %298 = arith.addf %295, %297 : vector<1x286xf32>
    %c1_376 = arith.constant 1 : index
    %c0_377 = arith.constant 0 : index
    %299 = vector.load %arg6[%c1_376, %c0_377] : memref<12x286xf32, #tpu.memory_space<vmem>>, vector<1x286xf32>
    tpu.vector_store %arg6[%c1_376, %c0_377], %298 {strides = array<i32>} : memref<12x286xf32, #tpu.memory_space<vmem>>, vector<1x286xf32>,
    %300 = vector.extract_strided_slice %195 {offsets = [0, 0], sizes = [1, 286], strides = [1, 1]} : vector<4x286xf32> to vector<1x286xf32>
    %c18 = arith.constant 18 : index
    %301 = memref.load %arg2[%c18] : memref<108xf32, #tpu.memory_space<smem>>
    %302 = vector.broadcast %301 : f32 to vector<1x286xf32>
    %303 = arith.mulf %300, %302 : vector<1x286xf32>
    %304 = vector.extract_strided_slice %196 {offsets = [0, 0], sizes = [1, 286], strides = [1, 1]} : vector<4x286xf32> to vector<1x286xf32>
    %c19_378 = arith.constant 19 : index
    %305 = memref.load %arg2[%c19_378] : memref<108xf32, #tpu.memory_space<smem>>
    %306 = vector.broadcast %305 : f32 to vector<1x286xf32>
    %307 = arith.mulf %304, %306 : vector<1x286xf32>
    %308 = arith.addf %303, %307 : vector<1x286xf32>
    %309 = vector.extract_strided_slice %197 {offsets = [0, 0], sizes = [1, 286], strides = [1, 1]} : vector<4x286xf32> to vector<1x286xf32>
    %c20 = arith.constant 20 : index
    %310 = memref.load %arg2[%c20] : memref<108xf32, #tpu.memory_space<smem>>
    %311 = vector.broadcast %310 : f32 to vector<1x286xf32>
    %312 = arith.mulf %309, %311 : vector<1x286xf32>
    %313 = arith.addf %308, %312 : vector<1x286xf32>
    %314 = vector.extract_strided_slice %198 {offsets = [0, 0], sizes = [1, 286], strides = [1, 1]} : vector<4x286xf32> to vector<1x286xf32>
    %c21 = arith.constant 21 : index
    %315 = memref.load %arg2[%c21] : memref<108xf32, #tpu.memory_space<smem>>
    %316 = vector.broadcast %315 : f32 to vector<1x286xf32>
    %317 = arith.mulf %314, %316 : vector<1x286xf32>
    %318 = arith.addf %313, %317 : vector<1x286xf32>
    %319 = vector.extract_strided_slice %199 {offsets = [0, 0], sizes = [1, 286], strides = [1, 1]} : vector<4x286xf32> to vector<1x286xf32>
    %c22 = arith.constant 22 : index
    %320 = memref.load %arg2[%c22] : memref<108xf32, #tpu.memory_space<smem>>
    %321 = vector.broadcast %320 : f32 to vector<1x286xf32>
    %322 = arith.mulf %319, %321 : vector<1x286xf32>
    %323 = arith.addf %318, %322 : vector<1x286xf32>
    %324 = vector.extract_strided_slice %200 {offsets = [0, 0], sizes = [1, 286], strides = [1, 1]} : vector<4x286xf32> to vector<1x286xf32>
    %c23 = arith.constant 23 : index
    %325 = memref.load %arg2[%c23] : memref<108xf32, #tpu.memory_space<smem>>
    %326 = vector.broadcast %325 : f32 to vector<1x286xf32>
    %327 = arith.mulf %324, %326 : vector<1x286xf32>
    %328 = arith.addf %323, %327 : vector<1x286xf32>
    %329 = vector.extract_strided_slice %201 {offsets = [0, 0], sizes = [1, 286], strides = [1, 1]} : vector<4x286xf32> to vector<1x286xf32>
    %c24 = arith.constant 24 : index
    %330 = memref.load %arg2[%c24] : memref<108xf32, #tpu.memory_space<smem>>
    %331 = vector.broadcast %330 : f32 to vector<1x286xf32>
    %332 = arith.mulf %329, %331 : vector<1x286xf32>
    %333 = arith.addf %328, %332 : vector<1x286xf32>
    %334 = vector.extract_strided_slice %202 {offsets = [0, 0], sizes = [1, 286], strides = [1, 1]} : vector<4x286xf32> to vector<1x286xf32>
    %c25 = arith.constant 25 : index
    %335 = memref.load %arg2[%c25] : memref<108xf32, #tpu.memory_space<smem>>
    %336 = vector.broadcast %335 : f32 to vector<1x286xf32>
    %337 = arith.mulf %334, %336 : vector<1x286xf32>
    %338 = arith.addf %333, %337 : vector<1x286xf32>
    %339 = vector.extract_strided_slice %203 {offsets = [0, 0], sizes = [1, 286], strides = [1, 1]} : vector<4x286xf32> to vector<1x286xf32>
    %c26 = arith.constant 26 : index
    %340 = memref.load %arg2[%c26] : memref<108xf32, #tpu.memory_space<smem>>
    %341 = vector.broadcast %340 : f32 to vector<1x286xf32>
    %342 = arith.mulf %339, %341 : vector<1x286xf32>
    %343 = arith.addf %338, %342 : vector<1x286xf32>
    %c2_379 = arith.constant 2 : index
    %344 = memref.load %arg3[%c2_379] : memref<12xf32, #tpu.memory_space<smem>>
    %345 = vector.broadcast %344 : f32 to vector<1x286xf32>
    %346 = arith.addf %343, %345 : vector<1x286xf32>
    %c2_380 = arith.constant 2 : index
    %c0_381 = arith.constant 0 : index
    %347 = vector.load %arg6[%c2_380, %c0_381] : memref<12x286xf32, #tpu.memory_space<vmem>>, vector<1x286xf32>
    tpu.vector_store %arg6[%c2_380, %c0_381], %346 {strides = array<i32>} : memref<12x286xf32, #tpu.memory_space<vmem>>, vector<1x286xf32>,
    %348 = vector.extract_strided_slice %195 {offsets = [1, 0], sizes = [1, 286], strides = [1, 1]} : vector<4x286xf32> to vector<1x286xf32>
    %c27 = arith.constant 27 : index
    %349 = memref.load %arg2[%c27] : memref<108xf32, #tpu.memory_space<smem>>
    %350 = vector.broadcast %349 : f32 to vector<1x286xf32>
    %351 = arith.mulf %348, %350 : vector<1x286xf32>
    %352 = vector.extract_strided_slice %196 {offsets = [1, 0], sizes = [1, 286], strides = [1, 1]} : vector<4x286xf32> to vector<1x286xf32>
    %c28 = arith.constant 28 : index
    %353 = memref.load %arg2[%c28] : memref<108xf32, #tpu.memory_space<smem>>
    %354 = vector.broadcast %353 : f32 to vector<1x286xf32>
    %355 = arith.mulf %352, %354 : vector<1x286xf32>
    %356 = arith.addf %351, %355 : vector<1x286xf32>
    %357 = vector.extract_strided_slice %197 {offsets = [1, 0], sizes = [1, 286], strides = [1, 1]} : vector<4x286xf32> to vector<1x286xf32>
    %c29 = arith.constant 29 : index
    %358 = memref.load %arg2[%c29] : memref<108xf32, #tpu.memory_space<smem>>
    %359 = vector.broadcast %358 : f32 to vector<1x286xf32>
    %360 = arith.mulf %357, %359 : vector<1x286xf32>
    %361 = arith.addf %356, %360 : vector<1x286xf32>
    %362 = vector.extract_strided_slice %198 {offsets = [1, 0], sizes = [1, 286], strides = [1, 1]} : vector<4x286xf32> to vector<1x286xf32>
    %c30 = arith.constant 30 : index
    %363 = memref.load %arg2[%c30] : memref<108xf32, #tpu.memory_space<smem>>
    %364 = vector.broadcast %363 : f32 to vector<1x286xf32>
    %365 = arith.mulf %362, %364 : vector<1x286xf32>
    %366 = arith.addf %361, %365 : vector<1x286xf32>
    %367 = vector.extract_strided_slice %199 {offsets = [1, 0], sizes = [1, 286], strides = [1, 1]} : vector<4x286xf32> to vector<1x286xf32>
    %c31 = arith.constant 31 : index
    %368 = memref.load %arg2[%c31] : memref<108xf32, #tpu.memory_space<smem>>
    %369 = vector.broadcast %368 : f32 to vector<1x286xf32>
    %370 = arith.mulf %367, %369 : vector<1x286xf32>
    %371 = arith.addf %366, %370 : vector<1x286xf32>
    %372 = vector.extract_strided_slice %200 {offsets = [1, 0], sizes = [1, 286], strides = [1, 1]} : vector<4x286xf32> to vector<1x286xf32>
    %c32 = arith.constant 32 : index
    %373 = memref.load %arg2[%c32] : memref<108xf32, #tpu.memory_space<smem>>
    %374 = vector.broadcast %373 : f32 to vector<1x286xf32>
    %375 = arith.mulf %372, %374 : vector<1x286xf32>
    %376 = arith.addf %371, %375 : vector<1x286xf32>
    %377 = vector.extract_strided_slice %201 {offsets = [1, 0], sizes = [1, 286], strides = [1, 1]} : vector<4x286xf32> to vector<1x286xf32>
    %c33 = arith.constant 33 : index
    %378 = memref.load %arg2[%c33] : memref<108xf32, #tpu.memory_space<smem>>
    %379 = vector.broadcast %378 : f32 to vector<1x286xf32>
    %380 = arith.mulf %377, %379 : vector<1x286xf32>
    %381 = arith.addf %376, %380 : vector<1x286xf32>
    %382 = vector.extract_strided_slice %202 {offsets = [1, 0], sizes = [1, 286], strides = [1, 1]} : vector<4x286xf32> to vector<1x286xf32>
    %c34 = arith.constant 34 : index
    %383 = memref.load %arg2[%c34] : memref<108xf32, #tpu.memory_space<smem>>
    %384 = vector.broadcast %383 : f32 to vector<1x286xf32>
    %385 = arith.mulf %382, %384 : vector<1x286xf32>
    %386 = arith.addf %381, %385 : vector<1x286xf32>
    %387 = vector.extract_strided_slice %203 {offsets = [1, 0], sizes = [1, 286], strides = [1, 1]} : vector<4x286xf32> to vector<1x286xf32>
    %c35 = arith.constant 35 : index
    %388 = memref.load %arg2[%c35] : memref<108xf32, #tpu.memory_space<smem>>
    %389 = vector.broadcast %388 : f32 to vector<1x286xf32>
    %390 = arith.mulf %387, %389 : vector<1x286xf32>
    %391 = arith.addf %386, %390 : vector<1x286xf32>
    %c3_382 = arith.constant 3 : index
    %392 = memref.load %arg3[%c3_382] : memref<12xf32, #tpu.memory_space<smem>>
    %393 = vector.broadcast %392 : f32 to vector<1x286xf32>
    %394 = arith.addf %391, %393 : vector<1x286xf32>
    %c3_383 = arith.constant 3 : index
    %c0_384 = arith.constant 0 : index
    %395 = vector.load %arg6[%c3_383, %c0_384] : memref<12x286xf32, #tpu.memory_space<vmem>>, vector<1x286xf32>
    tpu.vector_store %arg6[%c3_383, %c0_384], %394 {strides = array<i32>} : memref<12x286xf32, #tpu.memory_space<vmem>>, vector<1x286xf32>,
    %396 = vector.extract_strided_slice %195 {offsets = [1, 0], sizes = [1, 286], strides = [1, 1]} : vector<4x286xf32> to vector<1x286xf32>
    %c36 = arith.constant 36 : index
    %397 = memref.load %arg2[%c36] : memref<108xf32, #tpu.memory_space<smem>>
    %398 = vector.broadcast %397 : f32 to vector<1x286xf32>
    %399 = arith.mulf %396, %398 : vector<1x286xf32>
    %400 = vector.extract_strided_slice %196 {offsets = [1, 0], sizes = [1, 286], strides = [1, 1]} : vector<4x286xf32> to vector<1x286xf32>
    %c37_385 = arith.constant 37 : index
    %401 = memref.load %arg2[%c37_385] : memref<108xf32, #tpu.memory_space<smem>>
    %402 = vector.broadcast %401 : f32 to vector<1x286xf32>
    %403 = arith.mulf %400, %402 : vector<1x286xf32>
    %404 = arith.addf %399, %403 : vector<1x286xf32>
    %405 = vector.extract_strided_slice %197 {offsets = [1, 0], sizes = [1, 286], strides = [1, 1]} : vector<4x286xf32> to vector<1x286xf32>
    %c38 = arith.constant 38 : index
    %406 = memref.load %arg2[%c38] : memref<108xf32, #tpu.memory_space<smem>>
    %407 = vector.broadcast %406 : f32 to vector<1x286xf32>
    %408 = arith.mulf %405, %407 : vector<1x286xf32>
    %409 = arith.addf %404, %408 : vector<1x286xf32>
    %410 = vector.extract_strided_slice %198 {offsets = [1, 0], sizes = [1, 286], strides = [1, 1]} : vector<4x286xf32> to vector<1x286xf32>
    %c39 = arith.constant 39 : index
    %411 = memref.load %arg2[%c39] : memref<108xf32, #tpu.memory_space<smem>>
    %412 = vector.broadcast %411 : f32 to vector<1x286xf32>
    %413 = arith.mulf %410, %412 : vector<1x286xf32>
    %414 = arith.addf %409, %413 : vector<1x286xf32>
    %415 = vector.extract_strided_slice %199 {offsets = [1, 0], sizes = [1, 286], strides = [1, 1]} : vector<4x286xf32> to vector<1x286xf32>
    %c40 = arith.constant 40 : index
    %416 = memref.load %arg2[%c40] : memref<108xf32, #tpu.memory_space<smem>>
    %417 = vector.broadcast %416 : f32 to vector<1x286xf32>
    %418 = arith.mulf %415, %417 : vector<1x286xf32>
    %419 = arith.addf %414, %418 : vector<1x286xf32>
    %420 = vector.extract_strided_slice %200 {offsets = [1, 0], sizes = [1, 286], strides = [1, 1]} : vector<4x286xf32> to vector<1x286xf32>
    %c41 = arith.constant 41 : index
    %421 = memref.load %arg2[%c41] : memref<108xf32, #tpu.memory_space<smem>>
    %422 = vector.broadcast %421 : f32 to vector<1x286xf32>
    %423 = arith.mulf %420, %422 : vector<1x286xf32>
    %424 = arith.addf %419, %423 : vector<1x286xf32>
    %425 = vector.extract_strided_slice %201 {offsets = [1, 0], sizes = [1, 286], strides = [1, 1]} : vector<4x286xf32> to vector<1x286xf32>
    %c42 = arith.constant 42 : index
    %426 = memref.load %arg2[%c42] : memref<108xf32, #tpu.memory_space<smem>>
    %427 = vector.broadcast %426 : f32 to vector<1x286xf32>
    %428 = arith.mulf %425, %427 : vector<1x286xf32>
    %429 = arith.addf %424, %428 : vector<1x286xf32>
    %430 = vector.extract_strided_slice %202 {offsets = [1, 0], sizes = [1, 286], strides = [1, 1]} : vector<4x286xf32> to vector<1x286xf32>
    %c43 = arith.constant 43 : index
    %431 = memref.load %arg2[%c43] : memref<108xf32, #tpu.memory_space<smem>>
    %432 = vector.broadcast %431 : f32 to vector<1x286xf32>
    %433 = arith.mulf %430, %432 : vector<1x286xf32>
    %434 = arith.addf %429, %433 : vector<1x286xf32>
    %435 = vector.extract_strided_slice %203 {offsets = [1, 0], sizes = [1, 286], strides = [1, 1]} : vector<4x286xf32> to vector<1x286xf32>
    %c44 = arith.constant 44 : index
    %436 = memref.load %arg2[%c44] : memref<108xf32, #tpu.memory_space<smem>>
    %437 = vector.broadcast %436 : f32 to vector<1x286xf32>
    %438 = arith.mulf %435, %437 : vector<1x286xf32>
    %439 = arith.addf %434, %438 : vector<1x286xf32>
    %c4_386 = arith.constant 4 : index
    %440 = memref.load %arg3[%c4_386] : memref<12xf32, #tpu.memory_space<smem>>
    %441 = vector.broadcast %440 : f32 to vector<1x286xf32>
    %442 = arith.addf %439, %441 : vector<1x286xf32>
    %c4_387 = arith.constant 4 : index
    %c0_388 = arith.constant 0 : index
    %443 = vector.load %arg6[%c4_387, %c0_388] : memref<12x286xf32, #tpu.memory_space<vmem>>, vector<1x286xf32>
    tpu.vector_store %arg6[%c4_387, %c0_388], %442 {strides = array<i32>} : memref<12x286xf32, #tpu.memory_space<vmem>>, vector<1x286xf32>,
    %444 = vector.extract_strided_slice %195 {offsets = [1, 0], sizes = [1, 286], strides = [1, 1]} : vector<4x286xf32> to vector<1x286xf32>
    %c45 = arith.constant 45 : index
    %445 = memref.load %arg2[%c45] : memref<108xf32, #tpu.memory_space<smem>>
    %446 = vector.broadcast %445 : f32 to vector<1x286xf32>
    %447 = arith.mulf %444, %446 : vector<1x286xf32>
    %448 = vector.extract_strided_slice %196 {offsets = [1, 0], sizes = [1, 286], strides = [1, 1]} : vector<4x286xf32> to vector<1x286xf32>
    %c46 = arith.constant 46 : index
    %449 = memref.load %arg2[%c46] : memref<108xf32, #tpu.memory_space<smem>>
    %450 = vector.broadcast %449 : f32 to vector<1x286xf32>
    %451 = arith.mulf %448, %450 : vector<1x286xf32>
    %452 = arith.addf %447, %451 : vector<1x286xf32>
    %453 = vector.extract_strided_slice %197 {offsets = [1, 0], sizes = [1, 286], strides = [1, 1]} : vector<4x286xf32> to vector<1x286xf32>
    %c47 = arith.constant 47 : index
    %454 = memref.load %arg2[%c47] : memref<108xf32, #tpu.memory_space<smem>>
    %455 = vector.broadcast %454 : f32 to vector<1x286xf32>
    %456 = arith.mulf %453, %455 : vector<1x286xf32>
    %457 = arith.addf %452, %456 : vector<1x286xf32>
    %458 = vector.extract_strided_slice %198 {offsets = [1, 0], sizes = [1, 286], strides = [1, 1]} : vector<4x286xf32> to vector<1x286xf32>
    %c48 = arith.constant 48 : index
    %459 = memref.load %arg2[%c48] : memref<108xf32, #tpu.memory_space<smem>>
    %460 = vector.broadcast %459 : f32 to vector<1x286xf32>
    %461 = arith.mulf %458, %460 : vector<1x286xf32>
    %462 = arith.addf %457, %461 : vector<1x286xf32>
    %463 = vector.extract_strided_slice %199 {offsets = [1, 0], sizes = [1, 286], strides = [1, 1]} : vector<4x286xf32> to vector<1x286xf32>
    %c49 = arith.constant 49 : index
    %464 = memref.load %arg2[%c49] : memref<108xf32, #tpu.memory_space<smem>>
    %465 = vector.broadcast %464 : f32 to vector<1x286xf32>
    %466 = arith.mulf %463, %465 : vector<1x286xf32>
    %467 = arith.addf %462, %466 : vector<1x286xf32>
    %468 = vector.extract_strided_slice %200 {offsets = [1, 0], sizes = [1, 286], strides = [1, 1]} : vector<4x286xf32> to vector<1x286xf32>
    %c50 = arith.constant 50 : index
    %469 = memref.load %arg2[%c50] : memref<108xf32, #tpu.memory_space<smem>>
    %470 = vector.broadcast %469 : f32 to vector<1x286xf32>
    %471 = arith.mulf %468, %470 : vector<1x286xf32>
    %472 = arith.addf %467, %471 : vector<1x286xf32>
    %473 = vector.extract_strided_slice %201 {offsets = [1, 0], sizes = [1, 286], strides = [1, 1]} : vector<4x286xf32> to vector<1x286xf32>
    %c51 = arith.constant 51 : index
    %474 = memref.load %arg2[%c51] : memref<108xf32, #tpu.memory_space<smem>>
    %475 = vector.broadcast %474 : f32 to vector<1x286xf32>
    %476 = arith.mulf %473, %475 : vector<1x286xf32>
    %477 = arith.addf %472, %476 : vector<1x286xf32>
    %478 = vector.extract_strided_slice %202 {offsets = [1, 0], sizes = [1, 286], strides = [1, 1]} : vector<4x286xf32> to vector<1x286xf32>
    %c52 = arith.constant 52 : index
    %479 = memref.load %arg2[%c52] : memref<108xf32, #tpu.memory_space<smem>>
    %480 = vector.broadcast %479 : f32 to vector<1x286xf32>
    %481 = arith.mulf %478, %480 : vector<1x286xf32>
    %482 = arith.addf %477, %481 : vector<1x286xf32>
    %483 = vector.extract_strided_slice %203 {offsets = [1, 0], sizes = [1, 286], strides = [1, 1]} : vector<4x286xf32> to vector<1x286xf32>
    %c53 = arith.constant 53 : index
    %484 = memref.load %arg2[%c53] : memref<108xf32, #tpu.memory_space<smem>>
    %485 = vector.broadcast %484 : f32 to vector<1x286xf32>
    %486 = arith.mulf %483, %485 : vector<1x286xf32>
    %487 = arith.addf %482, %486 : vector<1x286xf32>
    %c5_389 = arith.constant 5 : index
    %488 = memref.load %arg3[%c5_389] : memref<12xf32, #tpu.memory_space<smem>>
    %489 = vector.broadcast %488 : f32 to vector<1x286xf32>
    %490 = arith.addf %487, %489 : vector<1x286xf32>
    %c5_390 = arith.constant 5 : index
    %c0_391 = arith.constant 0 : index
    %491 = vector.load %arg6[%c5_390, %c0_391] : memref<12x286xf32, #tpu.memory_space<vmem>>, vector<1x286xf32>
    tpu.vector_store %arg6[%c5_390, %c0_391], %490 {strides = array<i32>} : memref<12x286xf32, #tpu.memory_space<vmem>>, vector<1x286xf32>,
    %492 = vector.extract_strided_slice %195 {offsets = [2, 0], sizes = [1, 286], strides = [1, 1]} : vector<4x286xf32> to vector<1x286xf32>
    %c54 = arith.constant 54 : index
    %493 = memref.load %arg2[%c54] : memref<108xf32, #tpu.memory_space<smem>>
    %494 = vector.broadcast %493 : f32 to vector<1x286xf32>
    %495 = arith.mulf %492, %494 : vector<1x286xf32>
    %496 = vector.extract_strided_slice %196 {offsets = [2, 0], sizes = [1, 286], strides = [1, 1]} : vector<4x286xf32> to vector<1x286xf32>
    %c55_392 = arith.constant 55 : index
    %497 = memref.load %arg2[%c55_392] : memref<108xf32, #tpu.memory_space<smem>>
    %498 = vector.broadcast %497 : f32 to vector<1x286xf32>
    %499 = arith.mulf %496, %498 : vector<1x286xf32>
    %500 = arith.addf %495, %499 : vector<1x286xf32>
    %501 = vector.extract_strided_slice %197 {offsets = [2, 0], sizes = [1, 286], strides = [1, 1]} : vector<4x286xf32> to vector<1x286xf32>
    %c56 = arith.constant 56 : index
    %502 = memref.load %arg2[%c56] : memref<108xf32, #tpu.memory_space<smem>>
    %503 = vector.broadcast %502 : f32 to vector<1x286xf32>
    %504 = arith.mulf %501, %503 : vector<1x286xf32>
    %505 = arith.addf %500, %504 : vector<1x286xf32>
    %506 = vector.extract_strided_slice %198 {offsets = [2, 0], sizes = [1, 286], strides = [1, 1]} : vector<4x286xf32> to vector<1x286xf32>
    %c57 = arith.constant 57 : index
    %507 = memref.load %arg2[%c57] : memref<108xf32, #tpu.memory_space<smem>>
    %508 = vector.broadcast %507 : f32 to vector<1x286xf32>
    %509 = arith.mulf %506, %508 : vector<1x286xf32>
    %510 = arith.addf %505, %509 : vector<1x286xf32>
    %511 = vector.extract_strided_slice %199 {offsets = [2, 0], sizes = [1, 286], strides = [1, 1]} : vector<4x286xf32> to vector<1x286xf32>
    %c58 = arith.constant 58 : index
    %512 = memref.load %arg2[%c58] : memref<108xf32, #tpu.memory_space<smem>>
    %513 = vector.broadcast %512 : f32 to vector<1x286xf32>
    %514 = arith.mulf %511, %513 : vector<1x286xf32>
    %515 = arith.addf %510, %514 : vector<1x286xf32>
    %516 = vector.extract_strided_slice %200 {offsets = [2, 0], sizes = [1, 286], strides = [1, 1]} : vector<4x286xf32> to vector<1x286xf32>
    %c59 = arith.constant 59 : index
    %517 = memref.load %arg2[%c59] : memref<108xf32, #tpu.memory_space<smem>>
    %518 = vector.broadcast %517 : f32 to vector<1x286xf32>
    %519 = arith.mulf %516, %518 : vector<1x286xf32>
    %520 = arith.addf %515, %519 : vector<1x286xf32>
    %521 = vector.extract_strided_slice %201 {offsets = [2, 0], sizes = [1, 286], strides = [1, 1]} : vector<4x286xf32> to vector<1x286xf32>
    %c60 = arith.constant 60 : index
    %522 = memref.load %arg2[%c60] : memref<108xf32, #tpu.memory_space<smem>>
    %523 = vector.broadcast %522 : f32 to vector<1x286xf32>
    %524 = arith.mulf %521, %523 : vector<1x286xf32>
    %525 = arith.addf %520, %524 : vector<1x286xf32>
    %526 = vector.extract_strided_slice %202 {offsets = [2, 0], sizes = [1, 286], strides = [1, 1]} : vector<4x286xf32> to vector<1x286xf32>
    %c61 = arith.constant 61 : index
    %527 = memref.load %arg2[%c61] : memref<108xf32, #tpu.memory_space<smem>>
    %528 = vector.broadcast %527 : f32 to vector<1x286xf32>
    %529 = arith.mulf %526, %528 : vector<1x286xf32>
    %530 = arith.addf %525, %529 : vector<1x286xf32>
    %531 = vector.extract_strided_slice %203 {offsets = [2, 0], sizes = [1, 286], strides = [1, 1]} : vector<4x286xf32> to vector<1x286xf32>
    %c62 = arith.constant 62 : index
    %532 = memref.load %arg2[%c62] : memref<108xf32, #tpu.memory_space<smem>>
    %533 = vector.broadcast %532 : f32 to vector<1x286xf32>
    %534 = arith.mulf %531, %533 : vector<1x286xf32>
    %535 = arith.addf %530, %534 : vector<1x286xf32>
    %c6_393 = arith.constant 6 : index
    %536 = memref.load %arg3[%c6_393] : memref<12xf32, #tpu.memory_space<smem>>
    %537 = vector.broadcast %536 : f32 to vector<1x286xf32>
    %538 = arith.addf %535, %537 : vector<1x286xf32>
    %c6_394 = arith.constant 6 : index
    %c0_395 = arith.constant 0 : index
    %539 = vector.load %arg6[%c6_394, %c0_395] : memref<12x286xf32, #tpu.memory_space<vmem>>, vector<1x286xf32>
    tpu.vector_store %arg6[%c6_394, %c0_395], %538 {strides = array<i32>} : memref<12x286xf32, #tpu.memory_space<vmem>>, vector<1x286xf32>,
    %540 = vector.extract_strided_slice %195 {offsets = [2, 0], sizes = [1, 286], strides = [1, 1]} : vector<4x286xf32> to vector<1x286xf32>
    %c63 = arith.constant 63 : index
    %541 = memref.load %arg2[%c63] : memref<108xf32, #tpu.memory_space<smem>>
    %542 = vector.broadcast %541 : f32 to vector<1x286xf32>
    %543 = arith.mulf %540, %542 : vector<1x286xf32>
    %544 = vector.extract_strided_slice %196 {offsets = [2, 0], sizes = [1, 286], strides = [1, 1]} : vector<4x286xf32> to vector<1x286xf32>
    %c64 = arith.constant 64 : index
    %545 = memref.load %arg2[%c64] : memref<108xf32, #tpu.memory_space<smem>>
    %546 = vector.broadcast %545 : f32 to vector<1x286xf32>
    %547 = arith.mulf %544, %546 : vector<1x286xf32>
    %548 = arith.addf %543, %547 : vector<1x286xf32>
    %549 = vector.extract_strided_slice %197 {offsets = [2, 0], sizes = [1, 286], strides = [1, 1]} : vector<4x286xf32> to vector<1x286xf32>
    %c65 = arith.constant 65 : index
    %550 = memref.load %arg2[%c65] : memref<108xf32, #tpu.memory_space<smem>>
    %551 = vector.broadcast %550 : f32 to vector<1x286xf32>
    %552 = arith.mulf %549, %551 : vector<1x286xf32>
    %553 = arith.addf %548, %552 : vector<1x286xf32>
    %554 = vector.extract_strided_slice %198 {offsets = [2, 0], sizes = [1, 286], strides = [1, 1]} : vector<4x286xf32> to vector<1x286xf32>
    %c66 = arith.constant 66 : index
    %555 = memref.load %arg2[%c66] : memref<108xf32, #tpu.memory_space<smem>>
    %556 = vector.broadcast %555 : f32 to vector<1x286xf32>
    %557 = arith.mulf %554, %556 : vector<1x286xf32>
    %558 = arith.addf %553, %557 : vector<1x286xf32>
    %559 = vector.extract_strided_slice %199 {offsets = [2, 0], sizes = [1, 286], strides = [1, 1]} : vector<4x286xf32> to vector<1x286xf32>
    %c67 = arith.constant 67 : index
    %560 = memref.load %arg2[%c67] : memref<108xf32, #tpu.memory_space<smem>>
    %561 = vector.broadcast %560 : f32 to vector<1x286xf32>
    %562 = arith.mulf %559, %561 : vector<1x286xf32>
    %563 = arith.addf %558, %562 : vector<1x286xf32>
    %564 = vector.extract_strided_slice %200 {offsets = [2, 0], sizes = [1, 286], strides = [1, 1]} : vector<4x286xf32> to vector<1x286xf32>
    %c68 = arith.constant 68 : index
    %565 = memref.load %arg2[%c68] : memref<108xf32, #tpu.memory_space<smem>>
    %566 = vector.broadcast %565 : f32 to vector<1x286xf32>
    %567 = arith.mulf %564, %566 : vector<1x286xf32>
    %568 = arith.addf %563, %567 : vector<1x286xf32>
    %569 = vector.extract_strided_slice %201 {offsets = [2, 0], sizes = [1, 286], strides = [1, 1]} : vector<4x286xf32> to vector<1x286xf32>
    %c69 = arith.constant 69 : index
    %570 = memref.load %arg2[%c69] : memref<108xf32, #tpu.memory_space<smem>>
    %571 = vector.broadcast %570 : f32 to vector<1x286xf32>
    %572 = arith.mulf %569, %571 : vector<1x286xf32>
    %573 = arith.addf %568, %572 : vector<1x286xf32>
    %574 = vector.extract_strided_slice %202 {offsets = [2, 0], sizes = [1, 286], strides = [1, 1]} : vector<4x286xf32> to vector<1x286xf32>
    %c70 = arith.constant 70 : index
    %575 = memref.load %arg2[%c70] : memref<108xf32, #tpu.memory_space<smem>>
    %576 = vector.broadcast %575 : f32 to vector<1x286xf32>
    %577 = arith.mulf %574, %576 : vector<1x286xf32>
    %578 = arith.addf %573, %577 : vector<1x286xf32>
    %579 = vector.extract_strided_slice %203 {offsets = [2, 0], sizes = [1, 286], strides = [1, 1]} : vector<4x286xf32> to vector<1x286xf32>
    %c71 = arith.constant 71 : index
    %580 = memref.load %arg2[%c71] : memref<108xf32, #tpu.memory_space<smem>>
    %581 = vector.broadcast %580 : f32 to vector<1x286xf32>
    %582 = arith.mulf %579, %581 : vector<1x286xf32>
    %583 = arith.addf %578, %582 : vector<1x286xf32>
    %c7_396 = arith.constant 7 : index
    %584 = memref.load %arg3[%c7_396] : memref<12xf32, #tpu.memory_space<smem>>
    %585 = vector.broadcast %584 : f32 to vector<1x286xf32>
    %586 = arith.addf %583, %585 : vector<1x286xf32>
    %c7_397 = arith.constant 7 : index
    %c0_398 = arith.constant 0 : index
    %587 = vector.load %arg6[%c7_397, %c0_398] : memref<12x286xf32, #tpu.memory_space<vmem>>, vector<1x286xf32>
    tpu.vector_store %arg6[%c7_397, %c0_398], %586 {strides = array<i32>} : memref<12x286xf32, #tpu.memory_space<vmem>>, vector<1x286xf32>,
    %588 = vector.extract_strided_slice %195 {offsets = [2, 0], sizes = [1, 286], strides = [1, 1]} : vector<4x286xf32> to vector<1x286xf32>
    %c72 = arith.constant 72 : index
    %589 = memref.load %arg2[%c72] : memref<108xf32, #tpu.memory_space<smem>>
    %590 = vector.broadcast %589 : f32 to vector<1x286xf32>
    %591 = arith.mulf %588, %590 : vector<1x286xf32>
    %592 = vector.extract_strided_slice %196 {offsets = [2, 0], sizes = [1, 286], strides = [1, 1]} : vector<4x286xf32> to vector<1x286xf32>
    %c73_399 = arith.constant 73 : index
    %593 = memref.load %arg2[%c73_399] : memref<108xf32, #tpu.memory_space<smem>>
    %594 = vector.broadcast %593 : f32 to vector<1x286xf32>
    %595 = arith.mulf %592, %594 : vector<1x286xf32>
    %596 = arith.addf %591, %595 : vector<1x286xf32>
    %597 = vector.extract_strided_slice %197 {offsets = [2, 0], sizes = [1, 286], strides = [1, 1]} : vector<4x286xf32> to vector<1x286xf32>
    %c74 = arith.constant 74 : index
    %598 = memref.load %arg2[%c74] : memref<108xf32, #tpu.memory_space<smem>>
    %599 = vector.broadcast %598 : f32 to vector<1x286xf32>
    %600 = arith.mulf %597, %599 : vector<1x286xf32>
    %601 = arith.addf %596, %600 : vector<1x286xf32>
    %602 = vector.extract_strided_slice %198 {offsets = [2, 0], sizes = [1, 286], strides = [1, 1]} : vector<4x286xf32> to vector<1x286xf32>
    %c75 = arith.constant 75 : index
    %603 = memref.load %arg2[%c75] : memref<108xf32, #tpu.memory_space<smem>>
    %604 = vector.broadcast %603 : f32 to vector<1x286xf32>
    %605 = arith.mulf %602, %604 : vector<1x286xf32>
    %606 = arith.addf %601, %605 : vector<1x286xf32>
    %607 = vector.extract_strided_slice %199 {offsets = [2, 0], sizes = [1, 286], strides = [1, 1]} : vector<4x286xf32> to vector<1x286xf32>
    %c76 = arith.constant 76 : index
    %608 = memref.load %arg2[%c76] : memref<108xf32, #tpu.memory_space<smem>>
    %609 = vector.broadcast %608 : f32 to vector<1x286xf32>
    %610 = arith.mulf %607, %609 : vector<1x286xf32>
    %611 = arith.addf %606, %610 : vector<1x286xf32>
    %612 = vector.extract_strided_slice %200 {offsets = [2, 0], sizes = [1, 286], strides = [1, 1]} : vector<4x286xf32> to vector<1x286xf32>
    %c77 = arith.constant 77 : index
    %613 = memref.load %arg2[%c77] : memref<108xf32, #tpu.memory_space<smem>>
    %614 = vector.broadcast %613 : f32 to vector<1x286xf32>
    %615 = arith.mulf %612, %614 : vector<1x286xf32>
    %616 = arith.addf %611, %615 : vector<1x286xf32>
    %617 = vector.extract_strided_slice %201 {offsets = [2, 0], sizes = [1, 286], strides = [1, 1]} : vector<4x286xf32> to vector<1x286xf32>
    %c78 = arith.constant 78 : index
    %618 = memref.load %arg2[%c78] : memref<108xf32, #tpu.memory_space<smem>>
    %619 = vector.broadcast %618 : f32 to vector<1x286xf32>
    %620 = arith.mulf %617, %619 : vector<1x286xf32>
    %621 = arith.addf %616, %620 : vector<1x286xf32>
    %622 = vector.extract_strided_slice %202 {offsets = [2, 0], sizes = [1, 286], strides = [1, 1]} : vector<4x286xf32> to vector<1x286xf32>
    %c79 = arith.constant 79 : index
    %623 = memref.load %arg2[%c79] : memref<108xf32, #tpu.memory_space<smem>>
    %624 = vector.broadcast %623 : f32 to vector<1x286xf32>
    %625 = arith.mulf %622, %624 : vector<1x286xf32>
    %626 = arith.addf %621, %625 : vector<1x286xf32>
    %627 = vector.extract_strided_slice %203 {offsets = [2, 0], sizes = [1, 286], strides = [1, 1]} : vector<4x286xf32> to vector<1x286xf32>
    %c80 = arith.constant 80 : index
    %628 = memref.load %arg2[%c80] : memref<108xf32, #tpu.memory_space<smem>>
    %629 = vector.broadcast %628 : f32 to vector<1x286xf32>
    %630 = arith.mulf %627, %629 : vector<1x286xf32>
    %631 = arith.addf %626, %630 : vector<1x286xf32>
    %c8_400 = arith.constant 8 : index
    %632 = memref.load %arg3[%c8_400] : memref<12xf32, #tpu.memory_space<smem>>
    %633 = vector.broadcast %632 : f32 to vector<1x286xf32>
    %634 = arith.addf %631, %633 : vector<1x286xf32>
    %c8_401 = arith.constant 8 : index
    %c0_402 = arith.constant 0 : index
    %635 = vector.load %arg6[%c8_401, %c0_402] : memref<12x286xf32, #tpu.memory_space<vmem>>, vector<1x286xf32>
    tpu.vector_store %arg6[%c8_401, %c0_402], %634 {strides = array<i32>} : memref<12x286xf32, #tpu.memory_space<vmem>>, vector<1x286xf32>,
    %636 = vector.extract_strided_slice %195 {offsets = [3, 0], sizes = [1, 286], strides = [1, 1]} : vector<4x286xf32> to vector<1x286xf32>
    %c81 = arith.constant 81 : index
    %637 = memref.load %arg2[%c81] : memref<108xf32, #tpu.memory_space<smem>>
    %638 = vector.broadcast %637 : f32 to vector<1x286xf32>
    %639 = arith.mulf %636, %638 : vector<1x286xf32>
    %640 = vector.extract_strided_slice %196 {offsets = [3, 0], sizes = [1, 286], strides = [1, 1]} : vector<4x286xf32> to vector<1x286xf32>
    %c82 = arith.constant 82 : index
    %641 = memref.load %arg2[%c82] : memref<108xf32, #tpu.memory_space<smem>>
    %642 = vector.broadcast %641 : f32 to vector<1x286xf32>
    %643 = arith.mulf %640, %642 : vector<1x286xf32>
    %644 = arith.addf %639, %643 : vector<1x286xf32>
    %645 = vector.extract_strided_slice %197 {offsets = [3, 0], sizes = [1, 286], strides = [1, 1]} : vector<4x286xf32> to vector<1x286xf32>
    %c83 = arith.constant 83 : index
    %646 = memref.load %arg2[%c83] : memref<108xf32, #tpu.memory_space<smem>>
    %647 = vector.broadcast %646 : f32 to vector<1x286xf32>
    %648 = arith.mulf %645, %647 : vector<1x286xf32>
    %649 = arith.addf %644, %648 : vector<1x286xf32>
    %650 = vector.extract_strided_slice %198 {offsets = [3, 0], sizes = [1, 286], strides = [1, 1]} : vector<4x286xf32> to vector<1x286xf32>
    %c84 = arith.constant 84 : index
    %651 = memref.load %arg2[%c84] : memref<108xf32, #tpu.memory_space<smem>>
    %652 = vector.broadcast %651 : f32 to vector<1x286xf32>
    %653 = arith.mulf %650, %652 : vector<1x286xf32>
    %654 = arith.addf %649, %653 : vector<1x286xf32>
    %655 = vector.extract_strided_slice %199 {offsets = [3, 0], sizes = [1, 286], strides = [1, 1]} : vector<4x286xf32> to vector<1x286xf32>
    %c85 = arith.constant 85 : index
    %656 = memref.load %arg2[%c85] : memref<108xf32, #tpu.memory_space<smem>>
    %657 = vector.broadcast %656 : f32 to vector<1x286xf32>
    %658 = arith.mulf %655, %657 : vector<1x286xf32>
    %659 = arith.addf %654, %658 : vector<1x286xf32>
    %660 = vector.extract_strided_slice %200 {offsets = [3, 0], sizes = [1, 286], strides = [1, 1]} : vector<4x286xf32> to vector<1x286xf32>
    %c86 = arith.constant 86 : index
    %661 = memref.load %arg2[%c86] : memref<108xf32, #tpu.memory_space<smem>>
    %662 = vector.broadcast %661 : f32 to vector<1x286xf32>
    %663 = arith.mulf %660, %662 : vector<1x286xf32>
    %664 = arith.addf %659, %663 : vector<1x286xf32>
    %665 = vector.extract_strided_slice %201 {offsets = [3, 0], sizes = [1, 286], strides = [1, 1]} : vector<4x286xf32> to vector<1x286xf32>
    %c87 = arith.constant 87 : index
    %666 = memref.load %arg2[%c87] : memref<108xf32, #tpu.memory_space<smem>>
    %667 = vector.broadcast %666 : f32 to vector<1x286xf32>
    %668 = arith.mulf %665, %667 : vector<1x286xf32>
    %669 = arith.addf %664, %668 : vector<1x286xf32>
    %670 = vector.extract_strided_slice %202 {offsets = [3, 0], sizes = [1, 286], strides = [1, 1]} : vector<4x286xf32> to vector<1x286xf32>
    %c88 = arith.constant 88 : index
    %671 = memref.load %arg2[%c88] : memref<108xf32, #tpu.memory_space<smem>>
    %672 = vector.broadcast %671 : f32 to vector<1x286xf32>
    %673 = arith.mulf %670, %672 : vector<1x286xf32>
    %674 = arith.addf %669, %673 : vector<1x286xf32>
    %675 = vector.extract_strided_slice %203 {offsets = [3, 0], sizes = [1, 286], strides = [1, 1]} : vector<4x286xf32> to vector<1x286xf32>
    %c89 = arith.constant 89 : index
    %676 = memref.load %arg2[%c89] : memref<108xf32, #tpu.memory_space<smem>>
    %677 = vector.broadcast %676 : f32 to vector<1x286xf32>
    %678 = arith.mulf %675, %677 : vector<1x286xf32>
    %679 = arith.addf %674, %678 : vector<1x286xf32>
    %c9_403 = arith.constant 9 : index
    %680 = memref.load %arg3[%c9_403] : memref<12xf32, #tpu.memory_space<smem>>
    %681 = vector.broadcast %680 : f32 to vector<1x286xf32>
    %682 = arith.addf %679, %681 : vector<1x286xf32>
    %c9_404 = arith.constant 9 : index
    %c0_405 = arith.constant 0 : index
    %683 = vector.load %arg6[%c9_404, %c0_405] : memref<12x286xf32, #tpu.memory_space<vmem>>, vector<1x286xf32>
    tpu.vector_store %arg6[%c9_404, %c0_405], %682 {strides = array<i32>} : memref<12x286xf32, #tpu.memory_space<vmem>>, vector<1x286xf32>,
    %684 = vector.extract_strided_slice %195 {offsets = [3, 0], sizes = [1, 286], strides = [1, 1]} : vector<4x286xf32> to vector<1x286xf32>
    %c90 = arith.constant 90 : index
    %685 = memref.load %arg2[%c90] : memref<108xf32, #tpu.memory_space<smem>>
    %686 = vector.broadcast %685 : f32 to vector<1x286xf32>
    %687 = arith.mulf %684, %686 : vector<1x286xf32>
    %688 = vector.extract_strided_slice %196 {offsets = [3, 0], sizes = [1, 286], strides = [1, 1]} : vector<4x286xf32> to vector<1x286xf32>
    %c91_406 = arith.constant 91 : index
    %689 = memref.load %arg2[%c91_406] : memref<108xf32, #tpu.memory_space<smem>>
    %690 = vector.broadcast %689 : f32 to vector<1x286xf32>
    %691 = arith.mulf %688, %690 : vector<1x286xf32>
    %692 = arith.addf %687, %691 : vector<1x286xf32>
    %693 = vector.extract_strided_slice %197 {offsets = [3, 0], sizes = [1, 286], strides = [1, 1]} : vector<4x286xf32> to vector<1x286xf32>
    %c92 = arith.constant 92 : index
    %694 = memref.load %arg2[%c92] : memref<108xf32, #tpu.memory_space<smem>>
    %695 = vector.broadcast %694 : f32 to vector<1x286xf32>
    %696 = arith.mulf %693, %695 : vector<1x286xf32>
    %697 = arith.addf %692, %696 : vector<1x286xf32>
    %698 = vector.extract_strided_slice %198 {offsets = [3, 0], sizes = [1, 286], strides = [1, 1]} : vector<4x286xf32> to vector<1x286xf32>
    %c93 = arith.constant 93 : index
    %699 = memref.load %arg2[%c93] : memref<108xf32, #tpu.memory_space<smem>>
    %700 = vector.broadcast %699 : f32 to vector<1x286xf32>
    %701 = arith.mulf %698, %700 : vector<1x286xf32>
    %702 = arith.addf %697, %701 : vector<1x286xf32>
    %703 = vector.extract_strided_slice %199 {offsets = [3, 0], sizes = [1, 286], strides = [1, 1]} : vector<4x286xf32> to vector<1x286xf32>
    %c94 = arith.constant 94 : index
    %704 = memref.load %arg2[%c94] : memref<108xf32, #tpu.memory_space<smem>>
    %705 = vector.broadcast %704 : f32 to vector<1x286xf32>
    %706 = arith.mulf %703, %705 : vector<1x286xf32>
    %707 = arith.addf %702, %706 : vector<1x286xf32>
    %708 = vector.extract_strided_slice %200 {offsets = [3, 0], sizes = [1, 286], strides = [1, 1]} : vector<4x286xf32> to vector<1x286xf32>
    %c95 = arith.constant 95 : index
    %709 = memref.load %arg2[%c95] : memref<108xf32, #tpu.memory_space<smem>>
    %710 = vector.broadcast %709 : f32 to vector<1x286xf32>
    %711 = arith.mulf %708, %710 : vector<1x286xf32>
    %712 = arith.addf %707, %711 : vector<1x286xf32>
    %713 = vector.extract_strided_slice %201 {offsets = [3, 0], sizes = [1, 286], strides = [1, 1]} : vector<4x286xf32> to vector<1x286xf32>
    %c96 = arith.constant 96 : index
    %714 = memref.load %arg2[%c96] : memref<108xf32, #tpu.memory_space<smem>>
    %715 = vector.broadcast %714 : f32 to vector<1x286xf32>
    %716 = arith.mulf %713, %715 : vector<1x286xf32>
    %717 = arith.addf %712, %716 : vector<1x286xf32>
    %718 = vector.extract_strided_slice %202 {offsets = [3, 0], sizes = [1, 286], strides = [1, 1]} : vector<4x286xf32> to vector<1x286xf32>
    %c97 = arith.constant 97 : index
    %719 = memref.load %arg2[%c97] : memref<108xf32, #tpu.memory_space<smem>>
    %720 = vector.broadcast %719 : f32 to vector<1x286xf32>
    %721 = arith.mulf %718, %720 : vector<1x286xf32>
    %722 = arith.addf %717, %721 : vector<1x286xf32>
    %723 = vector.extract_strided_slice %203 {offsets = [3, 0], sizes = [1, 286], strides = [1, 1]} : vector<4x286xf32> to vector<1x286xf32>
    %c98 = arith.constant 98 : index
    %724 = memref.load %arg2[%c98] : memref<108xf32, #tpu.memory_space<smem>>
    %725 = vector.broadcast %724 : f32 to vector<1x286xf32>
    %726 = arith.mulf %723, %725 : vector<1x286xf32>
    %727 = arith.addf %722, %726 : vector<1x286xf32>
    %c10_407 = arith.constant 10 : index
    %728 = memref.load %arg3[%c10_407] : memref<12xf32, #tpu.memory_space<smem>>
    %729 = vector.broadcast %728 : f32 to vector<1x286xf32>
    %730 = arith.addf %727, %729 : vector<1x286xf32>
    %c10_408 = arith.constant 10 : index
    %c0_409 = arith.constant 0 : index
    %731 = vector.load %arg6[%c10_408, %c0_409] : memref<12x286xf32, #tpu.memory_space<vmem>>, vector<1x286xf32>
    tpu.vector_store %arg6[%c10_408, %c0_409], %730 {strides = array<i32>} : memref<12x286xf32, #tpu.memory_space<vmem>>, vector<1x286xf32>,
    %732 = vector.extract_strided_slice %195 {offsets = [3, 0], sizes = [1, 286], strides = [1, 1]} : vector<4x286xf32> to vector<1x286xf32>
    %c99 = arith.constant 99 : index
    %733 = memref.load %arg2[%c99] : memref<108xf32, #tpu.memory_space<smem>>
    %734 = vector.broadcast %733 : f32 to vector<1x286xf32>
    %735 = arith.mulf %732, %734 : vector<1x286xf32>
    %736 = vector.extract_strided_slice %196 {offsets = [3, 0], sizes = [1, 286], strides = [1, 1]} : vector<4x286xf32> to vector<1x286xf32>
    %c100 = arith.constant 100 : index
    %737 = memref.load %arg2[%c100] : memref<108xf32, #tpu.memory_space<smem>>
    %738 = vector.broadcast %737 : f32 to vector<1x286xf32>
    %739 = arith.mulf %736, %738 : vector<1x286xf32>
    %740 = arith.addf %735, %739 : vector<1x286xf32>
    %741 = vector.extract_strided_slice %197 {offsets = [3, 0], sizes = [1, 286], strides = [1, 1]} : vector<4x286xf32> to vector<1x286xf32>
    %c101 = arith.constant 101 : index
    %742 = memref.load %arg2[%c101] : memref<108xf32, #tpu.memory_space<smem>>
    %743 = vector.broadcast %742 : f32 to vector<1x286xf32>
    %744 = arith.mulf %741, %743 : vector<1x286xf32>
    %745 = arith.addf %740, %744 : vector<1x286xf32>
    %746 = vector.extract_strided_slice %198 {offsets = [3, 0], sizes = [1, 286], strides = [1, 1]} : vector<4x286xf32> to vector<1x286xf32>
    %c102 = arith.constant 102 : index
    %747 = memref.load %arg2[%c102] : memref<108xf32, #tpu.memory_space<smem>>
    %748 = vector.broadcast %747 : f32 to vector<1x286xf32>
    %749 = arith.mulf %746, %748 : vector<1x286xf32>
    %750 = arith.addf %745, %749 : vector<1x286xf32>
    %751 = vector.extract_strided_slice %199 {offsets = [3, 0], sizes = [1, 286], strides = [1, 1]} : vector<4x286xf32> to vector<1x286xf32>
    %c103 = arith.constant 103 : index
    %752 = memref.load %arg2[%c103] : memref<108xf32, #tpu.memory_space<smem>>
    %753 = vector.broadcast %752 : f32 to vector<1x286xf32>
    %754 = arith.mulf %751, %753 : vector<1x286xf32>
    %755 = arith.addf %750, %754 : vector<1x286xf32>
    %756 = vector.extract_strided_slice %200 {offsets = [3, 0], sizes = [1, 286], strides = [1, 1]} : vector<4x286xf32> to vector<1x286xf32>
    %c104 = arith.constant 104 : index
    %757 = memref.load %arg2[%c104] : memref<108xf32, #tpu.memory_space<smem>>
    %758 = vector.broadcast %757 : f32 to vector<1x286xf32>
    %759 = arith.mulf %756, %758 : vector<1x286xf32>
    %760 = arith.addf %755, %759 : vector<1x286xf32>
    %761 = vector.extract_strided_slice %201 {offsets = [3, 0], sizes = [1, 286], strides = [1, 1]} : vector<4x286xf32> to vector<1x286xf32>
    %c105 = arith.constant 105 : index
    %762 = memref.load %arg2[%c105] : memref<108xf32, #tpu.memory_space<smem>>
    %763 = vector.broadcast %762 : f32 to vector<1x286xf32>
    %764 = arith.mulf %761, %763 : vector<1x286xf32>
    %765 = arith.addf %760, %764 : vector<1x286xf32>
    %766 = vector.extract_strided_slice %202 {offsets = [3, 0], sizes = [1, 286], strides = [1, 1]} : vector<4x286xf32> to vector<1x286xf32>
    %c106 = arith.constant 106 : index
    %767 = memref.load %arg2[%c106] : memref<108xf32, #tpu.memory_space<smem>>
    %768 = vector.broadcast %767 : f32 to vector<1x286xf32>
    %769 = arith.mulf %766, %768 : vector<1x286xf32>
    %770 = arith.addf %765, %769 : vector<1x286xf32>
    %771 = vector.extract_strided_slice %203 {offsets = [3, 0], sizes = [1, 286], strides = [1, 1]} : vector<4x286xf32> to vector<1x286xf32>
    %c107 = arith.constant 107 : index
    %772 = memref.load %arg2[%c107] : memref<108xf32, #tpu.memory_space<smem>>
    %773 = vector.broadcast %772 : f32 to vector<1x286xf32>
    %774 = arith.mulf %771, %773 : vector<1x286xf32>
    %775 = arith.addf %770, %774 : vector<1x286xf32>
    %c11_410 = arith.constant 11 : index
    %776 = memref.load %arg3[%c11_410] : memref<12xf32, #tpu.memory_space<smem>>
    %777 = vector.broadcast %776 : f32 to vector<1x286xf32>
    %778 = arith.addf %775, %777 : vector<1x286xf32>
    %c11_411 = arith.constant 11 : index
    %c0_412 = arith.constant 0 : index
    %779 = vector.load %arg6[%c11_411, %c0_412] : memref<12x286xf32, #tpu.memory_space<vmem>>, vector<1x286xf32>
    tpu.vector_store %arg6[%c11_411, %c0_412], %778 {strides = array<i32>} : memref<12x286xf32, #tpu.memory_space<vmem>>, vector<1x286xf32>,
    %cst_413 = arith.constant 0.000000e+00 : f32
    %780 = vector.broadcast %cst_413 : f32 to vector<12x2xf32>
    %c0_414 = arith.constant 0 : index
    %c16_415 = arith.constant 16 : index
    %781 = vector.load %arg6[%c0_414, %c16_415] : memref<12x286xf32, #tpu.memory_space<vmem>>, vector<12x2xf32>
    tpu.vector_store %arg6[%c0_414, %c16_415], %780 {strides = array<i32>} : memref<12x286xf32, #tpu.memory_space<vmem>>, vector<12x2xf32>,
    %cst_416 = arith.constant 0.000000e+00 : f32
    %782 = vector.broadcast %cst_416 : f32 to vector<12x2xf32>
    %c0_417 = arith.constant 0 : index
    %c34_418 = arith.constant 34 : index
    %783 = vector.load %arg6[%c0_417, %c34_418] : memref<12x286xf32, #tpu.memory_space<vmem>>, vector<12x2xf32>
    tpu.vector_store %arg6[%c0_417, %c34_418], %782 {strides = array<i32>} : memref<12x286xf32, #tpu.memory_space<vmem>>, vector<12x2xf32>,
    %cst_419 = arith.constant 0.000000e+00 : f32
    %784 = vector.broadcast %cst_419 : f32 to vector<12x2xf32>
    %c0_420 = arith.constant 0 : index
    %c52_421 = arith.constant 52 : index
    %785 = vector.load %arg6[%c0_420, %c52_421] : memref<12x286xf32, #tpu.memory_space<vmem>>, vector<12x2xf32>
    tpu.vector_store %arg6[%c0_420, %c52_421], %784 {strides = array<i32>} : memref<12x286xf32, #tpu.memory_space<vmem>>, vector<12x2xf32>,
    %cst_422 = arith.constant 0.000000e+00 : f32
    %786 = vector.broadcast %cst_422 : f32 to vector<12x2xf32>
    %c0_423 = arith.constant 0 : index
    %c70_424 = arith.constant 70 : index
    %787 = vector.load %arg6[%c0_423, %c70_424] : memref<12x286xf32, #tpu.memory_space<vmem>>, vector<12x2xf32>
    tpu.vector_store %arg6[%c0_423, %c70_424], %786 {strides = array<i32>} : memref<12x286xf32, #tpu.memory_space<vmem>>, vector<12x2xf32>,
    %cst_425 = arith.constant 0.000000e+00 : f32
    %788 = vector.broadcast %cst_425 : f32 to vector<12x2xf32>
    %c0_426 = arith.constant 0 : index
    %c88_427 = arith.constant 88 : index
    %789 = vector.load %arg6[%c0_426, %c88_427] : memref<12x286xf32, #tpu.memory_space<vmem>>, vector<12x2xf32>
    tpu.vector_store %arg6[%c0_426, %c88_427], %788 {strides = array<i32>} : memref<12x286xf32, #tpu.memory_space<vmem>>, vector<12x2xf32>,
    %cst_428 = arith.constant 0.000000e+00 : f32
    %790 = vector.broadcast %cst_428 : f32 to vector<12x2xf32>
    %c0_429 = arith.constant 0 : index
    %c106_430 = arith.constant 106 : index
    %791 = vector.load %arg6[%c0_429, %c106_430] : memref<12x286xf32, #tpu.memory_space<vmem>>, vector<12x2xf32>
    tpu.vector_store %arg6[%c0_429, %c106_430], %790 {strides = array<i32>} : memref<12x286xf32, #tpu.memory_space<vmem>>, vector<12x2xf32>,
    %cst_431 = arith.constant 0.000000e+00 : f32
    %792 = vector.broadcast %cst_431 : f32 to vector<12x2xf32>
    %c0_432 = arith.constant 0 : index
    %c124 = arith.constant 124 : index
    %793 = vector.load %arg6[%c0_432, %c124] : memref<12x286xf32, #tpu.memory_space<vmem>>, vector<12x2xf32>
    tpu.vector_store %arg6[%c0_432, %c124], %792 {strides = array<i32>} : memref<12x286xf32, #tpu.memory_space<vmem>>, vector<12x2xf32>,
    %cst_433 = arith.constant 0.000000e+00 : f32
    %794 = vector.broadcast %cst_433 : f32 to vector<12x2xf32>
    %c0_434 = arith.constant 0 : index
    %c142 = arith.constant 142 : index
    %795 = vector.load %arg6[%c0_434, %c142] : memref<12x286xf32, #tpu.memory_space<vmem>>, vector<12x2xf32>
    tpu.vector_store %arg6[%c0_434, %c142], %794 {strides = array<i32>} : memref<12x286xf32, #tpu.memory_space<vmem>>, vector<12x2xf32>,
    %cst_435 = arith.constant 0.000000e+00 : f32
    %796 = vector.broadcast %cst_435 : f32 to vector<12x2xf32>
    %c0_436 = arith.constant 0 : index
    %c160 = arith.constant 160 : index
    %797 = vector.load %arg6[%c0_436, %c160] : memref<12x286xf32, #tpu.memory_space<vmem>>, vector<12x2xf32>
    tpu.vector_store %arg6[%c0_436, %c160], %796 {strides = array<i32>} : memref<12x286xf32, #tpu.memory_space<vmem>>, vector<12x2xf32>,
    %cst_437 = arith.constant 0.000000e+00 : f32
    %798 = vector.broadcast %cst_437 : f32 to vector<12x2xf32>
    %c0_438 = arith.constant 0 : index
    %c178 = arith.constant 178 : index
    %799 = vector.load %arg6[%c0_438, %c178] : memref<12x286xf32, #tpu.memory_space<vmem>>, vector<12x2xf32>
    tpu.vector_store %arg6[%c0_438, %c178], %798 {strides = array<i32>} : memref<12x286xf32, #tpu.memory_space<vmem>>, vector<12x2xf32>,
    %cst_439 = arith.constant 0.000000e+00 : f32
    %800 = vector.broadcast %cst_439 : f32 to vector<12x2xf32>
    %c0_440 = arith.constant 0 : index
    %c196 = arith.constant 196 : index
    %801 = vector.load %arg6[%c0_440, %c196] : memref<12x286xf32, #tpu.memory_space<vmem>>, vector<12x2xf32>
    tpu.vector_store %arg6[%c0_440, %c196], %800 {strides = array<i32>} : memref<12x286xf32, #tpu.memory_space<vmem>>, vector<12x2xf32>,
    %cst_441 = arith.constant 0.000000e+00 : f32
    %802 = vector.broadcast %cst_441 : f32 to vector<12x2xf32>
    %c0_442 = arith.constant 0 : index
    %c214 = arith.constant 214 : index
    %803 = vector.load %arg6[%c0_442, %c214] : memref<12x286xf32, #tpu.memory_space<vmem>>, vector<12x2xf32>
    tpu.vector_store %arg6[%c0_442, %c214], %802 {strides = array<i32>} : memref<12x286xf32, #tpu.memory_space<vmem>>, vector<12x2xf32>,
    %cst_443 = arith.constant 0.000000e+00 : f32
    %804 = vector.broadcast %cst_443 : f32 to vector<12x2xf32>
    %c0_444 = arith.constant 0 : index
    %c232 = arith.constant 232 : index
    %805 = vector.load %arg6[%c0_444, %c232] : memref<12x286xf32, #tpu.memory_space<vmem>>, vector<12x2xf32>
    tpu.vector_store %arg6[%c0_444, %c232], %804 {strides = array<i32>} : memref<12x286xf32, #tpu.memory_space<vmem>>, vector<12x2xf32>,
    %cst_445 = arith.constant 0.000000e+00 : f32
    %806 = vector.broadcast %cst_445 : f32 to vector<12x2xf32>
    %c0_446 = arith.constant 0 : index
    %c250 = arith.constant 250 : index
    %807 = vector.load %arg6[%c0_446, %c250] : memref<12x286xf32, #tpu.memory_space<vmem>>, vector<12x2xf32>
    tpu.vector_store %arg6[%c0_446, %c250], %806 {strides = array<i32>} : memref<12x286xf32, #tpu.memory_space<vmem>>, vector<12x2xf32>,
    %cst_447 = arith.constant 0.000000e+00 : f32
    %808 = vector.broadcast %cst_447 : f32 to vector<12x2xf32>
    %c0_448 = arith.constant 0 : index
    %c268 = arith.constant 268 : index
    %809 = vector.load %arg6[%c0_448, %c268] : memref<12x286xf32, #tpu.memory_space<vmem>>, vector<12x2xf32>
    tpu.vector_store %arg6[%c0_448, %c268], %808 {strides = array<i32>} : memref<12x286xf32, #tpu.memory_space<vmem>>, vector<12x2xf32>,
    %c0_449 = arith.constant 0 : index
    %c0_450 = arith.constant 0 : index
    %810 = vector.load %arg6[%c0_449, %c0_450] : memref<12x286xf32, #tpu.memory_space<vmem>>, vector<12x286xf32>
    %cst_451 = arith.constant dense<0.000000e+00> : vector<12xf32>
    %811 = vector.multi_reduction <add>, %810, %cst_451 [1] : vector<12x286xf32> to vector<12xf32>
    %812 = vector.shape_cast %811 : vector<12xf32> to vector<12x1xf32>
    %c0_452 = arith.constant 0 : index
    %c0_453 = arith.constant 0 : index
    %c0_454 = arith.constant 0 : index
    %813 = vector.load %arg4[%c0_452, %c0_453, %c0_454] : memref<1x12x2xf32, #tpu.memory_space<vmem>>, vector<1x12x1xf32>
    %814 = vector.shape_cast %813 : vector<1x12x1xf32> to vector<12x1xf32>
    %815 = vector.shape_cast %812 : vector<12x1xf32> to vector<1x12x1xf32>
    tpu.vector_store %arg4[%c0_452, %c0_453, %c0_454], %815 {strides = array<i32>} : memref<1x12x2xf32, #tpu.memory_space<vmem>>, vector<1x12x1xf32>,
    %816 = arith.mulf %810, %810 : vector<12x286xf32>
    %cst_455 = arith.constant dense<0.000000e+00> : vector<12xf32>
    %817 = vector.multi_reduction <add>, %816, %cst_455 [1] : vector<12x286xf32> to vector<12xf32>
    %818 = vector.shape_cast %817 : vector<12xf32> to vector<12x1xf32>
    %c0_456 = arith.constant 0 : index
    %c0_457 = arith.constant 0 : index
    %c1_458 = arith.constant 1 : index
    %819 = vector.load %arg4[%c0_456, %c0_457, %c1_458] : memref<1x12x2xf32, #tpu.memory_space<vmem>>, vector<1x12x1xf32>
    %820 = vector.shape_cast %819 : vector<1x12x1xf32> to vector<12x1xf32>
    %821 = vector.shape_cast %818 : vector<12x1xf32> to vector<1x12x1xf32>
    tpu.vector_store %arg4[%c0_456, %c0_457, %c1_458], %821 {strides = array<i32>} : memref<1x12x2xf32, #tpu.memory_space<vmem>>, vector<1x12x1xf32>,
    return
  }
  func.func @transform_0(%arg0: i32) -> (i32, i32, i32, i32) {
    %c0_i32 = arith.constant 0 : i32
    %c0_i32_0 = arith.constant 0 : i32
    %c0_i32_1 = arith.constant 0 : i32
    %c0_i32_2 = arith.constant 0 : i32
    return %arg0, %c0_i32, %c0_i32_0, %c0_i32_1 : i32, i32, i32, i32
  }
  func.func @transform_1(%arg0: i32) -> i32 {
    %c0_i32 = arith.constant 0 : i32
    %c0_i32_0 = arith.constant 0 : i32
    return %c0_i32 : i32
  }
  func.func @transform_2(%arg0: i32) -> i32 {
    %c0_i32 = arith.constant 0 : i32
    %c0_i32_0 = arith.constant 0 : i32
    return %c0_i32 : i32
  }
  func.func @transform_3(%arg0: i32) -> (i32, i32, i32) {
    %c0_i32 = arith.constant 0 : i32
    %c0_i32_0 = arith.constant 0 : i32
    %c0_i32_1 = arith.constant 0 : i32
    return %arg0, %c0_i32, %c0_i32_0 : i32, i32, i32
  }
}

</mosaic_0001>

<llo_original>
// kernel: tpu_custom_call.1
$region0: #{tpu_custom_call.1}
  #allocation0 [shape = 'u32[]', space=smem, size = 0x4, offset = 0x4, fixed_abs, tag = 'smem constant byte address 0x4 - core index']
  #allocation1 [shape = 'u32[72,128]{1,0:T(1,128)}', space=vmem, size = 0x9000, scoped, tag = 'internal scratch']
  #allocation2 [shape = 'f32[4,324]{1,0:T(4,128)}', space=vmem, size = 0x1800, scoped, tag = 'scratch operand']
  #allocation3 [shape = 'f32[12,286]{1,0:T(8,128)}', space=vmem, size = 0x6000, scoped, tag = 'scratch operand']
  %s0 = inlined_call_operand.hbm [shape: f32[2,4,16,16], index: 0, kind: input, shape index: {}]
  %s1 = inlined_call_operand.hbm [shape: f32[108], index: 1, kind: input, shape index: {}]
  %s2 = inlined_call_operand.vmem [shape: f32[12], index: 2, kind: input, shape index: {}]
  %s3 = inlined_call_operand.vmem [shape: f32[2,12,2], index: 3, kind: output, shape index: {}]
  %s4 = sld [smem:[#allocation0]]
  $region57: #{tpu_custom_call.1} parent=0
    _
  %s6 = ssub.s32 1, %s4
  %s7 = scalar_select 0, %s6, %s4
  $region1: #{tpu_custom_call.1} parent=0
    #allocation4 [shape = 'u8[65536]{0}', space=vmem, size = 0x10000, scoped, tag = 'input window, operand 0']
    #allocation5 [shape = 's32[2]{0}', space=sflag, size = 0x8, scoped, tag = 'scoped memory for tpu_custom_call.1']
    #allocation6 [shape = 's32[2]{0}', space=sflag, size = 0x8, scoped, tag = 'scoped memory for tpu_custom_call.1']
    #allocation7 [shape = 's32[2]{0}', space=sflag, size = 0x8, scoped, tag = 'scoped memory for tpu_custom_call.1']
    #allocation8 [shape = 'u8[512]{0}', space=smem, size = 0x200, scoped, tag = 'input window, operand 1, single buffered']
    #allocation9 [shape = 'u8[512]{0}', space=smem, size = 0x200, scoped, tag = 'input window, operand 2, single buffered']
    %8 = vsyncpa [#allocation5], 0
    %s9 = scalar_lea.sflag [#allocation5], 1
    %10 = vsyncpa %s9, 0
    %11 = vsyncpa [#allocation6], 0
    %12 = vsyncpa [#allocation7], 0
    loop: start=0, step=1, limit=4
    $region2: #{tpu_custom_call.1} parent=1 // loop_pre_header
      _
    $region3: #{tpu_custom_call.1} parent=1 // loop_header
      %s14 = sphi 0, %s18
      %p15 = scmp.ge.s32.totalorder %s14, 4
      %s24 = sphi 0, %s26
      %s27 = sphi 0, %s24
      %s28 = sphi 0, %s27
      %s44 = sphi 0, %s28
      %s48 = sphi 0, %s48
      %s50 = sphi 0, %s48
      %s51 = sphi 0, %s50
      %s65 = sphi 0, %s51
      %s69 = sphi 0, %s69
      %s71 = sphi 0, %s69
      %s72 = sphi 0, %s71
      %s86 = sphi 0, %s72
      %s92 = sphi 0, %s94
      %s95 = sphi 0, %s92
      %s96 = sphi 0, %s95
      %s112 = sphi 0, %s96
    $region4: #{tpu_custom_call.1} parent=1 // loop_header_branch
      %17 = sbr.rel (%p15) target = $region8
    $region5: #{tpu_custom_call.1} parent=1 // loop_body
      %s19 = ssub.s32 %s14, 1
      %s20 = ssub.s32 %s14, 2
      %s21 = sadd.s32 %s14, 1
      %s22 = ssub.s32 %s14, %s21
      %p23 = scmp.eq.s32.totalorder %s22, 0
      %s25 = sadd.s32 %s24, 1
      %s26 = scalar_select %p23, %s24, %s25
      %p29 = pneg %p23
      %p30 = scmp.eq.s32.totalorder %s14, 1
      %p31 = por %p29, %p30
      %p32 = scmp.ne.s32.totalorder %s24, %s27
      %p33 = scmp.eq.s32.totalorder %s14, 0
      %p34 = por %p32, %p33
      %p35 = scmp.ne.s32.totalorder %s24, %s27
      %p36 = scmp.eq.s32.totalorder %s19, 1
      %p37 = por %p35, %p36
      %p38 = scmp.ne.s32.totalorder %s27, %s28
      %p39 = scmp.eq.s32.totalorder %s19, 0
      %p40 = por %p38, %p39
      %p41 = scmp.ne.s32.totalorder %s27, %s28
      %p42 = scmp.eq.s32.totalorder %s20, 1
      %p43 = por %p41, %p42
      %p45 = scmp.ne.s32.totalorder %s28, %s44
      %p46 = scmp.eq.s32.totalorder %s20, 0
      %p47 = por %p45, %p46
      %s49 = sadd.s32 %s48, 1
      %p52 = scmp.eq.s32.totalorder %s14, 1
      %p53 = scmp.ne.s32.totalorder %s48, %s50
      %p54 = scmp.eq.s32.totalorder %s14, 0
      %p55 = por %p53, %p54
      %p56 = scmp.ne.s32.totalorder %s48, %s50
      %p57 = scmp.eq.s32.totalorder %s19, 1
      %p58 = por %p56, %p57
      %p59 = scmp.ne.s32.totalorder %s50, %s51
      %p60 = scmp.eq.s32.totalorder %s19, 0
      %p61 = por %p59, %p60
      %p62 = scmp.ne.s32.totalorder %s50, %s51
      %p63 = scmp.eq.s32.totalorder %s20, 1
      %p64 = por %p62, %p63
      %p66 = scmp.ne.s32.totalorder %s51, %s65
      %p67 = scmp.eq.s32.totalorder %s20, 0
      %p68 = por %p66, %p67
      %s70 = sadd.s32 %s69, 1
      %p73 = scmp.eq.s32.totalorder %s14, 1
      %p74 = scmp.ne.s32.totalorder %s69, %s71
      %p75 = scmp.eq.s32.totalorder %s14, 0
      %p76 = por %p74, %p75
      %p77 = scmp.ne.s32.totalorder %s69, %s71
      %p78 = scmp.eq.s32.totalorder %s19, 1
      %p79 = por %p77, %p78
      %p80 = scmp.ne.s32.totalorder %s71, %s72
      %p81 = scmp.eq.s32.totalorder %s19, 0
      %p82 = por %p80, %p81
      %p83 = scmp.ne.s32.totalorder %s71, %s72
      %p84 = scmp.eq.s32.totalorder %s20, 1
      %p85 = por %p83, %p84
      %p87 = scmp.ne.s32.totalorder %s72, %s86
      %p88 = scmp.eq.s32.totalorder %s20, 0
      %p89 = por %p87, %p88
      %s90 = ssub.s32 %s14, %s21
      %p91 = scmp.eq.s32.totalorder %s90, 0
      %s93 = sadd.s32 %s92, 1
      %s94 = scalar_select %p91, %s92, %s93
      %p97 = pneg %p91
      %p98 = scmp.eq.s32.totalorder %s14, 1
      %p99 = por %p97, %p98
      %p100 = scmp.ne.s32.totalorder %s92, %s95
      %p101 = scmp.eq.s32.totalorder %s14, 0
      %p102 = por %p100, %p101
      %p103 = scmp.ne.s32.totalorder %s92, %s95
      %p104 = scmp.eq.s32.totalorder %s19, 1
      %p105 = por %p103, %p104
      %p106 = scmp.ne.s32.totalorder %s95, %s96
      %p107 = scmp.eq.s32.totalorder %s19, 0
      %p108 = por %p106, %p107
      %p109 = scmp.ne.s32.totalorder %s95, %s96
      %p110 = scmp.eq.s32.totalorder %s20, 1
      %p111 = por %p109, %p110
      %p113 = scmp.ne.s32.totalorder %s96, %s112
      %p114 = scmp.eq.s32.totalorder %s20, 0
      %p115 = por %p113, %p114
      %p116 = scmp.le.s32.totalorder 1, %s14
      %p117 = scmp.lt.s32.totalorder %s14, 3
      %p118 = pnand %p116, %p117
      %p119 = pneg %p118
      // Predicated region
      $region9: #{tpu_custom_call.1} parent=5 // pred_check
        _
      $region10: #{tpu_custom_call.1} parent=5 // pred_check_branch
        %121 = sbr.rel (%p118) target = $region12
      $region11: #{tpu_custom_call.1} parent=5 // pred_region
        %s122 = ssub.s32 %s14, 1
        // Predicated region
        $region13: #{tpu_custom_call.1} parent=11 // pred_check
          %p123 = pneg %p61
        $region14: #{tpu_custom_call.1} parent=11 // pred_check_branch
          %125 = sbr.rel (%p123) target = $region16
        $region15: #{tpu_custom_call.1} parent=11 // pred_region
          %127 = vsyncadd [#allocation6], 0
          %s129 = sshll.u32 %s1, 4
          %s130 = int_to_ptr.hbm [resolvable:$true] %s129
          %132 = dma.hbm_to_smem %s130, 16, [#allocation8], [#allocation6]
        $region16: #{tpu_custom_call.1} parent=11 // pred_fallthru
          _
        // Predicated region
        $region17: #{tpu_custom_call.1} parent=11 // pred_check
          %p133 = pneg %p82
        $region18: #{tpu_custom_call.1} parent=11 // pred_check_branch
          %135 = sbr.rel (%p133) target = $region20
        $region19: #{tpu_custom_call.1} parent=11 // pred_region
          %137 = vsyncadd [#allocation7], 0
          %s139 = sshll.u32 %s2, 4
          %s140 = int_to_ptr.vmem [resolvable:$true] %s139
          %142 = dma.vmem_to_smem %s140, 16, [#allocation9], [#allocation7]
        $region20: #{tpu_custom_call.1} parent=11 // pred_fallthru
          _
      $region12: #{tpu_custom_call.1} parent=5 // pred_fallthru
        _
      %p143 = scmp.lt.s32.totalorder %s14, 2
      // Predicated region
      $region21: #{tpu_custom_call.1} parent=5 // pred_check
        %p144 = pneg %p143
      $region22: #{tpu_custom_call.1} parent=5 // pred_check_branch
        %146 = sbr.rel (%p144) target = $region24
      $region23: #{tpu_custom_call.1} parent=5 // pred_region
        // Predicated region
        $region25: #{tpu_custom_call.1} parent=23 // pred_check
          %p147 = pneg %p34
        $region26: #{tpu_custom_call.1} parent=23 // pred_check_branch
          %149 = sbr.rel (%p147) target = $region28
        $region27: #{tpu_custom_call.1} parent=23 // pred_region
          %s150 = sand.u32 %s24, 1
          %s151 = scalar_lea.sflag [#allocation5], %s150
          %s152 = sand.u32 %s24, 1
          %s153 = smul.addr %s152, 64
          %s154 = scalar_lea.vmem [#allocation4], %s153
          %156 = vsyncadd %s151, 0
          %s157 = smul.addr %s14, 8
          %s158 = smul.addr %s157, 8
          %s159 = scalar_lea.hbm %s0, %s158
          %s160 = sshll.u32 %s159, 4
          %s161 = int_to_ptr.hbm [resolvable:$true] %s160
          %s162 = sshll.u32 %s154, 4
          %s163 = int_to_ptr.vmem [resolvable:$true] %s162
          %168 = dma.hbm_to_vmem [thread:$0]  %s161, 1024, %s163, %s151, 128, 128, 8
        $region28: #{tpu_custom_call.1} parent=23 // pred_fallthru
          _
      $region24: #{tpu_custom_call.1} parent=5 // pred_fallthru
        _
      %p169 = scmp.le.s32.totalorder 1, %s14
      %p170 = scmp.lt.s32.totalorder %s14, 3
      %p171 = pnand %p169, %p170
      %p172 = pneg %p171
      // Predicated region
      $region29: #{tpu_custom_call.1} parent=5 // pred_check
        _
      $region30: #{tpu_custom_call.1} parent=5 // pred_check_branch
        %174 = sbr.rel (%p171) target = $region32
      $region31: #{tpu_custom_call.1} parent=5 // pred_region
        %s175 = ssub.s32 %s14, 1
        %s176 = sand.u32 %s27, 1
        %s177 = scalar_lea.sflag [#allocation5], %s176
        %s178 = sand.u32 %s27, 1
        %s179 = smul.addr %s178, 64
        %s180 = scalar_lea.vmem [#allocation4], %s179
        // Predicated region
        $region33: #{tpu_custom_call.1} parent=31 // pred_check
          %p181 = pneg %p40
        $region34: #{tpu_custom_call.1} parent=31 // pred_check_branch
          %183 = sbr.rel (%p181) target = $region36
        $region35: #{tpu_custom_call.1} parent=31 // pred_region
          %185 = dma.done %s177, 1024
        $region36: #{tpu_custom_call.1} parent=31 // pred_fallthru
          _
        // Predicated region
        $region37: #{tpu_custom_call.1} parent=31 // pred_check
          %p186 = pneg %p61
        $region38: #{tpu_custom_call.1} parent=31 // pred_check_branch
          %188 = sbr.rel (%p186) target = $region40
        $region39: #{tpu_custom_call.1} parent=31 // pred_region
          %190 = dma.done [#allocation6], 16
        $region40: #{tpu_custom_call.1} parent=31 // pred_fallthru
          _
        // Predicated region
        $region41: #{tpu_custom_call.1} parent=31 // pred_check
          %p191 = pneg %p82
        $region42: #{tpu_custom_call.1} parent=31 // pred_check_branch
          %193 = sbr.rel (%p191) target = $region44
        $region43: #{tpu_custom_call.1} parent=31 // pred_region
          %195 = dma.done [#allocation7], 16
        $region44: #{tpu_custom_call.1} parent=31 // pred_fallthru
          _
        %196 = sfence
        %s197 = sand.u32 %s27, 1
        %s198 = scalar_lea.sflag [#allocation5], %s197
        %s199 = sand.u32 %s27, 1
        %s200 = smul.addr %s199, 64
        %s201 = scalar_lea.vmem [#allocation4], %s200
        %p202 = pneg %p40
        %p203 = pneg %p37
        %p204 = pneg %p61
        %p205 = pneg %p58
        %p206 = pneg %p82
        %p207 = pneg %p79
        %p208 = pneg %p108
        %p209 = pneg %p105
        %p210 = scmp.lt.s32.totalorder %s19, 1
        %s211 = scalar_select %p210, %s19, 1
        %s212 = smul.addr %s211, 2
        %s213 = smul.addr %s212, 8
        %s214 = scalar_lea.vmem %s3, %s213
        %p215 = scmp.lt.s32.totalorder %s19, 1
        %s216 = scalar_select %p215, %s19, 1
        %s217 = smul.addr %s216, 2
        %s218 = smul.addr %s217, 8
        %s219 = scalar_lea.vmem %s3, %s218
        %220 = vst [vmem:[#allocation2] sm:$0xff] 0.0
        %vm221 = vcmask 551936
        %222 = vst.msk [vmem:[#allocation2 + $0x8] sm:$0xf] %vm221, 0.0
        %v223 = vld [vmem:[%s180] sm:$0x1]
        %225 = vrot.lane.b32.xlu0 %v223, 19
        %v226 = vpop.permute.xlu0 %225
        %vm228 = vcmask 278680
        %229 = vst.msk [vmem:[#allocation2] sm:$0x1] %vm228, %v226
        %v230 = vld [vmem:[%s180 + $0x1] sm:$0x1]
        %232 = vrot.lane.b32.xlu0 %v230, 37
        %v233 = vpop.permute.xlu0 %232
        %vm235 = vcmask 426280
        %236 = vst.msk [vmem:[#allocation2] sm:$0x1] %vm235, %v233
        %v237 = vld [vmem:[%s180 + $0x2] sm:$0x1]
        %239 = vrot.lane.b32.xlu0 %v237, 55
        %v240 = vpop.permute.xlu0 %239
        %vm242 = vcmask 573880
        %243 = vst.msk [vmem:[#allocation2] sm:$0x1] %vm242, %v240
        %v244 = vld [vmem:[%s180 + $0x3] sm:$0x1]
        %246 = vrot.lane.b32.xlu0 %v244, 73
        %v247 = vpop.permute.xlu0 %246
        %vm249 = vcmask 721480
        %250 = vst.msk [vmem:[#allocation2] sm:$0x1] %vm249, %v247
        %v251 = vld [vmem:[%s180 + $0x4] sm:$0x1]
        %253 = vrot.lane.b32.xlu0 %v251, 91
        %v254 = vpop.permute.xlu0 %253
        %vm256 = vcmask 869080
        %257 = vst.msk [vmem:[#allocation2] sm:$0x1] %vm256, %v254
        %v258 = vld [vmem:[%s180 + $0x5] sm:$0x1]
        %260 = vrot.lane.b32.xlu0 %v258, 109
        %v261 = vpop.permute.xlu0 %260
        %vm263 = vcmask 1016680
        %264 = vst.msk [vmem:[#allocation2] sm:$0x1] %vm263, %v261
        %v265 = vld [vmem:[%s180 + $0x6] sm:$0x1]
        %267 = vrot.lane.b32.xlu0 %v265, 127
        %v268 = vpop.permute.xlu0 %267
        %v269 = vrot.slane %v268, 4
        %vm270 = vcmask 1039360
        %v271 = vsel %vm270, %v269, %v268
        %vm273 = vcmask 1041400
        %vm274 = vcmask 118788
        %vm275 = vmor %vm274, %vm273
        %276 = vst.msk [vmem:[#allocation2] sm:$0x11] %vm275, %v271
        %v277 = vld [vmem:[%s180 + $0x7] sm:$0x1]
        %279 = vrot.lane.b32.xlu0 %v277, 17
        %v280 = vpop.permute.xlu0 %279
        %vm282 = vcmask 262280
        %283 = vst.msk [vmem:[#allocation2 + $0x4] sm:$0x1] %vm282, %v280
        %v284 = vld [vmem:[%s180 + $0x8] sm:$0x1]
        %286 = vrot.lane.b32.xlu0 %v284, 35
        %v287 = vpop.permute.xlu0 %286
        %vm289 = vcmask 409880
        %290 = vst.msk [vmem:[#allocation2 + $0x4] sm:$0x1] %vm289, %v287
        %v291 = vld [vmem:[%s180 + $0x9] sm:$0x1]
        %293 = vrot.lane.b32.xlu0 %v291, 53
        %v294 = vpop.permute.xlu0 %293
        %vm296 = vcmask 557480
        %297 = vst.msk [vmem:[#allocation2 + $0x4] sm:$0x1] %vm296, %v294
        %v298 = vld [vmem:[%s180 + $0xa] sm:$0x1]
        %300 = vrot.lane.b32.xlu0 %v298, 71
        %v301 = vpop.permute.xlu0 %300
        %vm303 = vcmask 705080
        %304 = vst.msk [vmem:[#allocation2 + $0x4] sm:$0x1] %vm303, %v301
        %v305 = vld [vmem:[%s180 + $0xb] sm:$0x1]
        %307 = vrot.lane.b32.xlu0 %v305, 89
        %v308 = vpop.permute.xlu0 %307
        %vm310 = vcmask 852680
        %311 = vst.msk [vmem:[#allocation2 + $0x4] sm:$0x1] %vm310, %v308
        %v312 = vld [vmem:[%s180 + $0xc] sm:$0x1]
        %314 = vrot.lane.b32.xlu0 %v312, 107
        %v315 = vpop.permute.xlu0 %314
        %vm317 = vcmask 1000280
        %318 = vst.msk [vmem:[#allocation2 + $0x4] sm:$0x1] %vm317, %v315
        %v319 = vld [vmem:[%s180 + $0xd] sm:$0x1]
        %321 = vrot.lane.b32.xlu0 %v319, 125
        %v322 = vpop.permute.xlu0 %321
        %v323 = vrot.slane %v322, 4
        %vm324 = vcmask 1022976
        %v325 = vsel %vm324, %v323, %v322
        %vm327 = vcmask 1041384
        %vm328 = vcmask 102404
        %vm329 = vmor %vm328, %vm327
        %330 = vst.msk [vmem:[#allocation2 + $0x4] sm:$0x11] %vm329, %v325
        %v331 = vld [vmem:[%s180 + $0xe] sm:$0x1]
        %333 = vrot.lane.b32.xlu0 %v331, 15
        %v334 = vpop.permute.xlu0 %333
        %vm336 = vcmask 245880
        %337 = vst.msk [vmem:[#allocation2 + $0x8] sm:$0x1] %vm336, %v334
        %v338 = vld [vmem:[%s180 + $0xf] sm:$0x1]
        %340 = vrot.lane.b32.xlu0 %v338, 33
        %v341 = vpop.permute.xlu0 %340
        %vm343 = vcmask 393480
        %344 = vst.msk [vmem:[#allocation2 + $0x8] sm:$0x1] %vm343, %v341
        %s345 = scalar_lea.vmem %s180, 16 [#allocation4]
        %v346 = vld [vmem:[%s345] sm:$0x1]
        %348 = vrot.lane.b32.xlu0 %v346, 19
        %v349 = vpop.permute.xlu0 %348
        %351 = vst.msk [vmem:[#allocation2 + $0x1] sm:$0x1] %vm228, %v349
        %v352 = vld [vmem:[%s345 + $0x1] sm:$0x1]
        %354 = vrot.lane.b32.xlu0 %v352, 37
        %v355 = vpop.permute.xlu0 %354
        %357 = vst.msk [vmem:[#allocation2 + $0x1] sm:$0x1] %vm235, %v355
        %v358 = vld [vmem:[%s345 + $0x2] sm:$0x1]
        %360 = vrot.lane.b32.xlu0 %v358, 55
        %v361 = vpop.permute.xlu0 %360
        %363 = vst.msk [vmem:[#allocation2 + $0x1] sm:$0x1] %vm242, %v361
        %v364 = vld [vmem:[%s345 + $0x3] sm:$0x1]
        %366 = vrot.lane.b32.xlu0 %v364, 73
        %v367 = vpop.permute.xlu0 %366
        %369 = vst.msk [vmem:[#allocation2 + $0x1] sm:$0x1] %vm249, %v367
        %v370 = vld [vmem:[%s345 + $0x4] sm:$0x1]
        %372 = vrot.lane.b32.xlu0 %v370, 91
        %v373 = vpop.permute.xlu0 %372
        %375 = vst.msk [vmem:[#allocation2 + $0x1] sm:$0x1] %vm256, %v373
        %v376 = vld [vmem:[%s345 + $0x5] sm:$0x1]
        %378 = vrot.lane.b32.xlu0 %v376, 109
        %v379 = vpop.permute.xlu0 %378
        %381 = vst.msk [vmem:[#allocation2 + $0x1] sm:$0x1] %vm263, %v379
        %v382 = vld [vmem:[%s345 + $0x6] sm:$0x1]
        %384 = vrot.lane.b32.xlu0 %v382, 127
        %v385 = vpop.permute.xlu0 %384
        %v386 = vrot.slane %v385, 4
        %v387 = vsel %vm270, %v386, %v385
        %389 = vst.msk [vmem:[#allocation2 + $0x1] sm:$0x11] %vm275, %v387
        %v390 = vld [vmem:[%s345 + $0x7] sm:$0x1]
        %392 = vrot.lane.b32.xlu0 %v390, 17
        %v393 = vpop.permute.xlu0 %392
        %395 = vst.msk [vmem:[#allocation2 + $0x5] sm:$0x1] %vm282, %v393
        %v396 = vld [vmem:[%s345 + $0x8] sm:$0x1]
        %398 = vrot.lane.b32.xlu0 %v396, 35
        %v399 = vpop.permute.xlu0 %398
        %401 = vst.msk [vmem:[#allocation2 + $0x5] sm:$0x1] %vm289, %v399
        %v402 = vld [vmem:[%s345 + $0x9] sm:$0x1]
        %404 = vrot.lane.b32.xlu0 %v402, 53
        %v405 = vpop.permute.xlu0 %404
        %407 = vst.msk [vmem:[#allocation2 + $0x5] sm:$0x1] %vm296, %v405
        %v408 = vld [vmem:[%s345 + $0xa] sm:$0x1]
        %410 = vrot.lane.b32.xlu0 %v408, 71
        %v411 = vpop.permute.xlu0 %410
        %413 = vst.msk [vmem:[#allocation2 + $0x5] sm:$0x1] %vm303, %v411
        %v414 = vld [vmem:[%s345 + $0xb] sm:$0x1]
        %416 = vrot.lane.b32.xlu0 %v414, 89
        %v417 = vpop.permute.xlu0 %416
        %419 = vst.msk [vmem:[#allocation2 + $0x5] sm:$0x1] %vm310, %v417
        %v420 = vld [vmem:[%s345 + $0xc] sm:$0x1]
        %422 = vrot.lane.b32.xlu0 %v420, 107
        %v423 = vpop.permute.xlu0 %422
        %425 = vst.msk [vmem:[#allocation2 + $0x5] sm:$0x1] %vm317, %v423
        %v426 = vld [vmem:[%s345 + $0xd] sm:$0x1]
        %428 = vrot.lane.b32.xlu0 %v426, 125
        %v429 = vpop.permute.xlu0 %428
        %v430 = vrot.slane %v429, 4
        %v431 = vsel %vm324, %v430, %v429
        %433 = vst.msk [vmem:[#allocation2 + $0x5] sm:$0x11] %vm329, %v431
        %v434 = vld [vmem:[%s345 + $0xe] sm:$0x1]
        %436 = vrot.lane.b32.xlu0 %v434, 15
        %v437 = vpop.permute.xlu0 %436
        %439 = vst.msk [vmem:[#allocation2 + $0x9] sm:$0x1] %vm336, %v437
        %v440 = vld [vmem:[%s345 + $0xf] sm:$0x1]
        %442 = vrot.lane.b32.xlu0 %v440, 33
        %v443 = vpop.permute.xlu0 %442
        %445 = vst.msk [vmem:[#allocation2 + $0x9] sm:$0x1] %vm343, %v443
        %s446 = scalar_lea.vmem %s180, 32 [#allocation4]
        %v447 = vld [vmem:[%s446] sm:$0x1]
        %449 = vrot.lane.b32.xlu0 %v447, 19
        %v450 = vpop.permute.xlu0 %449
        %452 = vst.msk [vmem:[#allocation2 + $0x2] sm:$0x1] %vm228, %v450
        %v453 = vld [vmem:[%s446 + $0x1] sm:$0x1]
        %455 = vrot.lane.b32.xlu0 %v453, 37
        %v456 = vpop.permute.xlu0 %455
        %458 = vst.msk [vmem:[#allocation2 + $0x2] sm:$0x1] %vm235, %v456
        %v459 = vld [vmem:[%s446 + $0x2] sm:$0x1]
        %461 = vrot.lane.b32.xlu0 %v459, 55
        %v462 = vpop.permute.xlu0 %461
        %464 = vst.msk [vmem:[#allocation2 + $0x2] sm:$0x1] %vm242, %v462
        %v465 = vld [vmem:[%s446 + $0x3] sm:$0x1]
        %467 = vrot.lane.b32.xlu0 %v465, 73
        %v468 = vpop.permute.xlu0 %467
        %470 = vst.msk [vmem:[#allocation2 + $0x2] sm:$0x1] %vm249, %v468
        %v471 = vld [vmem:[%s446 + $0x4] sm:$0x1]
        %473 = vrot.lane.b32.xlu0 %v471, 91
        %v474 = vpop.permute.xlu0 %473
        %476 = vst.msk [vmem:[#allocation2 + $0x2] sm:$0x1] %vm256, %v474
        %v477 = vld [vmem:[%s446 + $0x5] sm:$0x1]
        %479 = vrot.lane.b32.xlu0 %v477, 109
        %v480 = vpop.permute.xlu0 %479
        %482 = vst.msk [vmem:[#allocation2 + $0x2] sm:$0x1] %vm263, %v480
        %v483 = vld [vmem:[%s446 + $0x6] sm:$0x1]
        %485 = vrot.lane.b32.xlu0 %v483, 127
        %v486 = vpop.permute.xlu0 %485
        %v487 = vrot.slane %v486, 4
        %v488 = vsel %vm270, %v487, %v486
        %490 = vst.msk [vmem:[#allocation2 + $0x2] sm:$0x11] %vm275, %v488
        %v491 = vld [vmem:[%s446 + $0x7] sm:$0x1]
        %493 = vrot.lane.b32.xlu0 %v491, 17
        %v494 = vpop.permute.xlu0 %493
        %496 = vst.msk [vmem:[#allocation2 + $0x6] sm:$0x1] %vm282, %v494
        %v497 = vld [vmem:[%s446 + $0x8] sm:$0x1]
        %499 = vrot.lane.b32.xlu0 %v497, 35
        %v500 = vpop.permute.xlu0 %499
        %502 = vst.msk [vmem:[#allocation2 + $0x6] sm:$0x1] %vm289, %v500
        %v503 = vld [vmem:[%s446 + $0x9] sm:$0x1]
        %505 = vrot.lane.b32.xlu0 %v503, 53
        %v506 = vpop.permute.xlu0 %505
        %508 = vst.msk [vmem:[#allocation2 + $0x6] sm:$0x1] %vm296, %v506
        %v509 = vld [vmem:[%s446 + $0xa] sm:$0x1]
        %511 = vrot.lane.b32.xlu0 %v509, 71
        %v512 = vpop.permute.xlu0 %511
        %514 = vst.msk [vmem:[#allocation2 + $0x6] sm:$0x1] %vm303, %v512
        %v515 = vld [vmem:[%s446 + $0xb] sm:$0x1]
        %517 = vrot.lane.b32.xlu0 %v515, 89
        %v518 = vpop.permute.xlu0 %517
        %520 = vst.msk [vmem:[#allocation2 + $0x6] sm:$0x1] %vm310, %v518
        %v521 = vld [vmem:[%s446 + $0xc] sm:$0x1]
        %523 = vrot.lane.b32.xlu0 %v521, 107
        %v524 = vpop.permute.xlu0 %523
        %526 = vst.msk [vmem:[#allocation2 + $0x6] sm:$0x1] %vm317, %v524
        %v527 = vld [vmem:[%s446 + $0xd] sm:$0x1]
        %529 = vrot.lane.b32.xlu0 %v527, 125
        %v530 = vpop.permute.xlu0 %529
        %v531 = vrot.slane %v530, 4
        %v532 = vsel %vm324, %v531, %v530
        %534 = vst.msk [vmem:[#allocation2 + $0x6] sm:$0x11] %vm329, %v532
        %v535 = vld [vmem:[%s446 + $0xe] sm:$0x1]
        %537 = vrot.lane.b32.xlu0 %v535, 15
        %v538 = vpop.permute.xlu0 %537
        %540 = vst.msk [vmem:[#allocation2 + $0xa] sm:$0x1] %vm336, %v538
        %v541 = vld [vmem:[%s446 + $0xf] sm:$0x1]
        %543 = vrot.lane.b32.xlu0 %v541, 33
        %v544 = vpop.permute.xlu0 %543
        %546 = vst.msk [vmem:[#allocation2 + $0xa] sm:$0x1] %vm343, %v544
        %s547 = scalar_lea.vmem %s180, 48 [#allocation4]
        %v548 = vld [vmem:[%s547] sm:$0x1]
        %550 = vrot.lane.b32.xlu0 %v548, 19
        %v551 = vpop.permute.xlu0 %550
        %553 = vst.msk [vmem:[#allocation2 + $0x3] sm:$0x1] %vm228, %v551
        %v554 = vld [vmem:[%s547 + $0x1] sm:$0x1]
        %556 = vrot.lane.b32.xlu0 %v554, 37
        %v557 = vpop.permute.xlu0 %556
        %559 = vst.msk [vmem:[#allocation2 + $0x3] sm:$0x1] %vm235, %v557
        %v560 = vld [vmem:[%s547 + $0x2] sm:$0x1]
        %562 = vrot.lane.b32.xlu0 %v560, 55
        %v563 = vpop.permute.xlu0 %562
        %565 = vst.msk [vmem:[#allocation2 + $0x3] sm:$0x1] %vm242, %v563
        %v566 = vld [vmem:[%s547 + $0x3] sm:$0x1]
        %568 = vrot.lane.b32.xlu0 %v566, 73
        %v569 = vpop.permute.xlu0 %568
        %571 = vst.msk [vmem:[#allocation2 + $0x3] sm:$0x1] %vm249, %v569
        %v572 = vld [vmem:[%s547 + $0x4] sm:$0x1]
        %574 = vrot.lane.b32.xlu0 %v572, 91
        %v575 = vpop.permute.xlu0 %574
        %577 = vst.msk [vmem:[#allocation2 + $0x3] sm:$0x1] %vm256, %v575
        %v578 = vld [vmem:[%s547 + $0x5] sm:$0x1]
        %580 = vrot.lane.b32.xlu0 %v578, 109
        %v581 = vpop.permute.xlu0 %580
        %583 = vst.msk [vmem:[#allocation2 + $0x3] sm:$0x1] %vm263, %v581
        %v584 = vld [vmem:[%s547 + $0x6] sm:$0x1]
        %586 = vrot.lane.b32.xlu0 %v584, 127
        %v587 = vpop.permute.xlu0 %586
        %v588 = vrot.slane %v587, 4
        %v589 = vsel %vm270, %v588, %v587
        %591 = vst.msk [vmem:[#allocation2 + $0x3] sm:$0x11] %vm275, %v589
        %v592 = vld [vmem:[%s547 + $0x7] sm:$0x1]
        %594 = vrot.lane.b32.xlu0 %v592, 17
        %v595 = vpop.permute.xlu0 %594
        %597 = vst.msk [vmem:[#allocation2 + $0x7] sm:$0x1] %vm282, %v595
        %v598 = vld [vmem:[%s547 + $0x8] sm:$0x1]
        %600 = vrot.lane.b32.xlu0 %v598, 35
        %v601 = vpop.permute.xlu0 %600
        %603 = vst.msk [vmem:[#allocation2 + $0x7] sm:$0x1] %vm289, %v601
        %v604 = vld [vmem:[%s547 + $0x9] sm:$0x1]
        %606 = vrot.lane.b32.xlu0 %v604, 53
        %v607 = vpop.permute.xlu0 %606
        %609 = vst.msk [vmem:[#allocation2 + $0x7] sm:$0x1] %vm296, %v607
        %v610 = vld [vmem:[%s547 + $0xa] sm:$0x1]
        %612 = vrot.lane.b32.xlu0 %v610, 71
        %v613 = vpop.permute.xlu0 %612
        %615 = vst.msk [vmem:[#allocation2 + $0x7] sm:$0x1] %vm303, %v613
        %v616 = vld [vmem:[%s547 + $0xb] sm:$0x1]
        %618 = vrot.lane.b32.xlu0 %v616, 89
        %v619 = vpop.permute.xlu0 %618
        %621 = vst.msk [vmem:[#allocation2 + $0x7] sm:$0x1] %vm310, %v619
        %v622 = vld [vmem:[%s547 + $0xc] sm:$0x1]
        %624 = vrot.lane.b32.xlu0 %v622, 107
        %v625 = vpop.permute.xlu0 %624
        %627 = vst.msk [vmem:[#allocation2 + $0x7] sm:$0x1] %vm317, %v625
        %v628 = vld [vmem:[%s547 + $0xd] sm:$0x1]
        %630 = vrot.lane.b32.xlu0 %v628, 125
        %v631 = vpop.permute.xlu0 %630
        %v632 = vrot.slane %v631, 4
        %v633 = vsel %vm324, %v632, %v631
        %635 = vst.msk [vmem:[#allocation2 + $0x7] sm:$0x11] %vm329, %v633
        %v636 = vld [vmem:[%s547 + $0xe] sm:$0x1]
        %638 = vrot.lane.b32.xlu0 %v636, 15
        %v639 = vpop.permute.xlu0 %638
        %641 = vst.msk [vmem:[#allocation2 + $0xb] sm:$0x1] %vm336, %v639
        %v642 = vld [vmem:[%s547 + $0xf] sm:$0x1]
        %644 = vrot.lane.b32.xlu0 %v642, 33
        %v645 = vpop.permute.xlu0 %644
        %647 = vst.msk [vmem:[#allocation2 + $0xb] sm:$0x1] %vm343, %v645
        %v648 = vld [vmem:[#allocation2] sm:$0xff]
        %v649 = vld [vmem:[#allocation2 + $0x8] sm:$0xf]
        %s650 = sld [smem:[#allocation8]]
        %v651 = vstv %s650
        %v652 = vmul.f32 %v648, %v651
        %v653 = vmul.f32 %v649, %v651
        %s654 = sld [smem:[#allocation8 + $0x1]]
        %v655 = vstv %s654
        %v656 = vmul.f32 %v648, %v655
        %v657 = vmul.f32 %v649, %v655
        %660 = vrot.lane.b32.xlu0 %v656, 127
        %v661 = vpop.permute.xlu0 %660
        %662 = vrot.lane.b32.xlu0 %v657, 127
        %v663 = vpop.permute.xlu0 %662
        %v664 = vrot.slane %v661, 4
        %v665 = vrot.slane %v663, 4
        %vm666 = vcmask 1043456
        %v667 = vsel %vm666, %v664, %v665
        %v668 = vsel %vm270, %v661, %v667
        %v671 = vadd.f32 %v652, %v668
        %v672 = vadd.f32 %v653, %v663
        %s673 = sld [smem:[#allocation8 + $0x2]]
        %v674 = vstv %s673
        %v675 = vmul.f32 %v648, %v674
        %v676 = vmul.f32 %v649, %v674
        %679 = vrot.lane.b32.xlu0 %v675, 126
        %v680 = vpop.permute.xlu0 %679
        %681 = vrot.lane.b32.xlu0 %v676, 126
        %v682 = vpop.permute.xlu0 %681
        %v683 = vrot.slane %v680, 4
        %v684 = vrot.slane %v682, 4
        %v685 = vsel %vm666, %v683, %v684
        %vm686 = vcmask 1031168
        %v687 = vsel %vm686, %v680, %v685
        %v690 = vadd.f32 %v671, %v687
        %v691 = vadd.f32 %v672, %v682
        %s692 = sld [smem:[#allocation8 + $0x3]]
        %v693 = vstv %s692
        %v694 = vmul.f32 %v648, %v693
        %v695 = vmul.f32 %v649, %v693
        %698 = vrot.lane.b32.xlu0 %v694, 110
        %v699 = vpop.permute.xlu0 %698
        %700 = vrot.lane.b32.xlu0 %v695, 110
        %v701 = vpop.permute.xlu0 %700
        %v702 = vrot.slane %v699, 4
        %v703 = vrot.slane %v701, 4
        %v704 = vsel %vm666, %v702, %v703
        %vm705 = vcmask 900096
        %v706 = vsel %vm705, %v699, %v704
        %v709 = vadd.f32 %v690, %v706
        %v710 = vadd.f32 %v691, %v701
        %s711 = sld [smem:[#allocation8 + $0x4]]
        %v712 = vstv %s711
        %v713 = vmul.f32 %v648, %v712
        %v714 = vmul.f32 %v649, %v712
        %717 = vrot.lane.b32.xlu0 %v713, 109
        %v718 = vpop.permute.xlu0 %717
        %719 = vrot.lane.b32.xlu0 %v714, 109
        %v720 = vpop.permute.xlu0 %719
        %v721 = vrot.slane %v718, 4
        %v722 = vrot.slane %v720, 4
        %v723 = vsel %vm666, %v721, %v722
        %vm724 = vcmask 891904
        %v725 = vsel %vm724, %v718, %v723
        %v728 = vadd.f32 %v709, %v725
        %v729 = vadd.f32 %v710, %v720
        %s730 = sld [smem:[#allocation8 + $0x5]]
        %v731 = vstv %s730
        %v732 = vmul.f32 %v648, %v731
        %v733 = vmul.f32 %v649, %v731
        %736 = vrot.lane.b32.xlu0 %v732, 108
        %v737 = vpop.permute.xlu0 %736
        %738 = vrot.lane.b32.xlu0 %v733, 108
        %v739 = vpop.permute.xlu0 %738
        %v740 = vrot.slane %v737, 4
        %v741 = vrot.slane %v739, 4
        %v742 = vsel %vm666, %v740, %v741
        %vm743 = vcmask 883712
        %v744 = vsel %vm743, %v737, %v742
        %v747 = vadd.f32 %v728, %v744
        %v748 = vadd.f32 %v729, %v739
        %s749 = sld [smem:[#allocation8 + $0x6]]
        %v750 = vstv %s749
        %v751 = vmul.f32 %v648, %v750
        %v752 = vmul.f32 %v649, %v750
        %755 = vrot.lane.b32.xlu0 %v751, 92
        %v756 = vpop.permute.xlu0 %755
        %757 = vrot.lane.b32.xlu0 %v752, 92
        %v758 = vpop.permute.xlu0 %757
        %v759 = vrot.slane %v756, 4
        %v760 = vrot.slane %v758, 4
        %v761 = vsel %vm666, %v759, %v760
        %vm762 = vcmask 752640
        %v763 = vsel %vm762, %v756, %v761
        %v766 = vadd.f32 %v747, %v763
        %v767 = vadd.f32 %v748, %v758
        %s768 = sld [smem:[#allocation8 + $0x7]]
        %v769 = vstv %s768
        %v770 = vmul.f32 %v648, %v769
        %v771 = vmul.f32 %v649, %v769
        %774 = vrot.lane.b32.xlu0 %v770, 91
        %v775 = vpop.permute.xlu0 %774
        %776 = vrot.lane.b32.xlu0 %v771, 91
        %v777 = vpop.permute.xlu0 %776
        %v778 = vrot.slane %v775, 4
        %v779 = vrot.slane %v777, 4
        %v780 = vsel %vm666, %v778, %v779
        %vm781 = vcmask 744448
        %v782 = vsel %vm781, %v775, %v780
        %v785 = vadd.f32 %v766, %v782
        %v786 = vadd.f32 %v767, %v777
        %s787 = sld [smem:[#allocation8 + $0x8]]
        %v788 = vstv %s787
        %v789 = vmul.f32 %v648, %v788
        %v790 = vmul.f32 %v649, %v788
        %793 = vrot.lane.b32.xlu0 %v789, 90
        %v794 = vpop.permute.xlu0 %793
        %795 = vrot.lane.b32.xlu0 %v790, 90
        %v796 = vpop.permute.xlu0 %795
        %v797 = vrot.slane %v794, 4
        %v798 = vrot.slane %v796, 4
        %v799 = vsel %vm666, %v797, %v798
        %vm800 = vcmask 736256
        %v801 = vsel %vm800, %v794, %v799
        %v804 = vadd.f32 %v785, %v801
        %v805 = vadd.f32 %v786, %v796
        %s806 = sld [smem:[#allocation9]]
        %v807 = vstv %s806
        %v808 = vadd.f32 %v804, %v807
        %v809 = vadd.f32 %v805, %v807
        %v812 = vrot.slane %v808, 3
        %v813 = vrot.slane %v809, 6
        %v814 = vrot.slane %v809, 1
        %vm815 = vcmask 1040384
        %v816 = vsel %vm815, %v808, %v812
        %vm817 = vcmask 1042434
        %v818 = vsel %vm817, %v813, %v814
        %vm819 = vcmask 1041408
        %v820 = vsel %vm819, %v816, %v818
        %v822 = vlaneseq
        %vm823 = vcmp.ge.s32.totalorder %v822, 0
        %vm824 = vcmp.lt.s32.totalorder %v822, 286
        %vm825 = vmand %vm823, %vm824
        %826 = vst.msk [vmem:[#allocation3] ss:$8 sm:$0x7] %vm825, %v820
        %827 = vst.msk [vmem:[#allocation3] ss:$8 sm:$0x0] %vm825, %v820
        %s828 = sld [smem:[#allocation8 + $0x9]]
        %v829 = vstv %s828
        %v830 = vmul.f32 %v648, %v829
        %v831 = vmul.f32 %v649, %v829
        %s832 = sld [smem:[#allocation8 + $0xa]]
        %v833 = vstv %s832
        %v834 = vmul.f32 %v648, %v833
        %v835 = vmul.f32 %v649, %v833
        %838 = vrot.lane.b32.xlu0 %v834, 127
        %v839 = vpop.permute.xlu0 %838
        %840 = vrot.lane.b32.xlu0 %v835, 127
        %v841 = vpop.permute.xlu0 %840
        %v842 = vrot.slane %v839, 4
        %v843 = vrot.slane %v841, 4
        %v844 = vsel %vm666, %v842, %v843
        %v845 = vsel %vm270, %v839, %v844
        %v848 = vadd.f32 %v830, %v845
        %v849 = vadd.f32 %v831, %v841
        %s850 = sld [smem:[#allocation8 + $0xb]]
        %v851 = vstv %s850
        %v852 = vmul.f32 %v648, %v851
        %v853 = vmul.f32 %v649, %v851
        %856 = vrot.lane.b32.xlu0 %v852, 126
        %v857 = vpop.permute.xlu0 %856
        %858 = vrot.lane.b32.xlu0 %v853, 126
        %v859 = vpop.permute.xlu0 %858
        %v860 = vrot.slane %v857, 4
        %v861 = vrot.slane %v859, 4
        %v862 = vsel %vm666, %v860, %v861
        %v863 = vsel %vm686, %v857, %v862
        %v866 = vadd.f32 %v848, %v863
        %v867 = vadd.f32 %v849, %v859
        %s868 = sld [smem:[#allocation8 + $0xc]]
        %v869 = vstv %s868
        %v870 = vmul.f32 %v648, %v869
        %v871 = vmul.f32 %v649, %v869
        %874 = vrot.lane.b32.xlu0 %v870, 110
        %v875 = vpop.permute.xlu0 %874
        %876 = vrot.lane.b32.xlu0 %v871, 110
        %v877 = vpop.permute.xlu0 %876
        %v878 = vrot.slane %v875, 4
        %v879 = vrot.slane %v877, 4
        %v880 = vsel %vm666, %v878, %v879
        %v881 = vsel %vm705, %v875, %v880
        %v884 = vadd.f32 %v866, %v881
        %v885 = vadd.f32 %v867, %v877
        %s886 = sld [smem:[#allocation8 + $0xd]]
        %v887 = vstv %s886
        %v888 = vmul.f32 %v648, %v887
        %v889 = vmul.f32 %v649, %v887
        %892 = vrot.lane.b32.xlu0 %v888, 109
        %v893 = vpop.permute.xlu0 %892
        %894 = vrot.lane.b32.xlu0 %v889, 109
        %v895 = vpop.permute.xlu0 %894
        %v896 = vrot.slane %v893, 4
        %v897 = vrot.slane %v895, 4
        %v898 = vsel %vm666, %v896, %v897
        %v899 = vsel %vm724, %v893, %v898
        %v902 = vadd.f32 %v884, %v899
        %v903 = vadd.f32 %v885, %v895
        %s904 = sld [smem:[#allocation8 + $0xe]]
        %v905 = vstv %s904
        %v906 = vmul.f32 %v648, %v905
        %v907 = vmul.f32 %v649, %v905
        %910 = vrot.lane.b32.xlu0 %v906, 108
        %v911 = vpop.permute.xlu0 %910
        %912 = vrot.lane.b32.xlu0 %v907, 108
        %v913 = vpop.permute.xlu0 %912
        %v914 = vrot.slane %v911, 4
        %v915 = vrot.slane %v913, 4
        %v916 = vsel %vm666, %v914, %v915
        %v917 = vsel %vm743, %v911, %v916
        %v920 = vadd.f32 %v902, %v917
        %v921 = vadd.f32 %v903, %v913
        %s922 = sld [smem:[#allocation8 + $0xf]]
        %v923 = vstv %s922
        %v924 = vmul.f32 %v648, %v923
        %v925 = vmul.f32 %v649, %v923
        %928 = vrot.lane.b32.xlu0 %v924, 92
        %v929 = vpop.permute.xlu0 %928
        %930 = vrot.lane.b32.xlu0 %v925, 92
        %v931 = vpop.permute.xlu0 %930
        %v932 = vrot.slane %v929, 4
        %v933 = vrot.slane %v931, 4
        %v934 = vsel %vm666, %v932, %v933
        %v935 = vsel %vm762, %v929, %v934
        %v938 = vadd.f32 %v920, %v935
        %v939 = vadd.f32 %v921, %v931
        %s940 = sld [smem:[#allocation8 + $0x10]]
        %v941 = vstv %s940
        %v942 = vmul.f32 %v648, %v941
        %v943 = vmul.f32 %v649, %v941
        %946 = vrot.lane.b32.xlu0 %v942, 91
        %v947 = vpop.permute.xlu0 %946
        %948 = vrot.lane.b32.xlu0 %v943, 91
        %v949 = vpop.permute.xlu0 %948
        %v950 = vrot.slane %v947, 4
        %v951 = vrot.slane %v949, 4
        %v952 = vsel %vm666, %v950, %v951
        %v953 = vsel %vm781, %v947, %v952
        %v956 = vadd.f32 %v938, %v953
        %v957 = vadd.f32 %v939, %v949
        %s958 = sld [smem:[#allocation8 + $0x11]]
        %v959 = vstv %s958
        %v960 = vmul.f32 %v648, %v959
        %v961 = vmul.f32 %v649, %v959
        %964 = vrot.lane.b32.xlu0 %v960, 90
        %v965 = vpop.permute.xlu0 %964
        %966 = vrot.lane.b32.xlu0 %v961, 90
        %v967 = vpop.permute.xlu0 %966
        %v968 = vrot.slane %v965, 4
        %v969 = vrot.slane %v967, 4
        %v970 = vsel %vm666, %v968, %v969
        %v971 = vsel %vm800, %v965, %v970
        %v974 = vadd.f32 %v956, %v971
        %v975 = vadd.f32 %v957, %v967
        %s976 = sld [smem:[#allocation9 + $0x1]]
        %v977 = vstv %s976
        %v978 = vadd.f32 %v974, %v977
        %v979 = vadd.f32 %v975, %v977
        %v982 = vrot.slane %v978, 3
        %v983 = vrot.slane %v979, 6
        %v984 = vrot.slane %v979, 1
        %v985 = vsel %vm815, %v978, %v982
        %v986 = vsel %vm817, %v983, %v984
        %v987 = vsel %vm819, %v985, %v986
        %s989 = scalar_lea.vmem [#allocation3], 1
        %990 = vst.msk [vmem:[%s989] ss:$8 sm:$0x7] %vm825, %v987
        %991 = vst.msk [vmem:[%s989] ss:$8 sm:$0x0] %vm825, %v987
        %s992 = sld [smem:[#allocation8 + $0x12]]
        %v993 = vstv %s992
        %v994 = vmul.f32 %v648, %v993
        %v995 = vmul.f32 %v649, %v993
        %s996 = sld [smem:[#allocation8 + $0x13]]
        %v997 = vstv %s996
        %v998 = vmul.f32 %v648, %v997
        %v999 = vmul.f32 %v649, %v997
        %1002 = vrot.lane.b32.xlu0 %v998, 127
        %v1003 = vpop.permute.xlu0 %1002
        %1004 = vrot.lane.b32.xlu0 %v999, 127
        %v1005 = vpop.permute.xlu0 %1004
        %v1006 = vrot.slane %v1003, 4
        %v1007 = vrot.slane %v1005, 4
        %v1008 = vsel %vm666, %v1006, %v1007
        %v1009 = vsel %vm270, %v1003, %v1008
        %v1012 = vadd.f32 %v994, %v1009
        %v1013 = vadd.f32 %v995, %v1005
        %s1014 = sld [smem:[#allocation8 + $0x14]]
        %v1015 = vstv %s1014
        %v1016 = vmul.f32 %v648, %v1015
        %v1017 = vmul.f32 %v649, %v1015
        %1020 = vrot.lane.b32.xlu0 %v1016, 126
        %v1021 = vpop.permute.xlu0 %1020
        %1022 = vrot.lane.b32.xlu0 %v1017, 126
        %v1023 = vpop.permute.xlu0 %1022
        %v1024 = vrot.slane %v1021, 4
        %v1025 = vrot.slane %v1023, 4
        %v1026 = vsel %vm666, %v1024, %v1025
        %v1027 = vsel %vm686, %v1021, %v1026
        %v1030 = vadd.f32 %v1012, %v1027
        %v1031 = vadd.f32 %v1013, %v1023
        %s1032 = sld [smem:[#allocation8 + $0x15]]
        %v1033 = vstv %s1032
        %v1034 = vmul.f32 %v648, %v1033
        %v1035 = vmul.f32 %v649, %v1033
        %1038 = vrot.lane.b32.xlu0 %v1034, 110
        %v1039 = vpop.permute.xlu0 %1038
        %1040 = vrot.lane.b32.xlu0 %v1035, 110
        %v1041 = vpop.permute.xlu0 %1040
        %v1042 = vrot.slane %v1039, 4
        %v1043 = vrot.slane %v1041, 4
        %v1044 = vsel %vm666, %v1042, %v1043
        %v1045 = vsel %vm705, %v1039, %v1044
        %v1048 = vadd.f32 %v1030, %v1045
        %v1049 = vadd.f32 %v1031, %v1041
        %s1050 = sld [smem:[#allocation8 + $0x16]]
        %v1051 = vstv %s1050
        %v1052 = vmul.f32 %v648, %v1051
        %v1053 = vmul.f32 %v649, %v1051
        %1056 = vrot.lane.b32.xlu0 %v1052, 109
        %v1057 = vpop.permute.xlu0 %1056
        %1058 = vrot.lane.b32.xlu0 %v1053, 109
        %v1059 = vpop.permute.xlu0 %1058
        %v1060 = vrot.slane %v1057, 4
        %v1061 = vrot.slane %v1059, 4
        %v1062 = vsel %vm666, %v1060, %v1061
        %v1063 = vsel %vm724, %v1057, %v1062
        %v1066 = vadd.f32 %v1048, %v1063
        %v1067 = vadd.f32 %v1049, %v1059
        %s1068 = sld [smem:[#allocation8 + $0x17]]
        %v1069 = vstv %s1068
        %v1070 = vmul.f32 %v648, %v1069
        %v1071 = vmul.f32 %v649, %v1069
        %1074 = vrot.lane.b32.xlu0 %v1070, 108
        %v1075 = vpop.permute.xlu0 %1074
        %1076 = vrot.lane.b32.xlu0 %v1071, 108
        %v1077 = vpop.permute.xlu0 %1076
        %v1078 = vrot.slane %v1075, 4
        %v1079 = vrot.slane %v1077, 4
        %v1080 = vsel %vm666, %v1078, %v1079
        %v1081 = vsel %vm743, %v1075, %v1080
        %v1084 = vadd.f32 %v1066, %v1081
        %v1085 = vadd.f32 %v1067, %v1077
        %s1086 = sld [smem:[#allocation8 + $0x18]]
        %v1087 = vstv %s1086
        %v1088 = vmul.f32 %v648, %v1087
        %v1089 = vmul.f32 %v649, %v1087
        %1092 = vrot.lane.b32.xlu0 %v1088, 92
        %v1093 = vpop.permute.xlu0 %1092
        %1094 = vrot.lane.b32.xlu0 %v1089, 92
        %v1095 = vpop.permute.xlu0 %1094
        %v1096 = vrot.slane %v1093, 4
        %v1097 = vrot.slane %v1095, 4
        %v1098 = vsel %vm666, %v1096, %v1097
        %v1099 = vsel %vm762, %v1093, %v1098
        %v1102 = vadd.f32 %v1084, %v1099
        %v1103 = vadd.f32 %v1085, %v1095
        %s1104 = sld [smem:[#allocation8 + $0x19]]
        %v1105 = vstv %s1104
        %v1106 = vmul.f32 %v648, %v1105
        %v1107 = vmul.f32 %v649, %v1105
        %1110 = vrot.lane.b32.xlu0 %v1106, 91
        %v1111 = vpop.permute.xlu0 %1110
        %1112 = vrot.lane.b32.xlu0 %v1107, 91
        %v1113 = vpop.permute.xlu0 %1112
        %v1114 = vrot.slane %v1111, 4
        %v1115 = vrot.slane %v1113, 4
        %v1116 = vsel %vm666, %v1114, %v1115
        %v1117 = vsel %vm781, %v1111, %v1116
        %v1120 = vadd.f32 %v1102, %v1117
        %v1121 = vadd.f32 %v1103, %v1113
        %s1122 = sld [smem:[#allocation8 + $0x1a]]
        %v1123 = vstv %s1122
        %v1124 = vmul.f32 %v648, %v1123
        %v1125 = vmul.f32 %v649, %v1123
        %1128 = vrot.lane.b32.xlu0 %v1124, 90
        %v1129 = vpop.permute.xlu0 %1128
        %1130 = vrot.lane.b32.xlu0 %v1125, 90
        %v1131 = vpop.permute.xlu0 %1130
        %v1132 = vrot.slane %v1129, 4
        %v1133 = vrot.slane %v1131, 4
        %v1134 = vsel %vm666, %v1132, %v1133
        %v1135 = vsel %vm800, %v1129, %v1134
        %v1138 = vadd.f32 %v1120, %v1135
        %v1139 = vadd.f32 %v1121, %v1131
        %s1140 = sld [smem:[#allocation9 + $0x2]]
        %v1141 = vstv %s1140
        %v1142 = vadd.f32 %v1138, %v1141
        %v1143 = vadd.f32 %v1139, %v1141
        %v1146 = vrot.slane %v1142, 3
        %v1147 = vrot.slane %v1143, 6
        %v1148 = vrot.slane %v1143, 1
        %v1149 = vsel %vm815, %v1142, %v1146
        %v1150 = vsel %vm817, %v1147, %v1148
        %v1151 = vsel %vm819, %v1149, %v1150
        %s1153 = scalar_lea.vmem [#allocation3], 2
        %1154 = vst.msk [vmem:[%s1153] ss:$8 sm:$0x7] %vm825, %v1151
        %1155 = vst.msk [vmem:[%s1153] ss:$8 sm:$0x0] %vm825, %v1151
        %s1156 = sld [smem:[#allocation8 + $0x1b]]
        %v1157 = vstv %s1156
        %v1158 = vmul.f32 %v648, %v1157
        %v1159 = vmul.f32 %v649, %v1157
        %s1160 = sld [smem:[#allocation8 + $0x1c]]
        %v1161 = vstv %s1160
        %v1162 = vmul.f32 %v648, %v1161
        %v1163 = vmul.f32 %v649, %v1161
        %1166 = vrot.lane.b32.xlu0 %v1162, 127
        %v1167 = vpop.permute.xlu0 %1166
        %1168 = vrot.lane.b32.xlu0 %v1163, 127
        %v1169 = vpop.permute.xlu0 %1168
        %v1170 = vrot.slane %v1167, 4
        %v1171 = vrot.slane %v1169, 4
        %v1172 = vsel %vm666, %v1170, %v1171
        %v1173 = vsel %vm270, %v1167, %v1172
        %v1176 = vadd.f32 %v1158, %v1173
        %v1177 = vadd.f32 %v1159, %v1169
        %s1178 = sld [smem:[#allocation8 + $0x1d]]
        %v1179 = vstv %s1178
        %v1180 = vmul.f32 %v648, %v1179
        %v1181 = vmul.f32 %v649, %v1179
        %1184 = vrot.lane.b32.xlu0 %v1180, 126
        %v1185 = vpop.permute.xlu0 %1184
        %1186 = vrot.lane.b32.xlu0 %v1181, 126
        %v1187 = vpop.permute.xlu0 %1186
        %v1188 = vrot.slane %v1185, 4
        %v1189 = vrot.slane %v1187, 4
        %v1190 = vsel %vm666, %v1188, %v1189
        %v1191 = vsel %vm686, %v1185, %v1190
        %v1194 = vadd.f32 %v1176, %v1191
        %v1195 = vadd.f32 %v1177, %v1187
        %s1196 = sld [smem:[#allocation8 + $0x1e]]
        %v1197 = vstv %s1196
        %v1198 = vmul.f32 %v648, %v1197
        %v1199 = vmul.f32 %v649, %v1197
        %1202 = vrot.lane.b32.xlu0 %v1198, 110
        %v1203 = vpop.permute.xlu0 %1202
        %1204 = vrot.lane.b32.xlu0 %v1199, 110
        %v1205 = vpop.permute.xlu0 %1204
        %v1206 = vrot.slane %v1203, 4
        %v1207 = vrot.slane %v1205, 4
        %v1208 = vsel %vm666, %v1206, %v1207
        %v1209 = vsel %vm705, %v1203, %v1208
        %v1212 = vadd.f32 %v1194, %v1209
        %v1213 = vadd.f32 %v1195, %v1205
        %s1214 = sld [smem:[#allocation8 + $0x1f]]
        %v1215 = vstv %s1214
        %v1216 = vmul.f32 %v648, %v1215
        %v1217 = vmul.f32 %v649, %v1215
        %1220 = vrot.lane.b32.xlu0 %v1216, 109
        %v1221 = vpop.permute.xlu0 %1220
        %1222 = vrot.lane.b32.xlu0 %v1217, 109
        %v1223 = vpop.permute.xlu0 %1222
        %v1224 = vrot.slane %v1221, 4
        %v1225 = vrot.slane %v1223, 4
        %v1226 = vsel %vm666, %v1224, %v1225
        %v1227 = vsel %vm724, %v1221, %v1226
        %v1230 = vadd.f32 %v1212, %v1227
        %v1231 = vadd.f32 %v1213, %v1223
        %s1232 = sld [smem:[#allocation8 + $0x20]]
        %v1233 = vstv %s1232
        %v1234 = vmul.f32 %v648, %v1233
        %v1235 = vmul.f32 %v649, %v1233
        %1238 = vrot.lane.b32.xlu0 %v1234, 108
        %v1239 = vpop.permute.xlu0 %1238
        %1240 = vrot.lane.b32.xlu0 %v1235, 108
        %v1241 = vpop.permute.xlu0 %1240
        %v1242 = vrot.slane %v1239, 4
        %v1243 = vrot.slane %v1241, 4
        %v1244 = vsel %vm666, %v1242, %v1243
        %v1245 = vsel %vm743, %v1239, %v1244
        %v1248 = vadd.f32 %v1230, %v1245
        %v1249 = vadd.f32 %v1231, %v1241
        %s1250 = sld [smem:[#allocation8 + $0x21]]
        %v1251 = vstv %s1250
        %v1252 = vmul.f32 %v648, %v1251
        %v1253 = vmul.f32 %v649, %v1251
        %1256 = vrot.lane.b32.xlu0 %v1252, 92
        %v1257 = vpop.permute.xlu0 %1256
        %1258 = vrot.lane.b32.xlu0 %v1253, 92
        %v1259 = vpop.permute.xlu0 %1258
        %v1260 = vrot.slane %v1257, 4
        %v1261 = vrot.slane %v1259, 4
        %v1262 = vsel %vm666, %v1260, %v1261
        %v1263 = vsel %vm762, %v1257, %v1262
        %v1266 = vadd.f32 %v1248, %v1263
        %v1267 = vadd.f32 %v1249, %v1259
        %s1268 = sld [smem:[#allocation8 + $0x22]]
        %v1269 = vstv %s1268
        %v1270 = vmul.f32 %v648, %v1269
        %v1271 = vmul.f32 %v649, %v1269
        %1274 = vrot.lane.b32.xlu0 %v1270, 91
        %v1275 = vpop.permute.xlu0 %1274
        %1276 = vrot.lane.b32.xlu0 %v1271, 91
        %v1277 = vpop.permute.xlu0 %1276
        %v1278 = vrot.slane %v1275, 4
        %v1279 = vrot.slane %v1277, 4
        %v1280 = vsel %vm666, %v1278, %v1279
        %v1281 = vsel %vm781, %v1275, %v1280
        %v1284 = vadd.f32 %v1266, %v1281
        %v1285 = vadd.f32 %v1267, %v1277
        %s1286 = sld [smem:[#allocation8 + $0x23]]
        %v1287 = vstv %s1286
        %v1288 = vmul.f32 %v648, %v1287
        %v1289 = vmul.f32 %v649, %v1287
        %1292 = vrot.lane.b32.xlu0 %v1288, 90
        %v1293 = vpop.permute.xlu0 %1292
        %1294 = vrot.lane.b32.xlu0 %v1289, 90
        %v1295 = vpop.permute.xlu0 %1294
        %v1296 = vrot.slane %v1293, 4
        %v1297 = vrot.slane %v1295, 4
        %v1298 = vsel %vm666, %v1296, %v1297
        %v1299 = vsel %vm800, %v1293, %v1298
        %v1302 = vadd.f32 %v1284, %v1299
        %v1303 = vadd.f32 %v1285, %v1295
        %s1304 = sld [smem:[#allocation9 + $0x3]]
        %v1305 = vstv %s1304
        %v1306 = vadd.f32 %v1302, %v1305
        %v1307 = vadd.f32 %v1303, %v1305
        %1310 = vst [vmem:[#allocation1] sm:$0xff] %v1306
        %1311 = vst [vmem:[#allocation1 + $0x8] sm:$0xff] %v1307
        %s1312 = scalar_lea.vmem [#allocation1], 1
        %v1313 = vld [vmem:[%s1312] ss:$4 sm:$0xff]
        %s1315 = scalar_lea.vmem [#allocation3], 3
        %1316 = vst.msk [vmem:[%s1315] ss:$8 sm:$0x7] %vm825, %v1313
        %1317 = vst.msk [vmem:[%s1315] ss:$8 sm:$0x0] %vm825, %v1313
        %s1318 = sld [smem:[#allocation8 + $0x24]]
        %v1319 = vstv %s1318
        %v1320 = vmul.f32 %v648, %v1319
        %v1321 = vmul.f32 %v649, %v1319
        %s1322 = sld [smem:[#allocation8 + $0x25]]
        %v1323 = vstv %s1322
        %v1324 = vmul.f32 %v648, %v1323
        %v1325 = vmul.f32 %v649, %v1323
        %1328 = vrot.lane.b32.xlu0 %v1324, 127
        %v1329 = vpop.permute.xlu0 %1328
        %1330 = vrot.lane.b32.xlu0 %v1325, 127
        %v1331 = vpop.permute.xlu0 %1330
        %v1332 = vrot.slane %v1329, 4
        %v1333 = vrot.slane %v1331, 4
        %v1334 = vsel %vm666, %v1332, %v1333
        %v1335 = vsel %vm270, %v1329, %v1334
        %v1338 = vadd.f32 %v1320, %v1335
        %v1339 = vadd.f32 %v1321, %v1331
        %s1340 = sld [smem:[#allocation8 + $0x26]]
        %v1341 = vstv %s1340
        %v1342 = vmul.f32 %v648, %v1341
        %v1343 = vmul.f32 %v649, %v1341
        %1346 = vrot.lane.b32.xlu0 %v1342, 126
        %v1347 = vpop.permute.xlu0 %1346
        %1348 = vrot.lane.b32.xlu0 %v1343, 126
        %v1349 = vpop.permute.xlu0 %1348
        %v1350 = vrot.slane %v1347, 4
        %v1351 = vrot.slane %v1349, 4
        %v1352 = vsel %vm666, %v1350, %v1351
        %v1353 = vsel %vm686, %v1347, %v1352
        %v1356 = vadd.f32 %v1338, %v1353
        %v1357 = vadd.f32 %v1339, %v1349
        %s1358 = sld [smem:[#allocation8 + $0x27]]
        %v1359 = vstv %s1358
        %v1360 = vmul.f32 %v648, %v1359
        %v1361 = vmul.f32 %v649, %v1359
        %1364 = vrot.lane.b32.xlu0 %v1360, 110
        %v1365 = vpop.permute.xlu0 %1364
        %1366 = vrot.lane.b32.xlu0 %v1361, 110
        %v1367 = vpop.permute.xlu0 %1366
        %v1368 = vrot.slane %v1365, 4
        %v1369 = vrot.slane %v1367, 4
        %v1370 = vsel %vm666, %v1368, %v1369
        %v1371 = vsel %vm705, %v1365, %v1370
        %v1374 = vadd.f32 %v1356, %v1371
        %v1375 = vadd.f32 %v1357, %v1367
        %s1376 = sld [smem:[#allocation8 + $0x28]]
        %v1377 = vstv %s1376
        %v1378 = vmul.f32 %v648, %v1377
        %v1379 = vmul.f32 %v649, %v1377
        %1382 = vrot.lane.b32.xlu0 %v1378, 109
        %v1383 = vpop.permute.xlu0 %1382
        %1384 = vrot.lane.b32.xlu0 %v1379, 109
        %v1385 = vpop.permute.xlu0 %1384
        %v1386 = vrot.slane %v1383, 4
        %v1387 = vrot.slane %v1385, 4
        %v1388 = vsel %vm666, %v1386, %v1387
        %v1389 = vsel %vm724, %v1383, %v1388
        %v1392 = vadd.f32 %v1374, %v1389
        %v1393 = vadd.f32 %v1375, %v1385
        %s1394 = sld [smem:[#allocation8 + $0x29]]
        %v1395 = vstv %s1394
        %v1396 = vmul.f32 %v648, %v1395
        %v1397 = vmul.f32 %v649, %v1395
        %1400 = vrot.lane.b32.xlu0 %v1396, 108
        %v1401 = vpop.permute.xlu0 %1400
        %1402 = vrot.lane.b32.xlu0 %v1397, 108
        %v1403 = vpop.permute.xlu0 %1402
        %v1404 = vrot.slane %v1401, 4
        %v1405 = vrot.slane %v1403, 4
        %v1406 = vsel %vm666, %v1404, %v1405
        %v1407 = vsel %vm743, %v1401, %v1406
        %v1410 = vadd.f32 %v1392, %v1407
        %v1411 = vadd.f32 %v1393, %v1403
        %s1412 = sld [smem:[#allocation8 + $0x2a]]
        %v1413 = vstv %s1412
        %v1414 = vmul.f32 %v648, %v1413
        %v1415 = vmul.f32 %v649, %v1413
        %1418 = vrot.lane.b32.xlu0 %v1414, 92
        %v1419 = vpop.permute.xlu0 %1418
        %1420 = vrot.lane.b32.xlu0 %v1415, 92
        %v1421 = vpop.permute.xlu0 %1420
        %v1422 = vrot.slane %v1419, 4
        %v1423 = vrot.slane %v1421, 4
        %v1424 = vsel %vm666, %v1422, %v1423
        %v1425 = vsel %vm762, %v1419, %v1424
        %v1428 = vadd.f32 %v1410, %v1425
        %v1429 = vadd.f32 %v1411, %v1421
        %s1430 = sld [smem:[#allocation8 + $0x2b]]
        %v1431 = vstv %s1430
        %v1432 = vmul.f32 %v648, %v1431
        %v1433 = vmul.f32 %v649, %v1431
        %1436 = vrot.lane.b32.xlu0 %v1432, 91
        %v1437 = vpop.permute.xlu0 %1436
        %1438 = vrot.lane.b32.xlu0 %v1433, 91
        %v1439 = vpop.permute.xlu0 %1438
        %v1440 = vrot.slane %v1437, 4
        %v1441 = vrot.slane %v1439, 4
        %v1442 = vsel %vm666, %v1440, %v1441
        %v1443 = vsel %vm781, %v1437, %v1442
        %v1446 = vadd.f32 %v1428, %v1443
        %v1447 = vadd.f32 %v1429, %v1439
        %s1448 = sld [smem:[#allocation8 + $0x2c]]
        %v1449 = vstv %s1448
        %v1450 = vmul.f32 %v648, %v1449
        %v1451 = vmul.f32 %v649, %v1449
        %1454 = vrot.lane.b32.xlu0 %v1450, 90
        %v1455 = vpop.permute.xlu0 %1454
        %1456 = vrot.lane.b32.xlu0 %v1451, 90
        %v1457 = vpop.permute.xlu0 %1456
        %v1458 = vrot.slane %v1455, 4
        %v1459 = vrot.slane %v1457, 4
        %v1460 = vsel %vm666, %v1458, %v1459
        %v1461 = vsel %vm800, %v1455, %v1460
        %v1464 = vadd.f32 %v1446, %v1461
        %v1465 = vadd.f32 %v1447, %v1457
        %s1466 = sld [smem:[#allocation9 + $0x4]]
        %v1467 = vstv %s1466
        %v1468 = vadd.f32 %v1464, %v1467
        %v1469 = vadd.f32 %v1465, %v1467
        %1472 = vst [vmem:[#allocation1] sm:$0xff] %v1468
        %1473 = vst [vmem:[#allocation1 + $0x8] sm:$0xff] %v1469
        %s1474 = scalar_lea.vmem [#allocation1], 1
        %v1475 = vld [vmem:[%s1474] ss:$4 sm:$0xff]
        %s1477 = scalar_lea.vmem [#allocation3], 4
        %1478 = vst.msk [vmem:[%s1477] ss:$8 sm:$0x7] %vm825, %v1475
        %1479 = vst.msk [vmem:[%s1477] ss:$8 sm:$0x0] %vm825, %v1475
        %s1480 = sld [smem:[#allocation8 + $0x2d]]
        %v1481 = vstv %s1480
        %v1482 = vmul.f32 %v648, %v1481
        %v1483 = vmul.f32 %v649, %v1481
        %s1484 = sld [smem:[#allocation8 + $0x2e]]
        %v1485 = vstv %s1484
        %v1486 = vmul.f32 %v648, %v1485
        %v1487 = vmul.f32 %v649, %v1485
        %1490 = vrot.lane.b32.xlu0 %v1486, 127
        %v1491 = vpop.permute.xlu0 %1490
        %1492 = vrot.lane.b32.xlu0 %v1487, 127
        %v1493 = vpop.permute.xlu0 %1492
        %v1494 = vrot.slane %v1491, 4
        %v1495 = vrot.slane %v1493, 4
        %v1496 = vsel %vm666, %v1494, %v1495
        %v1497 = vsel %vm270, %v1491, %v1496
        %v1500 = vadd.f32 %v1482, %v1497
        %v1501 = vadd.f32 %v1483, %v1493
        %s1502 = sld [smem:[#allocation8 + $0x2f]]
        %v1503 = vstv %s1502
        %v1504 = vmul.f32 %v648, %v1503
        %v1505 = vmul.f32 %v649, %v1503
        %1508 = vrot.lane.b32.xlu0 %v1504, 126
        %v1509 = vpop.permute.xlu0 %1508
        %1510 = vrot.lane.b32.xlu0 %v1505, 126
        %v1511 = vpop.permute.xlu0 %1510
        %v1512 = vrot.slane %v1509, 4
        %v1513 = vrot.slane %v1511, 4
        %v1514 = vsel %vm666, %v1512, %v1513
        %v1515 = vsel %vm686, %v1509, %v1514
        %v1518 = vadd.f32 %v1500, %v1515
        %v1519 = vadd.f32 %v1501, %v1511
        %s1520 = sld [smem:[#allocation8 + $0x30]]
        %v1521 = vstv %s1520
        %v1522 = vmul.f32 %v648, %v1521
        %v1523 = vmul.f32 %v649, %v1521
        %1526 = vrot.lane.b32.xlu0 %v1522, 110
        %v1527 = vpop.permute.xlu0 %1526
        %1528 = vrot.lane.b32.xlu0 %v1523, 110
        %v1529 = vpop.permute.xlu0 %1528
        %v1530 = vrot.slane %v1527, 4
        %v1531 = vrot.slane %v1529, 4
        %v1532 = vsel %vm666, %v1530, %v1531
        %v1533 = vsel %vm705, %v1527, %v1532
        %v1536 = vadd.f32 %v1518, %v1533
        %v1537 = vadd.f32 %v1519, %v1529
        %s1538 = sld [smem:[#allocation8 + $0x31]]
        %v1539 = vstv %s1538
        %v1540 = vmul.f32 %v648, %v1539
        %v1541 = vmul.f32 %v649, %v1539
        %1544 = vrot.lane.b32.xlu0 %v1540, 109
        %v1545 = vpop.permute.xlu0 %1544
        %1546 = vrot.lane.b32.xlu0 %v1541, 109
        %v1547 = vpop.permute.xlu0 %1546
        %v1548 = vrot.slane %v1545, 4
        %v1549 = vrot.slane %v1547, 4
        %v1550 = vsel %vm666, %v1548, %v1549
        %v1551 = vsel %vm724, %v1545, %v1550
        %v1554 = vadd.f32 %v1536, %v1551
        %v1555 = vadd.f32 %v1537, %v1547
        %s1556 = sld [smem:[#allocation8 + $0x32]]
        %v1557 = vstv %s1556
        %v1558 = vmul.f32 %v648, %v1557
        %v1559 = vmul.f32 %v649, %v1557
        %1562 = vrot.lane.b32.xlu0 %v1558, 108
        %v1563 = vpop.permute.xlu0 %1562
        %1564 = vrot.lane.b32.xlu0 %v1559, 108
        %v1565 = vpop.permute.xlu0 %1564
        %v1566 = vrot.slane %v1563, 4
        %v1567 = vrot.slane %v1565, 4
        %v1568 = vsel %vm666, %v1566, %v1567
        %v1569 = vsel %vm743, %v1563, %v1568
        %v1572 = vadd.f32 %v1554, %v1569
        %v1573 = vadd.f32 %v1555, %v1565
        %s1574 = sld [smem:[#allocation8 + $0x33]]
        %v1575 = vstv %s1574
        %v1576 = vmul.f32 %v648, %v1575
        %v1577 = vmul.f32 %v649, %v1575
        %1580 = vrot.lane.b32.xlu0 %v1576, 92
        %v1581 = vpop.permute.xlu0 %1580
        %1582 = vrot.lane.b32.xlu0 %v1577, 92
        %v1583 = vpop.permute.xlu0 %1582
        %v1584 = vrot.slane %v1581, 4
        %v1585 = vrot.slane %v1583, 4
        %v1586 = vsel %vm666, %v1584, %v1585
        %v1587 = vsel %vm762, %v1581, %v1586
        %v1590 = vadd.f32 %v1572, %v1587
        %v1591 = vadd.f32 %v1573, %v1583
        %s1592 = sld [smem:[#allocation8 + $0x34]]
        %v1593 = vstv %s1592
        %v1594 = vmul.f32 %v648, %v1593
        %v1595 = vmul.f32 %v649, %v1593
        %1598 = vrot.lane.b32.xlu0 %v1594, 91
        %v1599 = vpop.permute.xlu0 %1598
        %1600 = vrot.lane.b32.xlu0 %v1595, 91
        %v1601 = vpop.permute.xlu0 %1600
        %v1602 = vrot.slane %v1599, 4
        %v1603 = vrot.slane %v1601, 4
        %v1604 = vsel %vm666, %v1602, %v1603
        %v1605 = vsel %vm781, %v1599, %v1604
        %v1608 = vadd.f32 %v1590, %v1605
        %v1609 = vadd.f32 %v1591, %v1601
        %s1610 = sld [smem:[#allocation8 + $0x35]]
        %v1611 = vstv %s1610
        %v1612 = vmul.f32 %v648, %v1611
        %v1613 = vmul.f32 %v649, %v1611
        %1616 = vrot.lane.b32.xlu0 %v1612, 90
        %v1617 = vpop.permute.xlu0 %1616
        %1618 = vrot.lane.b32.xlu0 %v1613, 90
        %v1619 = vpop.permute.xlu0 %1618
        %v1620 = vrot.slane %v1617, 4
        %v1621 = vrot.slane %v1619, 4
        %v1622 = vsel %vm666, %v1620, %v1621
        %v1623 = vsel %vm800, %v1617, %v1622
        %v1626 = vadd.f32 %v1608, %v1623
        %v1627 = vadd.f32 %v1609, %v1619
        %s1628 = sld [smem:[#allocation9 + $0x5]]
        %v1629 = vstv %s1628
        %v1630 = vadd.f32 %v1626, %v1629
        %v1631 = vadd.f32 %v1627, %v1629
        %1634 = vst [vmem:[#allocation1] sm:$0xff] %v1630
        %1635 = vst [vmem:[#allocation1 + $0x8] sm:$0xff] %v1631
        %s1636 = scalar_lea.vmem [#allocation1], 1
        %v1637 = vld [vmem:[%s1636] ss:$4 sm:$0xff]
        %s1639 = scalar_lea.vmem [#allocation3], 5
        %1640 = vst.msk [vmem:[%s1639] ss:$8 sm:$0x7] %vm825, %v1637
        %1641 = vst.msk [vmem:[%s1639] ss:$8 sm:$0x0] %vm825, %v1637
        %s1642 = sld [smem:[#allocation8 + $0x36]]
        %v1643 = vstv %s1642
        %v1644 = vmul.f32 %v648, %v1643
        %v1645 = vmul.f32 %v649, %v1643
        %s1646 = sld [smem:[#allocation8 + $0x37]]
        %v1647 = vstv %s1646
        %v1648 = vmul.f32 %v648, %v1647
        %v1649 = vmul.f32 %v649, %v1647
        %1652 = vrot.lane.b32.xlu0 %v1648, 127
        %v1653 = vpop.permute.xlu0 %1652
        %1654 = vrot.lane.b32.xlu0 %v1649, 127
        %v1655 = vpop.permute.xlu0 %1654
        %v1656 = vrot.slane %v1653, 4
        %v1657 = vrot.slane %v1655, 4
        %v1658 = vsel %vm666, %v1656, %v1657
        %v1659 = vsel %vm270, %v1653, %v1658
        %v1662 = vadd.f32 %v1644, %v1659
        %v1663 = vadd.f32 %v1645, %v1655
        %s1664 = sld [smem:[#allocation8 + $0x38]]
        %v1665 = vstv %s1664
        %v1666 = vmul.f32 %v648, %v1665
        %v1667 = vmul.f32 %v649, %v1665
        %1670 = vrot.lane.b32.xlu0 %v1666, 126
        %v1671 = vpop.permute.xlu0 %1670
        %1672 = vrot.lane.b32.xlu0 %v1667, 126
        %v1673 = vpop.permute.xlu0 %1672
        %v1674 = vrot.slane %v1671, 4
        %v1675 = vrot.slane %v1673, 4
        %v1676 = vsel %vm666, %v1674, %v1675
        %v1677 = vsel %vm686, %v1671, %v1676
        %v1680 = vadd.f32 %v1662, %v1677
        %v1681 = vadd.f32 %v1663, %v1673
        %s1682 = sld [smem:[#allocation8 + $0x39]]
        %v1683 = vstv %s1682
        %v1684 = vmul.f32 %v648, %v1683
        %v1685 = vmul.f32 %v649, %v1683
        %1688 = vrot.lane.b32.xlu0 %v1684, 110
        %v1689 = vpop.permute.xlu0 %1688
        %1690 = vrot.lane.b32.xlu0 %v1685, 110
        %v1691 = vpop.permute.xlu0 %1690
        %v1692 = vrot.slane %v1689, 4
        %v1693 = vrot.slane %v1691, 4
        %v1694 = vsel %vm666, %v1692, %v1693
        %v1695 = vsel %vm705, %v1689, %v1694
        %v1698 = vadd.f32 %v1680, %v1695
        %v1699 = vadd.f32 %v1681, %v1691
        %s1700 = sld [smem:[#allocation8 + $0x3a]]
        %v1701 = vstv %s1700
        %v1702 = vmul.f32 %v648, %v1701
        %v1703 = vmul.f32 %v649, %v1701
        %1706 = vrot.lane.b32.xlu0 %v1702, 109
        %v1707 = vpop.permute.xlu0 %1706
        %1708 = vrot.lane.b32.xlu0 %v1703, 109
        %v1709 = vpop.permute.xlu0 %1708
        %v1710 = vrot.slane %v1707, 4
        %v1711 = vrot.slane %v1709, 4
        %v1712 = vsel %vm666, %v1710, %v1711
        %v1713 = vsel %vm724, %v1707, %v1712
        %v1716 = vadd.f32 %v1698, %v1713
        %v1717 = vadd.f32 %v1699, %v1709
        %s1718 = sld [smem:[#allocation8 + $0x3b]]
        %v1719 = vstv %s1718
        %v1720 = vmul.f32 %v648, %v1719
        %v1721 = vmul.f32 %v649, %v1719
        %1724 = vrot.lane.b32.xlu0 %v1720, 108
        %v1725 = vpop.permute.xlu0 %1724
        %1726 = vrot.lane.b32.xlu0 %v1721, 108
        %v1727 = vpop.permute.xlu0 %1726
        %v1728 = vrot.slane %v1725, 4
        %v1729 = vrot.slane %v1727, 4
        %v1730 = vsel %vm666, %v1728, %v1729
        %v1731 = vsel %vm743, %v1725, %v1730
        %v1734 = vadd.f32 %v1716, %v1731
        %v1735 = vadd.f32 %v1717, %v1727
        %s1736 = sld [smem:[#allocation8 + $0x3c]]
        %v1737 = vstv %s1736
        %v1738 = vmul.f32 %v648, %v1737
        %v1739 = vmul.f32 %v649, %v1737
        %1742 = vrot.lane.b32.xlu0 %v1738, 92
        %v1743 = vpop.permute.xlu0 %1742
        %1744 = vrot.lane.b32.xlu0 %v1739, 92
        %v1745 = vpop.permute.xlu0 %1744
        %v1746 = vrot.slane %v1743, 4
        %v1747 = vrot.slane %v1745, 4
        %v1748 = vsel %vm666, %v1746, %v1747
        %v1749 = vsel %vm762, %v1743, %v1748
        %v1752 = vadd.f32 %v1734, %v1749
        %v1753 = vadd.f32 %v1735, %v1745
        %s1754 = sld [smem:[#allocation8 + $0x3d]]
        %v1755 = vstv %s1754
        %v1756 = vmul.f32 %v648, %v1755
        %v1757 = vmul.f32 %v649, %v1755
        %1760 = vrot.lane.b32.xlu0 %v1756, 91
        %v1761 = vpop.permute.xlu0 %1760
        %1762 = vrot.lane.b32.xlu0 %v1757, 91
        %v1763 = vpop.permute.xlu0 %1762
        %v1764 = vrot.slane %v1761, 4
        %v1765 = vrot.slane %v1763, 4
        %v1766 = vsel %vm666, %v1764, %v1765
        %v1767 = vsel %vm781, %v1761, %v1766
        %v1770 = vadd.f32 %v1752, %v1767
        %v1771 = vadd.f32 %v1753, %v1763
        %s1772 = sld [smem:[#allocation8 + $0x3e]]
        %v1773 = vstv %s1772
        %v1774 = vmul.f32 %v648, %v1773
        %v1775 = vmul.f32 %v649, %v1773
        %1778 = vrot.lane.b32.xlu0 %v1774, 90
        %v1779 = vpop.permute.xlu0 %1778
        %1780 = vrot.lane.b32.xlu0 %v1775, 90
        %v1781 = vpop.permute.xlu0 %1780
        %v1782 = vrot.slane %v1779, 4
        %v1783 = vrot.slane %v1781, 4
        %v1784 = vsel %vm666, %v1782, %v1783
        %v1785 = vsel %vm800, %v1779, %v1784
        %v1788 = vadd.f32 %v1770, %v1785
        %v1789 = vadd.f32 %v1771, %v1781
        %s1790 = sld [smem:[#allocation9 + $0x6]]
        %v1791 = vstv %s1790
        %v1792 = vadd.f32 %v1788, %v1791
        %v1793 = vadd.f32 %v1789, %v1791
        %1796 = vst [vmem:[#allocation1] sm:$0xff] %v1792
        %1797 = vst [vmem:[#allocation1 + $0x8] sm:$0xff] %v1793
        %s1798 = scalar_lea.vmem [#allocation1], 2
        %v1799 = vld [vmem:[%s1798] ss:$4 sm:$0xff]
        %s1801 = scalar_lea.vmem [#allocation3], 6
        %1802 = vst.msk [vmem:[%s1801] ss:$8 sm:$0x7] %vm825, %v1799
        %1803 = vst.msk [vmem:[%s1801] ss:$8 sm:$0x0] %vm825, %v1799
        %s1804 = sld [smem:[#allocation8 + $0x3f]]
        %v1805 = vstv %s1804
        %v1806 = vmul.f32 %v648, %v1805
        %v1807 = vmul.f32 %v649, %v1805
        %s1808 = sld [smem:[#allocation8 + $0x40]]
        %v1809 = vstv %s1808
        %v1810 = vmul.f32 %v648, %v1809
        %v1811 = vmul.f32 %v649, %v1809
        %1814 = vrot.lane.b32.xlu0 %v1810, 127
        %v1815 = vpop.permute.xlu0 %1814
        %1816 = vrot.lane.b32.xlu0 %v1811, 127
        %v1817 = vpop.permute.xlu0 %1816
        %v1818 = vrot.slane %v1815, 4
        %v1819 = vrot.slane %v1817, 4
        %v1820 = vsel %vm666, %v1818, %v1819
        %v1821 = vsel %vm270, %v1815, %v1820
        %v1824 = vadd.f32 %v1806, %v1821
        %v1825 = vadd.f32 %v1807, %v1817
        %s1826 = sld [smem:[#allocation8 + $0x41]]
        %v1827 = vstv %s1826
        %v1828 = vmul.f32 %v648, %v1827
        %v1829 = vmul.f32 %v649, %v1827
        %1832 = vrot.lane.b32.xlu0 %v1828, 126
        %v1833 = vpop.permute.xlu0 %1832
        %1834 = vrot.lane.b32.xlu0 %v1829, 126
        %v1835 = vpop.permute.xlu0 %1834
        %v1836 = vrot.slane %v1833, 4
        %v1837 = vrot.slane %v1835, 4
        %v1838 = vsel %vm666, %v1836, %v1837
        %v1839 = vsel %vm686, %v1833, %v1838
        %v1842 = vadd.f32 %v1824, %v1839
        %v1843 = vadd.f32 %v1825, %v1835
        %s1844 = sld [smem:[#allocation8 + $0x42]]
        %v1845 = vstv %s1844
        %v1846 = vmul.f32 %v648, %v1845
        %v1847 = vmul.f32 %v649, %v1845
        %1850 = vrot.lane.b32.xlu0 %v1846, 110
        %v1851 = vpop.permute.xlu0 %1850
        %1852 = vrot.lane.b32.xlu0 %v1847, 110
        %v1853 = vpop.permute.xlu0 %1852
        %v1854 = vrot.slane %v1851, 4
        %v1855 = vrot.slane %v1853, 4
        %v1856 = vsel %vm666, %v1854, %v1855
        %v1857 = vsel %vm705, %v1851, %v1856
        %v1860 = vadd.f32 %v1842, %v1857
        %v1861 = vadd.f32 %v1843, %v1853
        %s1862 = sld [smem:[#allocation8 + $0x43]]
        %v1863 = vstv %s1862
        %v1864 = vmul.f32 %v648, %v1863
        %v1865 = vmul.f32 %v649, %v1863
        %1868 = vrot.lane.b32.xlu0 %v1864, 109
        %v1869 = vpop.permute.xlu0 %1868
        %1870 = vrot.lane.b32.xlu0 %v1865, 109
        %v1871 = vpop.permute.xlu0 %1870
        %v1872 = vrot.slane %v1869, 4
        %v1873 = vrot.slane %v1871, 4
        %v1874 = vsel %vm666, %v1872, %v1873
        %v1875 = vsel %vm724, %v1869, %v1874
        %v1878 = vadd.f32 %v1860, %v1875
        %v1879 = vadd.f32 %v1861, %v1871
        %s1880 = sld [smem:[#allocation8 + $0x44]]
        %v1881 = vstv %s1880
        %v1882 = vmul.f32 %v648, %v1881
        %v1883 = vmul.f32 %v649, %v1881
        %1886 = vrot.lane.b32.xlu0 %v1882, 108
        %v1887 = vpop.permute.xlu0 %1886
        %1888 = vrot.lane.b32.xlu0 %v1883, 108
        %v1889 = vpop.permute.xlu0 %1888
        %v1890 = vrot.slane %v1887, 4
        %v1891 = vrot.slane %v1889, 4
        %v1892 = vsel %vm666, %v1890, %v1891
        %v1893 = vsel %vm743, %v1887, %v1892
        %v1896 = vadd.f32 %v1878, %v1893
        %v1897 = vadd.f32 %v1879, %v1889
        %s1898 = sld [smem:[#allocation8 + $0x45]]
        %v1899 = vstv %s1898
        %v1900 = vmul.f32 %v648, %v1899
        %v1901 = vmul.f32 %v649, %v1899
        %1904 = vrot.lane.b32.xlu0 %v1900, 92
        %v1905 = vpop.permute.xlu0 %1904
        %1906 = vrot.lane.b32.xlu0 %v1901, 92
        %v1907 = vpop.permute.xlu0 %1906
        %v1908 = vrot.slane %v1905, 4
        %v1909 = vrot.slane %v1907, 4
        %v1910 = vsel %vm666, %v1908, %v1909
        %v1911 = vsel %vm762, %v1905, %v1910
        %v1914 = vadd.f32 %v1896, %v1911
        %v1915 = vadd.f32 %v1897, %v1907
        %s1916 = sld [smem:[#allocation8 + $0x46]]
        %v1917 = vstv %s1916
        %v1918 = vmul.f32 %v648, %v1917
        %v1919 = vmul.f32 %v649, %v1917
        %1922 = vrot.lane.b32.xlu0 %v1918, 91
        %v1923 = vpop.permute.xlu0 %1922
        %1924 = vrot.lane.b32.xlu0 %v1919, 91
        %v1925 = vpop.permute.xlu0 %1924
        %v1926 = vrot.slane %v1923, 4
        %v1927 = vrot.slane %v1925, 4
        %v1928 = vsel %vm666, %v1926, %v1927
        %v1929 = vsel %vm781, %v1923, %v1928
        %v1932 = vadd.f32 %v1914, %v1929
        %v1933 = vadd.f32 %v1915, %v1925
        %s1934 = sld [smem:[#allocation8 + $0x47]]
        %v1935 = vstv %s1934
        %v1936 = vmul.f32 %v648, %v1935
        %v1937 = vmul.f32 %v649, %v1935
        %1940 = vrot.lane.b32.xlu0 %v1936, 90
        %v1941 = vpop.permute.xlu0 %1940
        %1942 = vrot.lane.b32.xlu0 %v1937, 90
        %v1943 = vpop.permute.xlu0 %1942
        %v1944 = vrot.slane %v1941, 4
        %v1945 = vrot.slane %v1943, 4
        %v1946 = vsel %vm666, %v1944, %v1945
        %v1947 = vsel %vm800, %v1941, %v1946
        %v1950 = vadd.f32 %v1932, %v1947
        %v1951 = vadd.f32 %v1933, %v1943
        %s1952 = sld [smem:[#allocation9 + $0x7]]
        %v1953 = vstv %s1952
        %v1954 = vadd.f32 %v1950, %v1953
        %v1955 = vadd.f32 %v1951, %v1953
        %1958 = vst [vmem:[#allocation1] sm:$0xff] %v1954
        %1959 = vst [vmem:[#allocation1 + $0x8] sm:$0xff] %v1955
        %s1960 = scalar_lea.vmem [#allocation1], 2
        %v1961 = vld [vmem:[%s1960] ss:$4 sm:$0xff]
        %s1963 = scalar_lea.vmem [#allocation3], 7
        %1964 = vst.msk [vmem:[%s1963] ss:$8 sm:$0x7] %vm825, %v1961
        %1965 = vst.msk [vmem:[%s1963] ss:$8 sm:$0x0] %vm825, %v1961
        %s1966 = sld [smem:[#allocation8 + $0x48]]
        %v1967 = vstv %s1966
        %v1968 = vmul.f32 %v648, %v1967
        %v1969 = vmul.f32 %v649, %v1967
        %s1970 = sld [smem:[#allocation8 + $0x49]]
        %v1971 = vstv %s1970
        %v1972 = vmul.f32 %v648, %v1971
        %v1973 = vmul.f32 %v649, %v1971
        %1976 = vrot.lane.b32.xlu0 %v1972, 127
        %v1977 = vpop.permute.xlu0 %1976
        %1978 = vrot.lane.b32.xlu0 %v1973, 127
        %v1979 = vpop.permute.xlu0 %1978
        %v1980 = vrot.slane %v1977, 4
        %v1981 = vrot.slane %v1979, 4
        %v1982 = vsel %vm666, %v1980, %v1981
        %v1983 = vsel %vm270, %v1977, %v1982
        %v1986 = vadd.f32 %v1968, %v1983
        %v1987 = vadd.f32 %v1969, %v1979
        %s1988 = sld [smem:[#allocation8 + $0x4a]]
        %v1989 = vstv %s1988
        %v1990 = vmul.f32 %v648, %v1989
        %v1991 = vmul.f32 %v649, %v1989
        %1994 = vrot.lane.b32.xlu0 %v1990, 126
        %v1995 = vpop.permute.xlu0 %1994
        %1996 = vrot.lane.b32.xlu0 %v1991, 126
        %v1997 = vpop.permute.xlu0 %1996
        %v1998 = vrot.slane %v1995, 4
        %v1999 = vrot.slane %v1997, 4
        %v2000 = vsel %vm666, %v1998, %v1999
        %v2001 = vsel %vm686, %v1995, %v2000
        %v2004 = vadd.f32 %v1986, %v2001
        %v2005 = vadd.f32 %v1987, %v1997
        %s2006 = sld [smem:[#allocation8 + $0x4b]]
        %v2007 = vstv %s2006
        %v2008 = vmul.f32 %v648, %v2007
        %v2009 = vmul.f32 %v649, %v2007
        %2012 = vrot.lane.b32.xlu0 %v2008, 110
        %v2013 = vpop.permute.xlu0 %2012
        %2014 = vrot.lane.b32.xlu0 %v2009, 110
        %v2015 = vpop.permute.xlu0 %2014
        %v2016 = vrot.slane %v2013, 4
        %v2017 = vrot.slane %v2015, 4
        %v2018 = vsel %vm666, %v2016, %v2017
        %v2019 = vsel %vm705, %v2013, %v2018
        %v2022 = vadd.f32 %v2004, %v2019
        %v2023 = vadd.f32 %v2005, %v2015
        %s2024 = sld [smem:[#allocation8 + $0x4c]]
        %v2025 = vstv %s2024
        %v2026 = vmul.f32 %v648, %v2025
        %v2027 = vmul.f32 %v649, %v2025
        %2030 = vrot.lane.b32.xlu0 %v2026, 109
        %v2031 = vpop.permute.xlu0 %2030
        %2032 = vrot.lane.b32.xlu0 %v2027, 109
        %v2033 = vpop.permute.xlu0 %2032
        %v2034 = vrot.slane %v2031, 4
        %v2035 = vrot.slane %v2033, 4
        %v2036 = vsel %vm666, %v2034, %v2035
        %v2037 = vsel %vm724, %v2031, %v2036
        %v2040 = vadd.f32 %v2022, %v2037
        %v2041 = vadd.f32 %v2023, %v2033
        %s2042 = sld [smem:[#allocation8 + $0x4d]]
        %v2043 = vstv %s2042
        %v2044 = vmul.f32 %v648, %v2043
        %v2045 = vmul.f32 %v649, %v2043
        %2048 = vrot.lane.b32.xlu0 %v2044, 108
        %v2049 = vpop.permute.xlu0 %2048
        %2050 = vrot.lane.b32.xlu0 %v2045, 108
        %v2051 = vpop.permute.xlu0 %2050
        %v2052 = vrot.slane %v2049, 4
        %v2053 = vrot.slane %v2051, 4
        %v2054 = vsel %vm666, %v2052, %v2053
        %v2055 = vsel %vm743, %v2049, %v2054
        %v2058 = vadd.f32 %v2040, %v2055
        %v2059 = vadd.f32 %v2041, %v2051
        %s2060 = sld [smem:[#allocation8 + $0x4e]]
        %v2061 = vstv %s2060
        %v2062 = vmul.f32 %v648, %v2061
        %v2063 = vmul.f32 %v649, %v2061
        %2066 = vrot.lane.b32.xlu0 %v2062, 92
        %v2067 = vpop.permute.xlu0 %2066
        %2068 = vrot.lane.b32.xlu0 %v2063, 92
        %v2069 = vpop.permute.xlu0 %2068
        %v2070 = vrot.slane %v2067, 4
        %v2071 = vrot.slane %v2069, 4
        %v2072 = vsel %vm666, %v2070, %v2071
        %v2073 = vsel %vm762, %v2067, %v2072
        %v2076 = vadd.f32 %v2058, %v2073
        %v2077 = vadd.f32 %v2059, %v2069
        %s2078 = sld [smem:[#allocation8 + $0x4f]]
        %v2079 = vstv %s2078
        %v2080 = vmul.f32 %v648, %v2079
        %v2081 = vmul.f32 %v649, %v2079
        %2084 = vrot.lane.b32.xlu0 %v2080, 91
        %v2085 = vpop.permute.xlu0 %2084
        %2086 = vrot.lane.b32.xlu0 %v2081, 91
        %v2087 = vpop.permute.xlu0 %2086
        %v2088 = vrot.slane %v2085, 4
        %v2089 = vrot.slane %v2087, 4
        %v2090 = vsel %vm666, %v2088, %v2089
        %v2091 = vsel %vm781, %v2085, %v2090
        %v2094 = vadd.f32 %v2076, %v2091
        %v2095 = vadd.f32 %v2077, %v2087
        %s2096 = sld [smem:[#allocation8 + $0x50]]
        %v2097 = vstv %s2096
        %v2098 = vmul.f32 %v648, %v2097
        %v2099 = vmul.f32 %v649, %v2097
        %2102 = vrot.lane.b32.xlu0 %v2098, 90
        %v2103 = vpop.permute.xlu0 %2102
        %2104 = vrot.lane.b32.xlu0 %v2099, 90
        %v2105 = vpop.permute.xlu0 %2104
        %v2106 = vrot.slane %v2103, 4
        %v2107 = vrot.slane %v2105, 4
        %v2108 = vsel %vm666, %v2106, %v2107
        %v2109 = vsel %vm800, %v2103, %v2108
        %v2112 = vadd.f32 %v2094, %v2109
        %v2113 = vadd.f32 %v2095, %v2105
        %s2114 = sld [smem:[#allocation9 + $0x8]]
        %v2115 = vstv %s2114
        %v2116 = vadd.f32 %v2112, %v2115
        %v2117 = vadd.f32 %v2113, %v2115
        %2120 = vst [vmem:[#allocation1] sm:$0xff] %v2116
        %2121 = vst [vmem:[#allocation1 + $0x8] sm:$0xff] %v2117
        %s2122 = scalar_lea.vmem [#allocation1], 2
        %v2123 = vld [vmem:[%s2122] ss:$4 sm:$0xff]
        %s2125 = scalar_lea.vmem [#allocation3], 24
        %2126 = vst.msk [vmem:[%s2125] ss:$8 sm:$0x7] %vm825, %v2123
        %2127 = vst.msk [vmem:[%s2125] ss:$8 sm:$0x0] %vm825, %v2123
        %s2128 = sld [smem:[#allocation8 + $0x51]]
        %v2129 = vstv %s2128
        %v2130 = vmul.f32 %v648, %v2129
        %v2131 = vmul.f32 %v649, %v2129
        %s2132 = sld [smem:[#allocation8 + $0x52]]
        %v2133 = vstv %s2132
        %v2134 = vmul.f32 %v648, %v2133
        %v2135 = vmul.f32 %v649, %v2133
        %2138 = vrot.lane.b32.xlu0 %v2134, 127
        %v2139 = vpop.permute.xlu0 %2138
        %2140 = vrot.lane.b32.xlu0 %v2135, 127
        %v2141 = vpop.permute.xlu0 %2140
        %v2142 = vrot.slane %v2139, 4
        %v2143 = vrot.slane %v2141, 4
        %v2144 = vsel %vm666, %v2142, %v2143
        %v2145 = vsel %vm270, %v2139, %v2144
        %v2148 = vadd.f32 %v2130, %v2145
        %v2149 = vadd.f32 %v2131, %v2141
        %s2150 = sld [smem:[#allocation8 + $0x53]]
        %v2151 = vstv %s2150
        %v2152 = vmul.f32 %v648, %v2151
        %v2153 = vmul.f32 %v649, %v2151
        %2156 = vrot.lane.b32.xlu0 %v2152, 126
        %v2157 = vpop.permute.xlu0 %2156
        %2158 = vrot.lane.b32.xlu0 %v2153, 126
        %v2159 = vpop.permute.xlu0 %2158
        %v2160 = vrot.slane %v2157, 4
        %v2161 = vrot.slane %v2159, 4
        %v2162 = vsel %vm666, %v2160, %v2161
        %v2163 = vsel %vm686, %v2157, %v2162
        %v2166 = vadd.f32 %v2148, %v2163
        %v2167 = vadd.f32 %v2149, %v2159
        %s2168 = sld [smem:[#allocation8 + $0x54]]
        %v2169 = vstv %s2168
        %v2170 = vmul.f32 %v648, %v2169
        %v2171 = vmul.f32 %v649, %v2169
        %2174 = vrot.lane.b32.xlu0 %v2170, 110
        %v2175 = vpop.permute.xlu0 %2174
        %2176 = vrot.lane.b32.xlu0 %v2171, 110
        %v2177 = vpop.permute.xlu0 %2176
        %v2178 = vrot.slane %v2175, 4
        %v2179 = vrot.slane %v2177, 4
        %v2180 = vsel %vm666, %v2178, %v2179
        %v2181 = vsel %vm705, %v2175, %v2180
        %v2184 = vadd.f32 %v2166, %v2181
        %v2185 = vadd.f32 %v2167, %v2177
        %s2186 = sld [smem:[#allocation8 + $0x55]]
        %v2187 = vstv %s2186
        %v2188 = vmul.f32 %v648, %v2187
        %v2189 = vmul.f32 %v649, %v2187
        %2192 = vrot.lane.b32.xlu0 %v2188, 109
        %v2193 = vpop.permute.xlu0 %2192
        %2194 = vrot.lane.b32.xlu0 %v2189, 109
        %v2195 = vpop.permute.xlu0 %2194
        %v2196 = vrot.slane %v2193, 4
        %v2197 = vrot.slane %v2195, 4
        %v2198 = vsel %vm666, %v2196, %v2197
        %v2199 = vsel %vm724, %v2193, %v2198
        %v2202 = vadd.f32 %v2184, %v2199
        %v2203 = vadd.f32 %v2185, %v2195
        %s2204 = sld [smem:[#allocation8 + $0x56]]
        %v2205 = vstv %s2204
        %v2206 = vmul.f32 %v648, %v2205
        %v2207 = vmul.f32 %v649, %v2205
        %2210 = vrot.lane.b32.xlu0 %v2206, 108
        %v2211 = vpop.permute.xlu0 %2210
        %2212 = vrot.lane.b32.xlu0 %v2207, 108
        %v2213 = vpop.permute.xlu0 %2212
        %v2214 = vrot.slane %v2211, 4
        %v2215 = vrot.slane %v2213, 4
        %v2216 = vsel %vm666, %v2214, %v2215
        %v2217 = vsel %vm743, %v2211, %v2216
        %v2220 = vadd.f32 %v2202, %v2217
        %v2221 = vadd.f32 %v2203, %v2213
        %s2222 = sld [smem:[#allocation8 + $0x57]]
        %v2223 = vstv %s2222
        %v2224 = vmul.f32 %v648, %v2223
        %v2225 = vmul.f32 %v649, %v2223
        %2228 = vrot.lane.b32.xlu0 %v2224, 92
        %v2229 = vpop.permute.xlu0 %2228
        %2230 = vrot.lane.b32.xlu0 %v2225, 92
        %v2231 = vpop.permute.xlu0 %2230
        %v2232 = vrot.slane %v2229, 4
        %v2233 = vrot.slane %v2231, 4
        %v2234 = vsel %vm666, %v2232, %v2233
        %v2235 = vsel %vm762, %v2229, %v2234
        %v2238 = vadd.f32 %v2220, %v2235
        %v2239 = vadd.f32 %v2221, %v2231
        %s2240 = sld [smem:[#allocation8 + $0x58]]
        %v2241 = vstv %s2240
        %v2242 = vmul.f32 %v648, %v2241
        %v2243 = vmul.f32 %v649, %v2241
        %2246 = vrot.lane.b32.xlu0 %v2242, 91
        %v2247 = vpop.permute.xlu0 %2246
        %2248 = vrot.lane.b32.xlu0 %v2243, 91
        %v2249 = vpop.permute.xlu0 %2248
        %v2250 = vrot.slane %v2247, 4
        %v2251 = vrot.slane %v2249, 4
        %v2252 = vsel %vm666, %v2250, %v2251
        %v2253 = vsel %vm781, %v2247, %v2252
        %v2256 = vadd.f32 %v2238, %v2253
        %v2257 = vadd.f32 %v2239, %v2249
        %s2258 = sld [smem:[#allocation8 + $0x59]]
        %v2259 = vstv %s2258
        %v2260 = vmul.f32 %v648, %v2259
        %v2261 = vmul.f32 %v649, %v2259
        %2264 = vrot.lane.b32.xlu0 %v2260, 90
        %v2265 = vpop.permute.xlu0 %2264
        %2266 = vrot.lane.b32.xlu0 %v2261, 90
        %v2267 = vpop.permute.xlu0 %2266
        %v2268 = vrot.slane %v2265, 4
        %v2269 = vrot.slane %v2267, 4
        %v2270 = vsel %vm666, %v2268, %v2269
        %v2271 = vsel %vm800, %v2265, %v2270
        %v2274 = vadd.f32 %v2256, %v2271
        %v2275 = vadd.f32 %v2257, %v2267
        %s2276 = sld [smem:[#allocation9 + $0x9]]
        %v2277 = vstv %s2276
        %v2278 = vadd.f32 %v2274, %v2277
        %v2279 = vadd.f32 %v2275, %v2277
        %2282 = vst [vmem:[#allocation1] sm:$0xff] %v2278
        %2283 = vst [vmem:[#allocation1 + $0x8] sm:$0xff] %v2279
        %s2284 = scalar_lea.vmem [#allocation1], 3
        %v2285 = vld [vmem:[%s2284] ss:$4 sm:$0xff]
        %s2287 = scalar_lea.vmem [#allocation3], 25
        %2288 = vst.msk [vmem:[%s2287] ss:$8 sm:$0x7] %vm825, %v2285
        %2289 = vst.msk [vmem:[%s2287] ss:$8 sm:$0x0] %vm825, %v2285
        %s2290 = sld [smem:[#allocation8 + $0x5a]]
        %v2291 = vstv %s2290
        %v2292 = vmul.f32 %v648, %v2291
        %v2293 = vmul.f32 %v649, %v2291
        %s2294 = sld [smem:[#allocation8 + $0x5b]]
        %v2295 = vstv %s2294
        %v2296 = vmul.f32 %v648, %v2295
        %v2297 = vmul.f32 %v649, %v2295
        %2300 = vrot.lane.b32.xlu0 %v2296, 127
        %v2301 = vpop.permute.xlu0 %2300
        %2302 = vrot.lane.b32.xlu0 %v2297, 127
        %v2303 = vpop.permute.xlu0 %2302
        %v2304 = vrot.slane %v2301, 4
        %v2305 = vrot.slane %v2303, 4
        %v2306 = vsel %vm666, %v2304, %v2305
        %v2307 = vsel %vm270, %v2301, %v2306
        %v2310 = vadd.f32 %v2292, %v2307
        %v2311 = vadd.f32 %v2293, %v2303
        %s2312 = sld [smem:[#allocation8 + $0x5c]]
        %v2313 = vstv %s2312
        %v2314 = vmul.f32 %v648, %v2313
        %v2315 = vmul.f32 %v649, %v2313
        %2318 = vrot.lane.b32.xlu0 %v2314, 126
        %v2319 = vpop.permute.xlu0 %2318
        %2320 = vrot.lane.b32.xlu0 %v2315, 126
        %v2321 = vpop.permute.xlu0 %2320
        %v2322 = vrot.slane %v2319, 4
        %v2323 = vrot.slane %v2321, 4
        %v2324 = vsel %vm666, %v2322, %v2323
        %v2325 = vsel %vm686, %v2319, %v2324
        %v2328 = vadd.f32 %v2310, %v2325
        %v2329 = vadd.f32 %v2311, %v2321
        %s2330 = sld [smem:[#allocation8 + $0x5d]]
        %v2331 = vstv %s2330
        %v2332 = vmul.f32 %v648, %v2331
        %v2333 = vmul.f32 %v649, %v2331
        %2336 = vrot.lane.b32.xlu0 %v2332, 110
        %v2337 = vpop.permute.xlu0 %2336
        %2338 = vrot.lane.b32.xlu0 %v2333, 110
        %v2339 = vpop.permute.xlu0 %2338
        %v2340 = vrot.slane %v2337, 4
        %v2341 = vrot.slane %v2339, 4
        %v2342 = vsel %vm666, %v2340, %v2341
        %v2343 = vsel %vm705, %v2337, %v2342
        %v2346 = vadd.f32 %v2328, %v2343
        %v2347 = vadd.f32 %v2329, %v2339
        %s2348 = sld [smem:[#allocation8 + $0x5e]]
        %v2349 = vstv %s2348
        %v2350 = vmul.f32 %v648, %v2349
        %v2351 = vmul.f32 %v649, %v2349
        %2354 = vrot.lane.b32.xlu0 %v2350, 109
        %v2355 = vpop.permute.xlu0 %2354
        %2356 = vrot.lane.b32.xlu0 %v2351, 109
        %v2357 = vpop.permute.xlu0 %2356
        %v2358 = vrot.slane %v2355, 4
        %v2359 = vrot.slane %v2357, 4
        %v2360 = vsel %vm666, %v2358, %v2359
        %v2361 = vsel %vm724, %v2355, %v2360
        %v2364 = vadd.f32 %v2346, %v2361
        %v2365 = vadd.f32 %v2347, %v2357
        %s2366 = sld [smem:[#allocation8 + $0x5f]]
        %v2367 = vstv %s2366
        %v2368 = vmul.f32 %v648, %v2367
        %v2369 = vmul.f32 %v649, %v2367
        %2372 = vrot.lane.b32.xlu0 %v2368, 108
        %v2373 = vpop.permute.xlu0 %2372
        %2374 = vrot.lane.b32.xlu0 %v2369, 108
        %v2375 = vpop.permute.xlu0 %2374
        %v2376 = vrot.slane %v2373, 4
        %v2377 = vrot.slane %v2375, 4
        %v2378 = vsel %vm666, %v2376, %v2377
        %v2379 = vsel %vm743, %v2373, %v2378
        %v2382 = vadd.f32 %v2364, %v2379
        %v2383 = vadd.f32 %v2365, %v2375
        %s2384 = sld [smem:[#allocation8 + $0x60]]
        %v2385 = vstv %s2384
        %v2386 = vmul.f32 %v648, %v2385
        %v2387 = vmul.f32 %v649, %v2385
        %2390 = vrot.lane.b32.xlu0 %v2386, 92
        %v2391 = vpop.permute.xlu0 %2390
        %2392 = vrot.lane.b32.xlu0 %v2387, 92
        %v2393 = vpop.permute.xlu0 %2392
        %v2394 = vrot.slane %v2391, 4
        %v2395 = vrot.slane %v2393, 4
        %v2396 = vsel %vm666, %v2394, %v2395
        %v2397 = vsel %vm762, %v2391, %v2396
        %v2400 = vadd.f32 %v2382, %v2397
        %v2401 = vadd.f32 %v2383, %v2393
        %s2402 = sld [smem:[#allocation8 + $0x61]]
        %v2403 = vstv %s2402
        %v2404 = vmul.f32 %v648, %v2403
        %v2405 = vmul.f32 %v649, %v2403
        %2408 = vrot.lane.b32.xlu0 %v2404, 91
        %v2409 = vpop.permute.xlu0 %2408
        %2410 = vrot.lane.b32.xlu0 %v2405, 91
        %v2411 = vpop.permute.xlu0 %2410
        %v2412 = vrot.slane %v2409, 4
        %v2413 = vrot.slane %v2411, 4
        %v2414 = vsel %vm666, %v2412, %v2413
        %v2415 = vsel %vm781, %v2409, %v2414
        %v2418 = vadd.f32 %v2400, %v2415
        %v2419 = vadd.f32 %v2401, %v2411
        %s2420 = sld [smem:[#allocation8 + $0x62]]
        %v2421 = vstv %s2420
        %v2422 = vmul.f32 %v648, %v2421
        %v2423 = vmul.f32 %v649, %v2421
        %2426 = vrot.lane.b32.xlu0 %v2422, 90
        %v2427 = vpop.permute.xlu0 %2426
        %2428 = vrot.lane.b32.xlu0 %v2423, 90
        %v2429 = vpop.permute.xlu0 %2428
        %v2430 = vrot.slane %v2427, 4
        %v2431 = vrot.slane %v2429, 4
        %v2432 = vsel %vm666, %v2430, %v2431
        %v2433 = vsel %vm800, %v2427, %v2432
        %v2436 = vadd.f32 %v2418, %v2433
        %v2437 = vadd.f32 %v2419, %v2429
        %s2438 = sld [smem:[#allocation9 + $0xa]]
        %v2439 = vstv %s2438
        %v2440 = vadd.f32 %v2436, %v2439
        %v2441 = vadd.f32 %v2437, %v2439
        %2444 = vst [vmem:[#allocation1] sm:$0xff] %v2440
        %2445 = vst [vmem:[#allocation1 + $0x8] sm:$0xff] %v2441
        %s2446 = scalar_lea.vmem [#allocation1], 3
        %v2447 = vld [vmem:[%s2446] ss:$4 sm:$0xff]
        %s2449 = scalar_lea.vmem [#allocation3], 26
        %2450 = vst.msk [vmem:[%s2449] ss:$8 sm:$0x7] %vm825, %v2447
        %2451 = vst.msk [vmem:[%s2449] ss:$8 sm:$0x0] %vm825, %v2447
        %s2452 = sld [smem:[#allocation8 + $0x63]]
        %v2453 = vstv %s2452
        %v2454 = vmul.f32 %v648, %v2453
        %v2455 = vmul.f32 %v649, %v2453
        %s2456 = sld [smem:[#allocation8 + $0x64]]
        %v2457 = vstv %s2456
        %v2458 = vmul.f32 %v648, %v2457
        %v2459 = vmul.f32 %v649, %v2457
        %2462 = vrot.lane.b32.xlu0 %v2458, 127
        %v2463 = vpop.permute.xlu0 %2462
        %2464 = vrot.lane.b32.xlu0 %v2459, 127
        %v2465 = vpop.permute.xlu0 %2464
        %v2466 = vrot.slane %v2463, 4
        %v2467 = vrot.slane %v2465, 4
        %v2468 = vsel %vm666, %v2466, %v2467
        %v2469 = vsel %vm270, %v2463, %v2468
        %v2472 = vadd.f32 %v2454, %v2469
        %v2473 = vadd.f32 %v2455, %v2465
        %s2474 = sld [smem:[#allocation8 + $0x65]]
        %v2475 = vstv %s2474
        %v2476 = vmul.f32 %v648, %v2475
        %v2477 = vmul.f32 %v649, %v2475
        %2480 = vrot.lane.b32.xlu0 %v2476, 126
        %v2481 = vpop.permute.xlu0 %2480
        %2482 = vrot.lane.b32.xlu0 %v2477, 126
        %v2483 = vpop.permute.xlu0 %2482
        %v2484 = vrot.slane %v2481, 4
        %v2485 = vrot.slane %v2483, 4
        %v2486 = vsel %vm666, %v2484, %v2485
        %v2487 = vsel %vm686, %v2481, %v2486
        %v2490 = vadd.f32 %v2472, %v2487
        %v2491 = vadd.f32 %v2473, %v2483
        %s2492 = sld [smem:[#allocation8 + $0x66]]
        %v2493 = vstv %s2492
        %v2494 = vmul.f32 %v648, %v2493
        %v2495 = vmul.f32 %v649, %v2493
        %2498 = vrot.lane.b32.xlu0 %v2494, 110
        %v2499 = vpop.permute.xlu0 %2498
        %2500 = vrot.lane.b32.xlu0 %v2495, 110
        %v2501 = vpop.permute.xlu0 %2500
        %v2502 = vrot.slane %v2499, 4
        %v2503 = vrot.slane %v2501, 4
        %v2504 = vsel %vm666, %v2502, %v2503
        %v2505 = vsel %vm705, %v2499, %v2504
        %v2508 = vadd.f32 %v2490, %v2505
        %v2509 = vadd.f32 %v2491, %v2501
        %s2510 = sld [smem:[#allocation8 + $0x67]]
        %v2511 = vstv %s2510
        %v2512 = vmul.f32 %v648, %v2511
        %v2513 = vmul.f32 %v649, %v2511
        %2516 = vrot.lane.b32.xlu0 %v2512, 109
        %v2517 = vpop.permute.xlu0 %2516
        %2518 = vrot.lane.b32.xlu0 %v2513, 109
        %v2519 = vpop.permute.xlu0 %2518
        %v2520 = vrot.slane %v2517, 4
        %v2521 = vrot.slane %v2519, 4
        %v2522 = vsel %vm666, %v2520, %v2521
        %v2523 = vsel %vm724, %v2517, %v2522
        %v2526 = vadd.f32 %v2508, %v2523
        %v2527 = vadd.f32 %v2509, %v2519
        %s2528 = sld [smem:[#allocation8 + $0x68]]
        %v2529 = vstv %s2528
        %v2530 = vmul.f32 %v648, %v2529
        %v2531 = vmul.f32 %v649, %v2529
        %2534 = vrot.lane.b32.xlu0 %v2530, 108
        %v2535 = vpop.permute.xlu0 %2534
        %2536 = vrot.lane.b32.xlu0 %v2531, 108
        %v2537 = vpop.permute.xlu0 %2536
        %v2538 = vrot.slane %v2535, 4
        %v2539 = vrot.slane %v2537, 4
        %v2540 = vsel %vm666, %v2538, %v2539
        %v2541 = vsel %vm743, %v2535, %v2540
        %v2544 = vadd.f32 %v2526, %v2541
        %v2545 = vadd.f32 %v2527, %v2537
        %s2546 = sld [smem:[#allocation8 + $0x69]]
        %v2547 = vstv %s2546
        %v2548 = vmul.f32 %v648, %v2547
        %v2549 = vmul.f32 %v649, %v2547
        %2552 = vrot.lane.b32.xlu0 %v2548, 92
        %v2553 = vpop.permute.xlu0 %2552
        %2554 = vrot.lane.b32.xlu0 %v2549, 92
        %v2555 = vpop.permute.xlu0 %2554
        %v2556 = vrot.slane %v2553, 4
        %v2557 = vrot.slane %v2555, 4
        %v2558 = vsel %vm666, %v2556, %v2557
        %v2559 = vsel %vm762, %v2553, %v2558
        %v2562 = vadd.f32 %v2544, %v2559
        %v2563 = vadd.f32 %v2545, %v2555
        %s2564 = sld [smem:[#allocation8 + $0x6a]]
        %v2565 = vstv %s2564
        %v2566 = vmul.f32 %v648, %v2565
        %v2567 = vmul.f32 %v649, %v2565
        %2570 = vrot.lane.b32.xlu0 %v2566, 91
        %v2571 = vpop.permute.xlu0 %2570
        %2572 = vrot.lane.b32.xlu0 %v2567, 91
        %v2573 = vpop.permute.xlu0 %2572
        %v2574 = vrot.slane %v2571, 4
        %v2575 = vrot.slane %v2573, 4
        %v2576 = vsel %vm666, %v2574, %v2575
        %v2577 = vsel %vm781, %v2571, %v2576
        %v2580 = vadd.f32 %v2562, %v2577
        %v2581 = vadd.f32 %v2563, %v2573
        %s2582 = sld [smem:[#allocation8 + $0x6b]]
        %v2583 = vstv %s2582
        %v2584 = vmul.f32 %v648, %v2583
        %v2585 = vmul.f32 %v649, %v2583
        %2588 = vrot.lane.b32.xlu0 %v2584, 90
        %v2589 = vpop.permute.xlu0 %2588
        %2590 = vrot.lane.b32.xlu0 %v2585, 90
        %v2591 = vpop.permute.xlu0 %2590
        %v2592 = vrot.slane %v2589, 4
        %v2593 = vrot.slane %v2591, 4
        %v2594 = vsel %vm666, %v2592, %v2593
        %v2595 = vsel %vm800, %v2589, %v2594
        %v2598 = vadd.f32 %v2580, %v2595
        %v2599 = vadd.f32 %v2581, %v2591
        %s2600 = sld [smem:[#allocation9 + $0xb]]
        %v2601 = vstv %s2600
        %v2602 = vadd.f32 %v2598, %v2601
        %v2603 = vadd.f32 %v2599, %v2601
        %2606 = vst [vmem:[#allocation1] sm:$0xff] %v2602
        %2607 = vst [vmem:[#allocation1 + $0x8] sm:$0xff] %v2603
        %s2608 = scalar_lea.vmem [#allocation1], 3
        %v2609 = vld [vmem:[%s2608] ss:$4 sm:$0xff]
        %s2611 = scalar_lea.vmem [#allocation3], 27
        %2612 = vst.msk [vmem:[%s2611] ss:$8 sm:$0x7] %vm825, %v2609
        %2613 = vst.msk [vmem:[%s2611] ss:$8 sm:$0x0] %vm825, %v2609
        %vm2614 = vcmask 146560
        %2615 = vst.msk [vmem:[#allocation3] sm:$0xff] %vm2614, 0.0
        %vm2616 = vcmask 142464
        %2617 = vst.msk [vmem:[#allocation3 + $0x18] sm:$0xf] %vm2616, 0.0
        %vm2618 = vcmask 294160
        %2619 = vst.msk [vmem:[#allocation3] sm:$0xff] %vm2618, 0.0
        %vm2620 = vcmask 290064
        %2621 = vst.msk [vmem:[#allocation3 + $0x18] sm:$0xf] %vm2620, 0.0
        %vm2622 = vcmask 441760
        %2623 = vst.msk [vmem:[#allocation3] sm:$0xff] %vm2622, 0.0
        %vm2624 = vcmask 437664
        %2625 = vst.msk [vmem:[#allocation3 + $0x18] sm:$0xf] %vm2624, 0.0
        %vm2626 = vcmask 589360
        %2627 = vst.msk [vmem:[#allocation3] sm:$0xff] %vm2626, 0.0
        %vm2628 = vcmask 585264
        %2629 = vst.msk [vmem:[#allocation3 + $0x18] sm:$0xf] %vm2628, 0.0
        %vm2630 = vcmask 736960
        %2631 = vst.msk [vmem:[#allocation3] sm:$0xff] %vm2630, 0.0
        %vm2632 = vcmask 732864
        %2633 = vst.msk [vmem:[#allocation3 + $0x18] sm:$0xf] %vm2632, 0.0
        %vm2634 = vcmask 884560
        %2635 = vst.msk [vmem:[#allocation3] sm:$0xff] %vm2634, 0.0
        %vm2636 = vcmask 880464
        %2637 = vst.msk [vmem:[#allocation3 + $0x18] sm:$0xf] %vm2636, 0.0
        %vm2638 = vcmask 1032160
        %2639 = vst.msk [vmem:[#allocation3] sm:$0xff] %vm2638, 0.0
        %vm2640 = vcmask 1028064
        %2641 = vst.msk [vmem:[#allocation3 + $0x18] sm:$0xf] %vm2640, 0.0
        %vm2642 = vcmask 130160
        %2643 = vst.msk [vmem:[#allocation3 + $0x8] sm:$0xff] %vm2642, 0.0
        %vm2644 = vcmask 126064
        %2645 = vst.msk [vmem:[#allocation3 + $0x20] sm:$0xf] %vm2644, 0.0
        %vm2646 = vcmask 277760
        %2647 = vst.msk [vmem:[#allocation3 + $0x8] sm:$0xff] %vm2646, 0.0
        %vm2648 = vcmask 273664
        %2649 = vst.msk [vmem:[#allocation3 + $0x20] sm:$0xf] %vm2648, 0.0
        %vm2650 = vcmask 425360
        %2651 = vst.msk [vmem:[#allocation3 + $0x8] sm:$0xff] %vm2650, 0.0
        %vm2652 = vcmask 421264
        %2653 = vst.msk [vmem:[#allocation3 + $0x20] sm:$0xf] %vm2652, 0.0
        %vm2654 = vcmask 572960
        %2655 = vst.msk [vmem:[#allocation3 + $0x8] sm:$0xff] %vm2654, 0.0
        %vm2656 = vcmask 568864
        %2657 = vst.msk [vmem:[#allocation3 + $0x20] sm:$0xf] %vm2656, 0.0
        %vm2658 = vcmask 720560
        %2659 = vst.msk [vmem:[#allocation3 + $0x8] sm:$0xff] %vm2658, 0.0
        %vm2660 = vcmask 716464
        %2661 = vst.msk [vmem:[#allocation3 + $0x20] sm:$0xf] %vm2660, 0.0
        %vm2662 = vcmask 868160
        %2663 = vst.msk [vmem:[#allocation3 + $0x8] sm:$0xff] %vm2662, 0.0
        %vm2664 = vcmask 864064
        %2665 = vst.msk [vmem:[#allocation3 + $0x20] sm:$0xf] %vm2664, 0.0
        %vm2666 = vcmask 1015760
        %2667 = vst.msk [vmem:[#allocation3 + $0x8] sm:$0xff] %vm2666, 0.0
        %vm2668 = vcmask 1011664
        %2669 = vst.msk [vmem:[#allocation3 + $0x20] sm:$0xf] %vm2668, 0.0
        %vm2670 = vcmask 113760
        %2671 = vst.msk [vmem:[#allocation3 + $0x10] sm:$0xff] %vm2670, 0.0
        %vm2672 = vcmask 109664
        %2673 = vst.msk [vmem:[#allocation3 + $0x28] sm:$0xf] %vm2672, 0.0
        %v2674 = vld [vmem:[#allocation3] sm:$0xff]
        %v2675 = vld [vmem:[#allocation3 + $0x8] sm:$0xff]
        %v2676 = vld [vmem:[#allocation3 + $0x10] sm:$0xff]
        %v2677 = vld [vmem:[#allocation3 + $0x18] sm:$0xf]
        %v2678 = vld [vmem:[#allocation3 + $0x20] sm:$0xf]
        %v2679 = vld [vmem:[#allocation3 + $0x28] sm:$0xf]
        %v2680 = vadd.f32 %v2674, %v2675
        %vm2681 = vcmask 244736
        %v2682 = vsel %vm2681, %v2676, 0.0
        %v2683 = vadd.f32 %v2680, %v2682
        %2684 = vadd.xlane.f32.xlu0 %v2683
        %v2685 = vpop.xlane.xlu0 %2684
        %v2686 = vsel %vm666, %v2677, 0.0
        %v2687 = vsel %vm666, %v2678, 0.0
        %v2688 = vadd.f32 %v2686, %v2687
        %vm2689 = vcmask 240640
        %v2690 = vsel %vm2689, %v2679, 0.0
        %v2691 = vadd.f32 %v2688, %v2690
        %2692 = vadd.xlane.f32.xlu0 %v2691
        %v2693 = vpop.xlane.xlu0 %2692
        %vm2694 = vcmask 7168
        %2695 = vst.msk [vmem:[%s219] sm:$0xff] %vm2694, %v2685
        %vm2696 = vcmask 3072
        %2697 = vst.msk [vmem:[%s219 + $0x8] sm:$0xf] %vm2696, %v2693
        %v2698 = vmul.f32 %v2674, %v2674
        %v2699 = vmul.f32 %v2675, %v2675
        %v2700 = vmul.f32 %v2676, %v2676
        %v2701 = vmul.f32 %v2677, %v2677
        %v2702 = vmul.f32 %v2678, %v2678
        %v2703 = vmul.f32 %v2679, %v2679
        %v2704 = vadd.f32 %v2698, %v2699
        %v2705 = vsel %vm2681, %v2700, 0.0
        %v2706 = vadd.f32 %v2704, %v2705
        %2707 = vadd.xlane.f32.xlu0 %v2706
        %v2708 = vpop.xlane.xlu0 %2707
        %v2709 = vsel %vm666, %v2701, 0.0
        %v2710 = vsel %vm666, %v2702, 0.0
        %v2711 = vadd.f32 %v2709, %v2710
        %v2712 = vsel %vm2689, %v2703, 0.0
        %v2713 = vadd.f32 %v2711, %v2712
        %2714 = vadd.xlane.f32.xlu0 %v2713
        %v2715 = vpop.xlane.xlu0 %2714
        %vm2716 = vcmask 15368
        %2717 = vst.msk [vmem:[%s219] sm:$0xff] %vm2716, %v2708
        %vm2718 = vcmask 11272
        %2719 = vst.msk [vmem:[%s219 + $0x8] sm:$0xf] %vm2718, %v2715
        %p2720 = scmp.lt.s32.totalorder %s19, 1
        %s2721 = scalar_select %p2720, %s19, 1
        %s2722 = smul.addr %s2721, 2
        %s2723 = smul.addr %s2722, 8
        %s2724 = scalar_lea.vmem %s3, %s2723
        // Predicated region
        $region45: #{tpu_custom_call.1} parent=31 // pred_check
          %p2725 = pneg %p105
        $region46: #{tpu_custom_call.1} parent=31 // pred_check_branch
          %2727 = sbr.rel (%p2725) target = $region48
        $region47: #{tpu_custom_call.1} parent=31 // pred_region
          _
        $region48: #{tpu_custom_call.1} parent=31 // pred_fallthru
          _
      $region32: #{tpu_custom_call.1} parent=5 // pred_fallthru
        _
      %p2728 = scmp.le.s32.totalorder 2, %s14
      // Predicated region
      $region49: #{tpu_custom_call.1} parent=5 // pred_check
        %p2729 = pneg %p2728
      $region50: #{tpu_custom_call.1} parent=5 // pred_check_branch
        %2731 = sbr.rel (%p2729) target = $region52
      $region51: #{tpu_custom_call.1} parent=5 // pred_region
        %s2732 = ssub.s32 %s14, 2
        // Predicated region
        $region53: #{tpu_custom_call.1} parent=51 // pred_check
          %p2733 = pneg %p111
        $region54: #{tpu_custom_call.1} parent=51 // pred_check_branch
          %2735 = sbr.rel (%p2733) target = $region56
        $region55: #{tpu_custom_call.1} parent=51 // pred_region
          %p2736 = scmp.lt.s32.totalorder %s20, 1
          %s2737 = scalar_select %p2736, %s20, 1
          %s2738 = smul.addr %s2737, 2
          %s2739 = smul.addr %s2738, 8
          %s2740 = scalar_lea.vmem %s3, %s2739
        $region56: #{tpu_custom_call.1} parent=51 // pred_fallthru
          _
      $region52: #{tpu_custom_call.1} parent=5 // pred_fallthru
        _
    $region6: #{tpu_custom_call.1} parent=1 // loop_footer
      %s18 = sadd.s32 1, %s14
    $region7: #{tpu_custom_call.1} parent=1 // loop_footer_branch
      %13 = sbr.rel target = $region3
    $region8: #{tpu_custom_call.1} parent=1 // loop_exit
      _
    %2741 = vsyncpa [#allocation5], 1
    %s2742 = scalar_lea.sflag [#allocation5], 1
    %2743 = vsyncpa %s2742, 1
    %2744 = vsyncpa [#allocation6], 1
    %s2745 = scalar_lea.sflag [#allocation6], 1
    %2746 = vsyncpa %s2745, 1
    %2747 = vsyncpa [#allocation7], 1
    %s2748 = scalar_lea.sflag [#allocation7], 1
    %2749 = vsyncpa %s2748, 1

</llo_original>
